<compile_context>
chip_gen: v7x
topology: tpu7x:2x2x1
jax: 0.10.0
libtpu: 0.0.40
codegen_flags: <defaults>
</compile_context>

<pallas_src>
import jax
import jax.numpy as jnp
import numpy as np
from jax.experimental import pallas as pl
from jax.experimental.pallas import tpu as pltpu


def _ceil16(v):
    return ((v + 15) // 16) * 16


def _make_kernel(T, NB, Din, C, R, K,
                 r_w01, r_wc2, r_ws1, ws1_slot, r_ws2, ws2_slot):
    P = (K - 1) // 2
    M = T * NB
    PAD = P * NB
    CR = C + R

    def kernel(x_ref, w_ref, vec_ref, out_ref, ypad_ref, hpad_ref):
        # Packed per-channel f32 rows (single DMA): fused bias, bc2, BN-folded shifts.
        b01 = vec_ref[0:1, 0:CR]
        bc2 = vec_ref[1:2, 0:C]
        sh1 = vec_ref[2:3, 0:R]
        sh2 = vec_ref[3:4, 0:C]

        x = x_ref[0].reshape(M, Din).astype(jnp.bfloat16)                  # (M, Din)

        # ---- fused 1x1 conv + first channel-attn Linear: ONE matmul -> [xc | h_pre]
        w01 = w_ref[r_w01:r_w01 + Din, 0:CR]
        xh = jnp.dot(x, w01, preferred_element_type=jnp.float32) + b01     # (M, C+R)
        xc = xh[:, 0:C]                                                    # lane-0 slice (cheap)

        # ---- second channel-attn Linear on relu([xc|h_pre]) with zero-padded weight
        wc2p = w_ref[r_wc2:r_wc2 + CR, 0:C]
        att = jnp.dot(jnp.maximum(xh, 0.0).astype(jnp.bfloat16), wc2p,
                      preferred_element_type=jnp.float32) + bc2            # (M, C)
        y = xc * att                                                       # (M, C) f32

        # ---- spatial conv1 (1,K) + folded BN + ReLU --------------------------
        # y written once into a zero-padded VMEM scratch; K taps are static
        # sublane-aligned slices accumulated with K small matmuls (no im2col).
        if PAD > 0:
            zc = jnp.zeros((PAD, C), ypad_ref.dtype)
            ypad_ref[0:PAD, :] = zc
            ypad_ref[PAD + M:PAD + M + PAD, :] = zc
        ypad_ref[PAD:PAD + M, :] = y.astype(ypad_ref.dtype)

        s1 = jnp.zeros((M, R), jnp.float32)
        for j in range(K):
            tap = ypad_ref[j * NB:j * NB + M, :].astype(jnp.bfloat16)
            wj = w_ref[r_ws1 + j * ws1_slot:r_ws1 + j * ws1_slot + C, 0:R]
            s1 = s1 + jnp.dot(tap, wj, preferred_element_type=jnp.float32)
        h1 = jnp.maximum(s1 + sh1, 0.0)                                    # (M, R)

        # ---- spatial conv2 (1,K) + folded BN + sigmoid gate ------------------
        if PAD > 0:
            zr = jnp.zeros((PAD, R), hpad_ref.dtype)
            hpad_ref[0:PAD, :] = zr
            hpad_ref[PAD + M:PAD + M + PAD, :] = zr
        hpad_ref[PAD:PAD + M, :] = h1.astype(hpad_ref.dtype)

        s2 = jnp.zeros((M, C), jnp.float32)
        for j in range(K):
            tap = hpad_ref[j * NB:j * NB + M, :].astype(jnp.bfloat16)
            wj = w_ref[r_ws2 + j * ws2_slot:r_ws2 + j * ws2_slot + R, 0:C]
            s2 = s2 + jnp.dot(tap, wj, preferred_element_type=jnp.float32)
        gate = jax.nn.sigmoid(s2 + sh2)                                    # (M, C)

        out_ref[0] = (y * gate).reshape(T, NB, C).astype(out_ref.dtype)

    return kernel


def _pick_node_block(n, cap=256):
    """Largest divisor of n <= cap that is a multiple of 16 (bf16 vreg aligned),
    else a multiple of 8 (f32 aligned; scratch falls back to f32), else n itself
    (correct but tap slices are then not vreg-aligned)."""
    for mult in (16, 8):
        start = (min(n, cap) // mult) * mult
        for nb in range(start, 0, -mult):
            if n % nb == 0:
                return nb
    return n


def feature_attention_forward(x, p, nb=None):
    """x: (B, T, N, Din) -> (B, T, N, C)   (same convention as the torch module)."""
    B, T, N, Din = x.shape
    C = p["w1"].shape[1]
    R = p["wc1"].shape[1]
    K = p["ws1"].shape[0]
    P = (K - 1) // 2
    assert C + R <= 128 and C <= 128 and Din <= 128

    if nb is None:
        nb = _pick_node_block(N)
    assert N % nb == 0
    n_blocks = N // nb

    f32, bf = jnp.float32, jnp.bfloat16

    # Fuse the 1x1 conv with the first channel-attention Linear.
    w01 = jnp.concatenate([p["w1"], p["w1"] @ p["wc1"]], axis=1)             # (Din, C+R)
    b01 = jnp.concatenate([p["b1"], p["b1"] @ p["wc1"] + p["bc1"]], axis=1)  # (1, C+R)
    # Second attention Linear, zero-padded so it consumes relu([xc|h_pre]) directly.
    wc2p = jnp.concatenate([jnp.zeros((C, C), f32), p["wc2"]], axis=0)       # (C+R, C)
    # Fold eval-mode BN scale into the conv weights and (BN shift + conv bias)
    # into a single per-channel shift.
    ws1 = p["ws1"] * p["sc1"][None]                                          # (K, C, R)
    ws2 = p["ws2"] * p["sc2"][None]                                          # (K, R, C)
    sh1 = p["sh1"] + p["bs1"] * p["sc1"]                                     # (1, R)
    sh2 = p["sh2"] + p["bs2"] * p["sc2"]                                     # (1, C)

    # Pack every weight matrix into ONE (rows, 128) bf16 slab (single DMA);
    # every row offset is a multiple of 16 so in-kernel slices stay vreg-aligned.
    r_w01 = 0
    r_wc2 = r_w01 + _ceil16(Din)
    r_ws1 = r_wc2 + _ceil16(C + R)
    ws1_slot = _ceil16(C)
    r_ws2 = r_ws1 + K * ws1_slot
    ws2_slot = _ceil16(R)
    rows = r_ws2 + K * ws2_slot

    slab = jnp.zeros((rows, 128), f32)
    slab = slab.at[r_w01:r_w01 + Din, 0:C + R].set(w01)
    slab = slab.at[r_wc2:r_wc2 + C + R, 0:C].set(wc2p)
    for j in range(K):
        slab = slab.at[r_ws1 + j * ws1_slot:r_ws1 + j * ws1_slot + C, 0:R].set(ws1[j])
        slab = slab.at[r_ws2 + j * ws2_slot:r_ws2 + j * ws2_slot + R, 0:C].set(ws2[j])
    slab = slab.astype(bf)

    # Per-channel f32 vectors packed into a single (8, 128) tile (one DMA).
    vec = jnp.zeros((8, 128), f32)
    vec = vec.at[0, 0:C + R].set(b01[0])
    vec = vec.at[1, 0:C].set(p["bc2"][0])
    vec = vec.at[2, 0:R].set(sh1[0])
    vec = vec.at[3, 0:C].set(sh2[0])

    # bf16 scratch when tap slices stay 16-row aligned, f32 otherwise.
    scratch_dtype = bf if nb % 16 == 0 else f32

    kernel = _make_kernel(T, nb, Din, C, R, K,
                          r_w01, r_wc2, r_ws1, ws1_slot, r_ws2, ws2_slot)

    full2 = lambda b, n: (0, 0)
    return pl.pallas_call(
        kernel,
        out_shape=jax.ShapeDtypeStruct((B, T, N, C), x.dtype),
        grid=(B, n_blocks),
        in_specs=[
            pl.BlockSpec((1, T, nb, Din), lambda b, n: (b, 0, n, 0)),
            pl.BlockSpec((rows, 128), full2),
            pl.BlockSpec((8, 128), full2),
        ],
        out_specs=pl.BlockSpec((1, T, nb, C), lambda b, n: (b, 0, n, 0)),
        scratch_shapes=[
            pltpu.VMEM(((T + 2 * P) * nb, C), scratch_dtype),
            pltpu.VMEM(((T + 2 * P) * nb, R), scratch_dtype),
        ],
        compiler_params=pltpu.CompilerParams(
            dimension_semantics=("parallel", "parallel")),
    )(x, slab, vec)


def reference_forward(x, p):
    """Pure-JAX f32 reference replicating the torch forward (eval-mode BN)."""
    K = p["ws1"].shape[0]
    P = (K - 1) // 2
    xn = jnp.transpose(x, (0, 2, 1, 3)).astype(jnp.float32)                # (B, N, T, Din)
    T = xn.shape[2]
    xc = jnp.einsum("bntd,dc->bntc", xn, p["w1"]) + p["b1"]
    h = jax.nn.relu(jnp.einsum("bntc,cr->bntr", xc, p["wc1"]) + p["bc1"])
    att = jnp.einsum("bntr,rc->bntc", h, p["wc2"]) + p["bc2"]
    y = xc * att
    ypad = jnp.pad(y, ((0, 0), (0, 0), (P, P), (0, 0)))
    s1 = sum(jnp.einsum("bntc,cr->bntr", ypad[:, :, j:j + T, :], p["ws1"][j])
             for j in range(K)) + p["bs1"]
    h1 = jax.nn.relu(s1 * p["sc1"] + p["sh1"])
    hpad = jnp.pad(h1, ((0, 0), (0, 0), (P, P), (0, 0)))
    s2 = sum(jnp.einsum("bntr,rc->bntc", hpad[:, :, j:j + T, :], p["ws2"][j])
             for j in range(K)) + p["bs2"]
    gate = jax.nn.sigmoid(s2 * p["sc2"] + p["sh2"])
    return jnp.transpose(y * gate, (0, 2, 1, 3))


def init_params(key, Din, C, R, K):
    ks = jax.random.split(key, 12)
    nrm = lambda k, shape, s: s * jax.random.normal(k, shape, jnp.float32)
    eps = 1e-5
    # BatchNorm (eval mode) folded: scale = gamma / sqrt(var + eps), shift = beta - mean * scale
    g1 = 1.0 + nrm(ks[10], (1, R), 0.1)
    g2 = 1.0 + nrm(ks[11], (1, C), 0.1)
    rm1, rv1 = jnp.zeros((1, R), jnp.float32), jnp.ones((1, R), jnp.float32)
    rm2, rv2 = jnp.zeros((1, C), jnp.float32), jnp.ones((1, C), jnp.float32)
    be1 = 0.05 * jnp.ones((1, R), jnp.float32)
    be2 = -0.05 * jnp.ones((1, C), jnp.float32)
    sc1 = g1 / jnp.sqrt(rv1 + eps)
    sc2 = g2 / jnp.sqrt(rv2 + eps)
    return dict(
        w1=nrm(ks[0], (Din, C), 0.1), b1=nrm(ks[1], (1, C), 0.05),
        wc1=nrm(ks[2], (C, R), 0.1), bc1=nrm(ks[3], (1, R), 0.05),
        wc2=nrm(ks[4], (R, C), 0.1), bc2=nrm(ks[5], (1, C), 0.05),
        ws1=nrm(ks[6], (K, C, R), 0.1), bs1=nrm(ks[7], (1, R), 0.05),
        ws2=nrm(ks[8], (K, R, C), 0.1), bs2=nrm(ks[9], (1, C), 0.05),
        sc1=sc1, sh1=be1 - rm1 * sc1,
        sc2=sc2, sh2=be2 - rm2 * sc2,
    )


if __name__ == "__main__":
    # Shapes consistent with the module:
    #   input_dim=8, output_dim=32, rate=4 -> hidden R=8, kernel_size=5
    B, T, N, Din = 2, 12, 16, 8
    C, R, K = 32, 8, 5

    key = jax.random.PRNGKey(0)
    kx, kp = jax.random.split(key)
    x = jax.random.normal(kx, (B, T, N, Din), jnp.float32)
    params = init_params(kp, Din, C, R, K)

    ref = jax.block_until_ready(reference_forward(x, params))

    # Default node-block (NB=16, bf16 scratch, grid (B,1)) and a forced 2-block
    # grid (NB=8, f32 scratch) to exercise the node-block index map.
    for nb in (None, 8):
        out = jax.block_until_ready(feature_attention_forward(x, params, nb=nb))
        assert out.shape == (B, T, N, C), out.shape
        # bf16 MXU operands with f32 accumulation -> small rounding vs f32 reference.
        np.testing.assert_allclose(np.asarray(out), np.asarray(ref),
                                   rtol=2e-2, atol=3e-3)

    print("KERNEL_OK")
</pallas_src>

<mosaic_0001>
module attributes {stable_mosaic.version = 11 : i64} {
  func.func @kernel(%arg0: i32, %arg1: i32, %arg2: memref<1x12x16x8xf32, #tpu.memory_space<vmem>>, %arg3: memref<304x128xbf16, #tpu.memory_space<vmem>>, %arg4: memref<8x128xf32, #tpu.memory_space<vmem>>, %arg5: memref<1x12x16x32xf32, #tpu.memory_space<vmem>>, %arg6: memref<256x32xbf16, #tpu.memory_space<vmem>>, %arg7: memref<256x8xbf16, #tpu.memory_space<vmem>>) attributes {dimension_semantics = [#tpu.dimension_semantics<parallel>, #tpu.dimension_semantics<parallel>], iteration_bounds = array<i64: 2, 1>, scalar_prefetch = 0 : i64, scratch_operands = 2 : i64, tpu.core_type = #tpu.core_type<tc>, window_params = [{transform_indices = @transform_0, window_bounds = array<i64: 1, 12, 16, 8>}, {pipeline_mode = #tpu.pipeline_mode<synchronous>, transform_indices = @transform_1, window_bounds = array<i64: 304, 128>}, {pipeline_mode = #tpu.pipeline_mode<synchronous>, transform_indices = @transform_2, window_bounds = array<i64: 8, 128>}, {transform_indices = @transform_3, window_bounds = array<i64: 1, 12, 16, 32>}]} {
    %c0 = arith.constant 0 : index
    %c0_0 = arith.constant 0 : index
    %0 = vector.load %arg4[%c0, %c0_0] : memref<8x128xf32, #tpu.memory_space<vmem>>, vector<1x40xf32>
    %c1 = arith.constant 1 : index
    %c0_1 = arith.constant 0 : index
    %1 = vector.load %arg4[%c1, %c0_1] : memref<8x128xf32, #tpu.memory_space<vmem>>, vector<1x32xf32>
    %c2 = arith.constant 2 : index
    %c0_2 = arith.constant 0 : index
    %2 = vector.load %arg4[%c2, %c0_2] : memref<8x128xf32, #tpu.memory_space<vmem>>, vector<1x8xf32>
    %c3 = arith.constant 3 : index
    %c0_3 = arith.constant 0 : index
    %3 = vector.load %arg4[%c3, %c0_3] : memref<8x128xf32, #tpu.memory_space<vmem>>, vector<1x32xf32>
    %c0_4 = arith.constant 0 : index
    %c0_5 = arith.constant 0 : index
    %c0_6 = arith.constant 0 : index
    %c0_7 = arith.constant 0 : index
    %4 = vector.load %arg2[%c0_4, %c0_5, %c0_6, %c0_7] : memref<1x12x16x8xf32, #tpu.memory_space<vmem>>, vector<1x12x16x8xf32>
    %5 = vector.shape_cast %4 : vector<1x12x16x8xf32> to vector<12x16x8xf32>
    %6 = vector.shape_cast %5 : vector<12x16x8xf32> to vector<192x8xf32>
    %7 = arith.truncf %6 : vector<192x8xf32> to vector<192x8xbf16>
    %c0_8 = arith.constant 0 : index
    %c0_9 = arith.constant 0 : index
    %8 = vector.load %arg3[%c0_8, %c0_9] : memref<304x128xbf16, #tpu.memory_space<vmem>>, vector<8x40xbf16>
    %cst = arith.constant dense<0.000000e+00> : vector<192x40xf32>
    %9 = tpu.matmul %7, %8, %cst {dimension_numbers = #tpu.dot_dimension_numbers<[1], [0], [0], [1], [0, 0, 1, 1], [], []>} : vector<192x8xbf16>, vector<8x40xbf16>, vector<192x40xf32> -> vector<192x40xf32>
    %10 = vector.broadcast %0 : vector<1x40xf32> to vector<192x40xf32>
    %11 = arith.addf %9, %10 : vector<192x40xf32>
    %12 = vector.extract_strided_slice %11 {offsets = [0, 0], sizes = [192, 32], strides = [1, 1]} : vector<192x40xf32> to vector<192x32xf32>
    %c16 = arith.constant 16 : index
    %c0_10 = arith.constant 0 : index
    %13 = vector.load %arg3[%c16, %c0_10] : memref<304x128xbf16, #tpu.memory_space<vmem>>, vector<40x32xbf16>
    %cst_11 = arith.constant 0.000000e+00 : f32
    %14 = vector.broadcast %cst_11 : f32 to vector<192x40xf32>
    %15 = arith.maximumf %11, %14 : vector<192x40xf32>
    %16 = arith.truncf %15 : vector<192x40xf32> to vector<192x40xbf16>
    %cst_12 = arith.constant dense<0.000000e+00> : vector<192x32xf32>
    %17 = tpu.matmul %16, %13, %cst_12 {dimension_numbers = #tpu.dot_dimension_numbers<[1], [0], [0], [1], [0, 0, 1, 1], [], []>} : vector<192x40xbf16>, vector<40x32xbf16>, vector<192x32xf32> -> vector<192x32xf32>
    %18 = vector.broadcast %1 : vector<1x32xf32> to vector<192x32xf32>
    %19 = arith.addf %17, %18 : vector<192x32xf32>
    %20 = arith.mulf %12, %19 : vector<192x32xf32>
    %cst_13 = arith.constant 0.000000e+00 : bf16
    %21 = vector.broadcast %cst_13 : bf16 to vector<32x32xbf16>
    %c0_14 = arith.constant 0 : index
    %c0_15 = arith.constant 0 : index
    %22 = vector.load %arg6[%c0_14, %c0_15] : memref<256x32xbf16, #tpu.memory_space<vmem>>, vector<32x32xbf16>
    tpu.vector_store %arg6[%c0_14, %c0_15], %21 {strides = array<i32>} : memref<256x32xbf16, #tpu.memory_space<vmem>>, vector<32x32xbf16>,
    %c224 = arith.constant 224 : index
    %c0_16 = arith.constant 0 : index
    %23 = vector.load %arg6[%c224, %c0_16] : memref<256x32xbf16, #tpu.memory_space<vmem>>, vector<32x32xbf16>
    tpu.vector_store %arg6[%c224, %c0_16], %21 {strides = array<i32>} : memref<256x32xbf16, #tpu.memory_space<vmem>>, vector<32x32xbf16>,
    %24 = arith.truncf %20 : vector<192x32xf32> to vector<192x32xbf16>
    %c32 = arith.constant 32 : index
    %c0_17 = arith.constant 0 : index
    %25 = vector.load %arg6[%c32, %c0_17] : memref<256x32xbf16, #tpu.memory_space<vmem>>, vector<192x32xbf16>
    tpu.vector_store %arg6[%c32, %c0_17], %24 {strides = array<i32>} : memref<256x32xbf16, #tpu.memory_space<vmem>>, vector<192x32xbf16>,
    %cst_18 = arith.constant 0.000000e+00 : f32
    %26 = vector.broadcast %cst_18 : f32 to vector<192x8xf32>
    %c0_19 = arith.constant 0 : index
    %c0_20 = arith.constant 0 : index
    %27 = vector.load %arg6[%c0_19, %c0_20] : memref<256x32xbf16, #tpu.memory_space<vmem>>, vector<192x32xbf16>
    %c64 = arith.constant 64 : index
    %c0_21 = arith.constant 0 : index
    %28 = vector.load %arg3[%c64, %c0_21] : memref<304x128xbf16, #tpu.memory_space<vmem>>, vector<32x8xbf16>
    %cst_22 = arith.constant dense<0.000000e+00> : vector<192x8xf32>
    %29 = tpu.matmul %27, %28, %cst_22 {dimension_numbers = #tpu.dot_dimension_numbers<[1], [0], [0], [1], [0, 0, 1, 1], [], []>} : vector<192x32xbf16>, vector<32x8xbf16>, vector<192x8xf32> -> vector<192x8xf32>
    %30 = arith.addf %26, %29 : vector<192x8xf32>
    %c16_23 = arith.constant 16 : index
    %c0_24 = arith.constant 0 : index
    %31 = vector.load %arg6[%c16_23, %c0_24] : memref<256x32xbf16, #tpu.memory_space<vmem>>, vector<192x32xbf16>
    %c96 = arith.constant 96 : index
    %c0_25 = arith.constant 0 : index
    %32 = vector.load %arg3[%c96, %c0_25] : memref<304x128xbf16, #tpu.memory_space<vmem>>, vector<32x8xbf16>
    %cst_26 = arith.constant dense<0.000000e+00> : vector<192x8xf32>
    %33 = tpu.matmul %31, %32, %cst_26 {dimension_numbers = #tpu.dot_dimension_numbers<[1], [0], [0], [1], [0, 0, 1, 1], [], []>} : vector<192x32xbf16>, vector<32x8xbf16>, vector<192x8xf32> -> vector<192x8xf32>
    %34 = arith.addf %30, %33 : vector<192x8xf32>
    %c32_27 = arith.constant 32 : index
    %c0_28 = arith.constant 0 : index
    %35 = vector.load %arg6[%c32_27, %c0_28] : memref<256x32xbf16, #tpu.memory_space<vmem>>, vector<192x32xbf16>
    %c128 = arith.constant 128 : index
    %c0_29 = arith.constant 0 : index
    %36 = vector.load %arg3[%c128, %c0_29] : memref<304x128xbf16, #tpu.memory_space<vmem>>, vector<32x8xbf16>
    %cst_30 = arith.constant dense<0.000000e+00> : vector<192x8xf32>
    %37 = tpu.matmul %35, %36, %cst_30 {dimension_numbers = #tpu.dot_dimension_numbers<[1], [0], [0], [1], [0, 0, 1, 1], [], []>} : vector<192x32xbf16>, vector<32x8xbf16>, vector<192x8xf32> -> vector<192x8xf32>
    %38 = arith.addf %34, %37 : vector<192x8xf32>
    %c48 = arith.constant 48 : index
    %c0_31 = arith.constant 0 : index
    %39 = vector.load %arg6[%c48, %c0_31] : memref<256x32xbf16, #tpu.memory_space<vmem>>, vector<192x32xbf16>
    %c160 = arith.constant 160 : index
    %c0_32 = arith.constant 0 : index
    %40 = vector.load %arg3[%c160, %c0_32] : memref<304x128xbf16, #tpu.memory_space<vmem>>, vector<32x8xbf16>
    %cst_33 = arith.constant dense<0.000000e+00> : vector<192x8xf32>
    %41 = tpu.matmul %39, %40, %cst_33 {dimension_numbers = #tpu.dot_dimension_numbers<[1], [0], [0], [1], [0, 0, 1, 1], [], []>} : vector<192x32xbf16>, vector<32x8xbf16>, vector<192x8xf32> -> vector<192x8xf32>
    %42 = arith.addf %38, %41 : vector<192x8xf32>
    %c64_34 = arith.constant 64 : index
    %c0_35 = arith.constant 0 : index
    %43 = vector.load %arg6[%c64_34, %c0_35] : memref<256x32xbf16, #tpu.memory_space<vmem>>, vector<192x32xbf16>
    %c192 = arith.constant 192 : index
    %c0_36 = arith.constant 0 : index
    %44 = vector.load %arg3[%c192, %c0_36] : memref<304x128xbf16, #tpu.memory_space<vmem>>, vector<32x8xbf16>
    %cst_37 = arith.constant dense<0.000000e+00> : vector<192x8xf32>
    %45 = tpu.matmul %43, %44, %cst_37 {dimension_numbers = #tpu.dot_dimension_numbers<[1], [0], [0], [1], [0, 0, 1, 1], [], []>} : vector<192x32xbf16>, vector<32x8xbf16>, vector<192x8xf32> -> vector<192x8xf32>
    %46 = arith.addf %42, %45 : vector<192x8xf32>
    %47 = vector.broadcast %2 : vector<1x8xf32> to vector<192x8xf32>
    %48 = arith.addf %46, %47 : vector<192x8xf32>
    %cst_38 = arith.constant 0.000000e+00 : f32
    %49 = vector.broadcast %cst_38 : f32 to vector<192x8xf32>
    %50 = arith.maximumf %48, %49 : vector<192x8xf32>
    %cst_39 = arith.constant 0.000000e+00 : bf16
    %51 = vector.broadcast %cst_39 : bf16 to vector<32x8xbf16>
    %c0_40 = arith.constant 0 : index
    %c0_41 = arith.constant 0 : index
    %52 = vector.load %arg7[%c0_40, %c0_41] : memref<256x8xbf16, #tpu.memory_space<vmem>>, vector<32x8xbf16>
    tpu.vector_store %arg7[%c0_40, %c0_41], %51 {strides = array<i32>} : memref<256x8xbf16, #tpu.memory_space<vmem>>, vector<32x8xbf16>,
    %c224_42 = arith.constant 224 : index
    %c0_43 = arith.constant 0 : index
    %53 = vector.load %arg7[%c224_42, %c0_43] : memref<256x8xbf16, #tpu.memory_space<vmem>>, vector<32x8xbf16>
    tpu.vector_store %arg7[%c224_42, %c0_43], %51 {strides = array<i32>} : memref<256x8xbf16, #tpu.memory_space<vmem>>, vector<32x8xbf16>,
    %54 = arith.truncf %50 : vector<192x8xf32> to vector<192x8xbf16>
    %c32_44 = arith.constant 32 : index
    %c0_45 = arith.constant 0 : index
    %55 = vector.load %arg7[%c32_44, %c0_45] : memref<256x8xbf16, #tpu.memory_space<vmem>>, vector<192x8xbf16>
    tpu.vector_store %arg7[%c32_44, %c0_45], %54 {strides = array<i32>} : memref<256x8xbf16, #tpu.memory_space<vmem>>, vector<192x8xbf16>,
    %cst_46 = arith.constant 0.000000e+00 : f32
    %56 = vector.broadcast %cst_46 : f32 to vector<192x32xf32>
    %c0_47 = arith.constant 0 : index
    %c0_48 = arith.constant 0 : index
    %57 = vector.load %arg7[%c0_47, %c0_48] : memref<256x8xbf16, #tpu.memory_space<vmem>>, vector<192x8xbf16>
    %c224_49 = arith.constant 224 : index
    %c0_50 = arith.constant 0 : index
    %58 = vector.load %arg3[%c224_49, %c0_50] : memref<304x128xbf16, #tpu.memory_space<vmem>>, vector<8x32xbf16>
    %cst_51 = arith.constant dense<0.000000e+00> : vector<192x32xf32>
    %59 = tpu.matmul %57, %58, %cst_51 {dimension_numbers = #tpu.dot_dimension_numbers<[1], [0], [0], [1], [0, 0, 1, 1], [], []>} : vector<192x8xbf16>, vector<8x32xbf16>, vector<192x32xf32> -> vector<192x32xf32>
    %60 = arith.addf %56, %59 : vector<192x32xf32>
    %c16_52 = arith.constant 16 : index
    %c0_53 = arith.constant 0 : index
    %61 = vector.load %arg7[%c16_52, %c0_53] : memref<256x8xbf16, #tpu.memory_space<vmem>>, vector<192x8xbf16>
    %c240 = arith.constant 240 : index
    %c0_54 = arith.constant 0 : index
    %62 = vector.load %arg3[%c240, %c0_54] : memref<304x128xbf16, #tpu.memory_space<vmem>>, vector<8x32xbf16>
    %cst_55 = arith.constant dense<0.000000e+00> : vector<192x32xf32>
    %63 = tpu.matmul %61, %62, %cst_55 {dimension_numbers = #tpu.dot_dimension_numbers<[1], [0], [0], [1], [0, 0, 1, 1], [], []>} : vector<192x8xbf16>, vector<8x32xbf16>, vector<192x32xf32> -> vector<192x32xf32>
    %64 = arith.addf %60, %63 : vector<192x32xf32>
    %c32_56 = arith.constant 32 : index
    %c0_57 = arith.constant 0 : index
    %65 = vector.load %arg7[%c32_56, %c0_57] : memref<256x8xbf16, #tpu.memory_space<vmem>>, vector<192x8xbf16>
    %c256 = arith.constant 256 : index
    %c0_58 = arith.constant 0 : index
    %66 = vector.load %arg3[%c256, %c0_58] : memref<304x128xbf16, #tpu.memory_space<vmem>>, vector<8x32xbf16>
    %cst_59 = arith.constant dense<0.000000e+00> : vector<192x32xf32>
    %67 = tpu.matmul %65, %66, %cst_59 {dimension_numbers = #tpu.dot_dimension_numbers<[1], [0], [0], [1], [0, 0, 1, 1], [], []>} : vector<192x8xbf16>, vector<8x32xbf16>, vector<192x32xf32> -> vector<192x32xf32>
    %68 = arith.addf %64, %67 : vector<192x32xf32>
    %c48_60 = arith.constant 48 : index
    %c0_61 = arith.constant 0 : index
    %69 = vector.load %arg7[%c48_60, %c0_61] : memref<256x8xbf16, #tpu.memory_space<vmem>>, vector<192x8xbf16>
    %c272 = arith.constant 272 : index
    %c0_62 = arith.constant 0 : index
    %70 = vector.load %arg3[%c272, %c0_62] : memref<304x128xbf16, #tpu.memory_space<vmem>>, vector<8x32xbf16>
    %cst_63 = arith.constant dense<0.000000e+00> : vector<192x32xf32>
    %71 = tpu.matmul %69, %70, %cst_63 {dimension_numbers = #tpu.dot_dimension_numbers<[1], [0], [0], [1], [0, 0, 1, 1], [], []>} : vector<192x8xbf16>, vector<8x32xbf16>, vector<192x32xf32> -> vector<192x32xf32>
    %72 = arith.addf %68, %71 : vector<192x32xf32>
    %c64_64 = arith.constant 64 : index
    %c0_65 = arith.constant 0 : index
    %73 = vector.load %arg7[%c64_64, %c0_65] : memref<256x8xbf16, #tpu.memory_space<vmem>>, vector<192x8xbf16>
    %c288 = arith.constant 288 : index
    %c0_66 = arith.constant 0 : index
    %74 = vector.load %arg3[%c288, %c0_66] : memref<304x128xbf16, #tpu.memory_space<vmem>>, vector<8x32xbf16>
    %cst_67 = arith.constant dense<0.000000e+00> : vector<192x32xf32>
    %75 = tpu.matmul %73, %74, %cst_67 {dimension_numbers = #tpu.dot_dimension_numbers<[1], [0], [0], [1], [0, 0, 1, 1], [], []>} : vector<192x8xbf16>, vector<8x32xbf16>, vector<192x32xf32> -> vector<192x32xf32>
    %76 = arith.addf %72, %75 : vector<192x32xf32>
    %77 = vector.broadcast %3 : vector<1x32xf32> to vector<192x32xf32>
    %78 = arith.addf %76, %77 : vector<192x32xf32>
    %79 = arith.negf %78 : vector<192x32xf32>
    %80 = math.exp %79 : vector<192x32xf32>
    %cst_68 = arith.constant 1.000000e+00 : f32
    %81 = vector.broadcast %cst_68 : f32 to vector<192x32xf32>
    %82 = arith.addf %81, %80 : vector<192x32xf32>
    %83 = arith.divf %81, %82 : vector<192x32xf32>
    %84 = arith.mulf %20, %83 : vector<192x32xf32>
    %85 = vector.shape_cast %84 : vector<192x32xf32> to vector<12x16x32xf32>
    %c0_69 = arith.constant 0 : index
    %c0_70 = arith.constant 0 : index
    %c0_71 = arith.constant 0 : index
    %c0_72 = arith.constant 0 : index
    %86 = vector.load %arg5[%c0_69, %c0_70, %c0_71, %c0_72] : memref<1x12x16x32xf32, #tpu.memory_space<vmem>>, vector<1x12x16x32xf32>
    %87 = vector.shape_cast %86 : vector<1x12x16x32xf32> to vector<12x16x32xf32>
    %88 = vector.shape_cast %85 : vector<12x16x32xf32> to vector<1x12x16x32xf32>
    tpu.vector_store %arg5[%c0_69, %c0_70, %c0_71, %c0_72], %88 {strides = array<i32>} : memref<1x12x16x32xf32, #tpu.memory_space<vmem>>, vector<1x12x16x32xf32>,
    return
  }
  func.func @transform_0(%arg0: i32, %arg1: i32) -> (i32, i32, i32, i32) {
    %c0_i32 = arith.constant 0 : i32
    %c0_i32_0 = arith.constant 0 : i32
    %c0_i32_1 = arith.constant 0 : i32
    return %arg0, %c0_i32, %arg1, %c0_i32_0 : i32, i32, i32, i32
  }
  func.func @transform_1(%arg0: i32, %arg1: i32) -> (i32, i32) {
    %c0_i32 = arith.constant 0 : i32
    %c0_i32_0 = arith.constant 0 : i32
    %c0_i32_1 = arith.constant 0 : i32
    return %c0_i32, %c0_i32_0 : i32, i32
  }
  func.func @transform_2(%arg0: i32, %arg1: i32) -> (i32, i32) {
    %c0_i32 = arith.constant 0 : i32
    %c0_i32_0 = arith.constant 0 : i32
    %c0_i32_1 = arith.constant 0 : i32
    return %c0_i32, %c0_i32_0 : i32, i32
  }
  func.func @transform_3(%arg0: i32, %arg1: i32) -> (i32, i32, i32, i32) {
    %c0_i32 = arith.constant 0 : i32
    %c0_i32_0 = arith.constant 0 : i32
    %c0_i32_1 = arith.constant 0 : i32
    return %arg0, %c0_i32, %arg1, %c0_i32_0 : i32, i32, i32, i32
  }
}

</mosaic_0001>

<llo_original>
// kernel: tpu_custom_call.1
$region0: #{tpu_custom_call.1}
  #allocation0 [shape = 'u32[]', space=smem, size = 0x4, offset = 0x4, fixed_abs, tag = 'smem constant byte address 0x4 - core index']
  #allocation1 [shape = 'u32[144,128]{1,0:T(1,128)}', space=vmem, size = 0x12000, scoped, tag = 'internal scratch']
  #allocation2 [shape = 'bf16[256,32]{1,0:T(16,128)(2,1)}', space=vmem, size = 0x10000, scoped, tag = 'scratch operand']
  #allocation3 [shape = 'bf16[256,8]{1,0:T(16,128)(2,1)}', space=vmem, size = 0x10000, scoped, tag = 'scratch operand']
  %s0 = inlined_call_operand.vmem [shape: f32[2,12,16,8], index: 0, kind: input, shape index: {}]
  %s1 = inlined_call_operand.vmem [shape: bf16[304,128], index: 1, kind: input, shape index: {}]
  %s2 = inlined_call_operand.vmem [shape: f32[8,128], index: 2, kind: input, shape index: {}]
  %s3 = inlined_call_operand.hbm [shape: f32[2,12,16,32], index: 3, kind: output, shape index: {}]
  %s4 = sld [smem:[#allocation0]]
  $region45: #{tpu_custom_call.1} parent=0
    _
  %s6 = ssub.s32 1, %s4
  %s7 = scalar_select 0, %s6, %s4
  $region1: #{tpu_custom_call.1} parent=0
    #allocation4 [shape = 'u8[196608]{0}', space=vmem, size = 0x30000, scoped, tag = 'output window, operand 0']
    #allocation5 [shape = 's32[2]{0}', space=sflag, size = 0x8, scoped, tag = 'scoped memory for tpu_custom_call.1']
    %8 = vsyncpa [#allocation5], 0
    %s9 = scalar_lea.sflag [#allocation5], 1
    %10 = vsyncpa %s9, 0
    loop: start=0, step=1, limit=4
    $region2: #{tpu_custom_call.1} parent=1 // loop_pre_header
      _
    $region3: #{tpu_custom_call.1} parent=1 // loop_header
      %s12 = sphi 0, %s16
      %p13 = scmp.ge.s32.totalorder %s12, 4
      %s19 = sphi 0, %s31
      %s20 = sphi 0, %s27
      %s21 = sphi 0, %s19
      %s22 = sphi 0, %s20
      %s23 = sphi 0, %s21
      %s24 = sphi 0, %s22
      %s36 = sphi 0, %s38
      %s39 = sphi 0, %s36
      %s40 = sphi 0, %s39
      %s56 = sphi 0, %s40
      %s60 = sphi 0, %s60
      %s62 = sphi 0, %s60
      %s63 = sphi 0, %s62
      %s77 = sphi 0, %s63
      %s81 = sphi 0, %s81
      %s83 = sphi 0, %s81
      %s84 = sphi 0, %s83
      %s98 = sphi 0, %s84
      %s106 = sphi 0, %s108
      %s109 = sphi 0, %s106
      %s110 = sphi 0, %s109
      %s126 = sphi 0, %s110
    $region4: #{tpu_custom_call.1} parent=1 // loop_header_branch
      %15 = sbr.rel (%p13) target = $region8
    $region5: #{tpu_custom_call.1} parent=1 // loop_body
      %s17 = ssub.s32 %s12, 1
      %s18 = ssub.s32 %s12, 2
      %s25 = sadd.s32 1, %s20
      %p26 = scmp.ge.s32.totalorder %s25, 1
      %s27 = scalar_select %p26, 0, %s25
      %s28 = sadd.s32 1, %s19
      %s29 = scalar_select %p26, %s28, %s19
      %p30 = scmp.ge.s32.totalorder %s29, 2
      %s31 = scalar_select %p30, 0, %s29
      %s32 = ssub.s32 %s19, %s31
      %s33 = ssub.s32 %s20, %s27
      %s34 = sor.u32 %s32, %s33
      %p35 = scmp.eq.s32.totalorder %s34, 0
      %s37 = sadd.s32 %s36, 1
      %s38 = scalar_select %p35, %s36, %s37
      %p41 = pneg %p35
      %p42 = scmp.eq.s32.totalorder %s12, 1
      %p43 = por %p41, %p42
      %p44 = scmp.ne.s32.totalorder %s36, %s39
      %p45 = scmp.eq.s32.totalorder %s12, 0
      %p46 = por %p44, %p45
      %p47 = scmp.ne.s32.totalorder %s36, %s39
      %p48 = scmp.eq.s32.totalorder %s17, 1
      %p49 = por %p47, %p48
      %p50 = scmp.ne.s32.totalorder %s39, %s40
      %p51 = scmp.eq.s32.totalorder %s17, 0
      %p52 = por %p50, %p51
      %p53 = scmp.ne.s32.totalorder %s39, %s40
      %p54 = scmp.eq.s32.totalorder %s18, 1
      %p55 = por %p53, %p54
      %p57 = scmp.ne.s32.totalorder %s40, %s56
      %p58 = scmp.eq.s32.totalorder %s18, 0
      %p59 = por %p57, %p58
      %s61 = sadd.s32 %s60, 1
      %p64 = scmp.eq.s32.totalorder %s12, 1
      %p65 = scmp.ne.s32.totalorder %s60, %s62
      %p66 = scmp.eq.s32.totalorder %s12, 0
      %p67 = por %p65, %p66
      %p68 = scmp.ne.s32.totalorder %s60, %s62
      %p69 = scmp.eq.s32.totalorder %s17, 1
      %p70 = por %p68, %p69
      %p71 = scmp.ne.s32.totalorder %s62, %s63
      %p72 = scmp.eq.s32.totalorder %s17, 0
      %p73 = por %p71, %p72
      %p74 = scmp.ne.s32.totalorder %s62, %s63
      %p75 = scmp.eq.s32.totalorder %s18, 1
      %p76 = por %p74, %p75
      %p78 = scmp.ne.s32.totalorder %s63, %s77
      %p79 = scmp.eq.s32.totalorder %s18, 0
      %p80 = por %p78, %p79
      %s82 = sadd.s32 %s81, 1
      %p85 = scmp.eq.s32.totalorder %s12, 1
      %p86 = scmp.ne.s32.totalorder %s81, %s83
      %p87 = scmp.eq.s32.totalorder %s12, 0
      %p88 = por %p86, %p87
      %p89 = scmp.ne.s32.totalorder %s81, %s83
      %p90 = scmp.eq.s32.totalorder %s17, 1
      %p91 = por %p89, %p90
      %p92 = scmp.ne.s32.totalorder %s83, %s84
      %p93 = scmp.eq.s32.totalorder %s17, 0
      %p94 = por %p92, %p93
      %p95 = scmp.ne.s32.totalorder %s83, %s84
      %p96 = scmp.eq.s32.totalorder %s18, 1
      %p97 = por %p95, %p96
      %p99 = scmp.ne.s32.totalorder %s84, %s98
      %p100 = scmp.eq.s32.totalorder %s18, 0
      %p101 = por %p99, %p100
      %s102 = ssub.s32 %s19, %s31
      %s103 = ssub.s32 %s20, %s27
      %s104 = sor.u32 %s102, %s103
      %p105 = scmp.eq.s32.totalorder %s104, 0
      %s107 = sadd.s32 %s106, 1
      %s108 = scalar_select %p105, %s106, %s107
      %p111 = pneg %p105
      %p112 = scmp.eq.s32.totalorder %s12, 1
      %p113 = por %p111, %p112
      %p114 = scmp.ne.s32.totalorder %s106, %s109
      %p115 = scmp.eq.s32.totalorder %s12, 0
      %p116 = por %p114, %p115
      %p117 = scmp.ne.s32.totalorder %s106, %s109
      %p118 = scmp.eq.s32.totalorder %s17, 1
      %p119 = por %p117, %p118
      %p120 = scmp.ne.s32.totalorder %s109, %s110
      %p121 = scmp.eq.s32.totalorder %s17, 0
      %p122 = por %p120, %p121
      %p123 = scmp.ne.s32.totalorder %s109, %s110
      %p124 = scmp.eq.s32.totalorder %s18, 1
      %p125 = por %p123, %p124
      %p127 = scmp.ne.s32.totalorder %s110, %s126
      %p128 = scmp.eq.s32.totalorder %s18, 0
      %p129 = por %p127, %p128
      %p130 = scmp.le.s32.totalorder 1, %s12
      %p131 = scmp.lt.s32.totalorder %s12, 3
      %p132 = pnand %p130, %p131
      %p133 = pneg %p132
      // Predicated region
      $region9: #{tpu_custom_call.1} parent=5 // pred_check
        _
      $region10: #{tpu_custom_call.1} parent=5 // pred_check_branch
        %135 = sbr.rel (%p132) target = $region12
      $region11: #{tpu_custom_call.1} parent=5 // pred_region
        %s136 = ssub.s32 %s12, 1
        // Predicated region
        $region13: #{tpu_custom_call.1} parent=11 // pred_check
          %p137 = pneg %p73
        $region14: #{tpu_custom_call.1} parent=11 // pred_check_branch
          %139 = sbr.rel (%p137) target = $region16
        $region15: #{tpu_custom_call.1} parent=11 // pred_region
          _
        $region16: #{tpu_custom_call.1} parent=11 // pred_fallthru
          _
        // Predicated region
        $region17: #{tpu_custom_call.1} parent=11 // pred_check
          %p140 = pneg %p94
        $region18: #{tpu_custom_call.1} parent=11 // pred_check_branch
          %142 = sbr.rel (%p140) target = $region20
        $region19: #{tpu_custom_call.1} parent=11 // pred_region
          _
        $region20: #{tpu_custom_call.1} parent=11 // pred_fallthru
          _
      $region12: #{tpu_custom_call.1} parent=5 // pred_fallthru
        _
      %p143 = scmp.lt.s32.totalorder %s12, 2
      // Predicated region
      $region21: #{tpu_custom_call.1} parent=5 // pred_check
        %p144 = pneg %p143
      $region22: #{tpu_custom_call.1} parent=5 // pred_check_branch
        %146 = sbr.rel (%p144) target = $region24
      $region23: #{tpu_custom_call.1} parent=5 // pred_region
        // Predicated region
        $region25: #{tpu_custom_call.1} parent=23 // pred_check
          %p147 = pneg %p46
        $region26: #{tpu_custom_call.1} parent=23 // pred_check_branch
          %149 = sbr.rel (%p147) target = $region28
        $region27: #{tpu_custom_call.1} parent=23 // pred_region
          %s150 = smul.u32 2, %s20
          %p151 = scmp.lt.s32.totalorder %s19, 1
          %s152 = scalar_select %p151, %s19, 1
          %p153 = scmp.lt.s32.totalorder %s150, 1
          %s154 = scalar_select %p153, %s150, 1
          %s155 = smul.addr %s152, 24
          %s156 = sadd.s32 %s154, %s155
          %s157 = smul.addr %s156, 8
          %s158 = scalar_lea.vmem %s0, %s157
          %s159 = smul.u32 2, %s20
        $region28: #{tpu_custom_call.1} parent=23 // pred_fallthru
          _
      $region24: #{tpu_custom_call.1} parent=5 // pred_fallthru
        _
      %p160 = scmp.le.s32.totalorder 1, %s12
      %p161 = scmp.lt.s32.totalorder %s12, 3
      %p162 = pnand %p160, %p161
      %p163 = pneg %p162
      // Predicated region
      $region29: #{tpu_custom_call.1} parent=5 // pred_check
        _
      $region30: #{tpu_custom_call.1} parent=5 // pred_check_branch
        %165 = sbr.rel (%p162) target = $region32
      $region31: #{tpu_custom_call.1} parent=5 // pred_region
        %s166 = ssub.s32 %s12, 1
        %s167 = smul.u32 2, %s22
        %p168 = scmp.lt.s32.totalorder %s21, 1
        %s169 = scalar_select %p168, %s21, 1
        %p170 = scmp.lt.s32.totalorder %s167, 1
        %s171 = scalar_select %p170, %s167, 1
        %s172 = smul.addr %s169, 24
        %s173 = sadd.s32 %s171, %s172
        %s174 = smul.addr %s173, 8
        %s175 = scalar_lea.vmem %s0, %s174
        %p176 = pneg %p52
        %p177 = pneg %p49
        %p178 = pneg %p73
        %p179 = pneg %p70
        %p180 = pneg %p94
        %p181 = pneg %p91
        %p182 = pneg %p122
        %p183 = pneg %p119
        %s184 = sand.u32 %s109, 1
        %s185 = scalar_lea.sflag [#allocation5], %s184
        %s186 = sand.u32 %s109, 1
        %s187 = smul.addr %s186, 192
        %s188 = scalar_lea.vmem [#allocation4], %s187
        %s189 = smul.u32 2, %s22
        %p190 = scmp.lt.s32.totalorder %s21, 1
        %s191 = scalar_select %p190, %s21, 1
        %p192 = scmp.lt.s32.totalorder %s189, 1
        %s193 = scalar_select %p192, %s189, 1
        %s194 = smul.addr %s191, 24
        %s195 = sadd.s32 %s193, %s194
        %s196 = smul.addr %s195, 8
        %s197 = scalar_lea.vmem %s0, %s196
        %s198 = smul.u32 2, %s22
        %s199 = smul.u32 2, %s22
        %v201 = vld [vmem:[%s2] sm:$0x1]
        %v202 = vld [vmem:[%s2 + $0x1] sm:$0x1]
        %v203 = vld [vmem:[%s2 + $0x2] sm:$0x1]
        %v204 = vld [vmem:[%s2 + $0x3] sm:$0x1]
        %v205 = vld [vmem:[%s197] sm:$0xff]
        %v206 = vld [vmem:[%s197 + $0x8] sm:$0xff]
        %v207 = vld [vmem:[%s197 + $0x10] sm:$0xff]
        %v208 = vld [vmem:[%s197 + $0x18] sm:$0xff]
        %v209 = vld [vmem:[%s197 + $0x20] sm:$0xff]
        %v210 = vld [vmem:[%s197 + $0x28] sm:$0xff]
        %v211 = vld [vmem:[%s197 + $0x30] sm:$0xff]
        %v212 = vld [vmem:[%s197 + $0x38] sm:$0xff]
        %v213 = vld [vmem:[%s197 + $0x40] sm:$0xff]
        %v214 = vld [vmem:[%s197 + $0x48] sm:$0xff]
        %v215 = vld [vmem:[%s197 + $0x50] sm:$0xff]
        %v216 = vld [vmem:[%s197 + $0x58] sm:$0xff]
        %v217 = vld [vmem:[%s197 + $0x60] sm:$0xff]
        %v218 = vld [vmem:[%s197 + $0x68] sm:$0xff]
        %v219 = vld [vmem:[%s197 + $0x70] sm:$0xff]
        %v220 = vld [vmem:[%s197 + $0x78] sm:$0xff]
        %v221 = vld [vmem:[%s197 + $0x80] sm:$0xff]
        %v222 = vld [vmem:[%s197 + $0x88] sm:$0xff]
        %v223 = vld [vmem:[%s197 + $0x90] sm:$0xff]
        %v224 = vld [vmem:[%s197 + $0x98] sm:$0xff]
        %v225 = vld [vmem:[%s197 + $0xa0] sm:$0xff]
        %v226 = vld [vmem:[%s197 + $0xa8] sm:$0xff]
        %v227 = vld [vmem:[%s197 + $0xb0] sm:$0xff]
        %v228 = vld [vmem:[%s197 + $0xb8] sm:$0xff]
        %v229 = vpack.c.bf16 %v206, %v205
        %v230 = vpack.c.bf16 %v208, %v207
        %v231 = vpack.c.bf16 %v210, %v209
        %v232 = vpack.c.bf16 %v212, %v211
        %v233 = vpack.c.bf16 %v214, %v213
        %v234 = vpack.c.bf16 %v216, %v215
        %v235 = vpack.c.bf16 %v218, %v217
        %v236 = vpack.c.bf16 %v220, %v219
        %v237 = vpack.c.bf16 %v222, %v221
        %v238 = vpack.c.bf16 %v224, %v223
        %v239 = vpack.c.bf16 %v226, %v225
        %v240 = vpack.c.bf16 %v228, %v227
        %v241 = vld [vmem:[%s1] sm:$0xf]
        %v242 = vlaneseq
        %v243 = vshrl.u32 %v242, 7
        %v244 = vsub.s32 0, %v243
        %v245 = vrot.slane %v201, %v244
        %vm246 = vcmask 64512
        %v248 = vsel %vm246, %v229, 0
        %v251 = vsel %vm246, %v230, 0
        %v254 = vsel %vm246, %v231, 0
        %v257 = vsel %vm246, %v232, 0
        %v260 = vsel %vm246, %v233, 0
        %v263 = vsel %vm246, %v234, 0
        %v266 = vsel %vm246, %v235, 0
        %v269 = vsel %vm246, %v236, 0
        %v272 = vsel %vm246, %v237, 0
        %v275 = vsel %vm246, %v238, 0
        %v278 = vsel %vm246, %v239, 0
        %v281 = vsel %vm246, %v240, 0
        %vm283 = vcmask 1043456
        %v285 = vsel %vm283, %v241, 0
        %287 = vmatprep.subr.bf16.mxu0 0
        %288 = vmatpush1.bf16.msra.mxu0 %v285
        %289 = vmatprep.subr.bf16.mxu0 0
        %290 = vmatpush1.bf16.msra.mxu0 0
        %291 = vmatprep.subr.bf16.mxu0 0
        %292 = vmatpush1.bf16.msra.mxu0 0
        %293 = vmatprep.subr.bf16.mxu0 0
        %294 = vmatpush1.bf16.msra.mxu0 0
        %295 = vmatprep.subr.bf16.mxu0 0
        %296 = vmatpush1.bf16.msra.mxu0 0
        %297 = vmatprep.subr.bf16.mxu0 0
        %298 = vmatpush1.bf16.msra.mxu0 0
        %299 = vmatprep.subr.bf16.mxu0 0
        %300 = vmatpush1.bf16.msra.mxu0 0
        %301 = vmatprep.subr.bf16.mxu0 0
        %302 = vmatpush1.bf16.msra.mxu0 0
        %303 = vmatprep.subr.bf16.mxu0 0
        %304 = vmatpush1.bf16.msra.mxu0 0
        %305 = vmatprep.subr.bf16.mxu0 0
        %306 = vmatpush1.bf16.msra.mxu0 0
        %307 = vmatprep.subr.bf16.mxu0 0
        %308 = vmatpush1.bf16.msra.mxu0 0
        %309 = vmatprep.subr.bf16.mxu0 0
        %310 = vmatpush1.bf16.msra.mxu0 0
        %311 = vmatprep.subr.bf16.mxu0 0
        %312 = vmatpush1.bf16.msra.mxu0 0
        %313 = vmatprep.subr.bf16.mxu0 0
        %314 = vmatpush1.bf16.msra.mxu0 0
        %315 = vmatprep.subr.bf16.mxu0 0
        %316 = vmatpush1.bf16.msra.mxu0 0
        %317 = vmatprep.subr.bf16.mxu0 0
        %318 = vmatpush1.bf16.msra.mxu0 0
        %319 = vmatprep.mubr.bf16.mxu0 0
        %320 = vmatmul.mubr.bf16.gmra.mrb[0].mxu0 %v248
        %v321 = vpop.f32.mrb[0].mxu0
        %v322 = vadd.f32 %v245, %v321
        %v323 = vpop.f32.mrb[0].mxu0
        %v324 = vpop.f32.mrb[0].mxu0
        %v325 = vadd.f32 %v245, %v324
        %v326 = vpop.f32.mrb[0].mxu0
        %327 = vmatprep.mubr.bf16.mxu0 0
        %328 = vmatmul.mubr.bf16.gmra.mrb[0].mxu0 %v251
        %v329 = vpop.f32.mrb[0].mxu0
        %v330 = vadd.f32 %v245, %v329
        %v331 = vpop.f32.mrb[0].mxu0
        %v332 = vpop.f32.mrb[0].mxu0
        %v333 = vadd.f32 %v245, %v332
        %v334 = vpop.f32.mrb[0].mxu0
        %335 = vmatprep.mubr.bf16.mxu0 0
        %336 = vmatmul.mubr.bf16.gmra.mrb[0].mxu0 %v254
        %v337 = vpop.f32.mrb[0].mxu0
        %v338 = vadd.f32 %v245, %v337
        %v339 = vpop.f32.mrb[0].mxu0
        %v340 = vpop.f32.mrb[0].mxu0
        %v341 = vadd.f32 %v245, %v340
        %v342 = vpop.f32.mrb[0].mxu0
        %343 = vmatprep.mubr.bf16.mxu0 0
        %344 = vmatmul.mubr.bf16.gmra.mrb[0].mxu0 %v257
        %v345 = vpop.f32.mrb[0].mxu0
        %v346 = vadd.f32 %v245, %v345
        %v347 = vpop.f32.mrb[0].mxu0
        %v348 = vpop.f32.mrb[0].mxu0
        %v349 = vadd.f32 %v245, %v348
        %v350 = vpop.f32.mrb[0].mxu0
        %351 = vmatprep.mubr.bf16.mxu0 0
        %352 = vmatmul.mubr.bf16.gmra.mrb[0].mxu0 %v260
        %v353 = vpop.f32.mrb[0].mxu0
        %v354 = vadd.f32 %v245, %v353
        %v355 = vpop.f32.mrb[0].mxu0
        %v356 = vpop.f32.mrb[0].mxu0
        %v357 = vadd.f32 %v245, %v356
        %v358 = vpop.f32.mrb[0].mxu0
        %359 = vmatprep.mubr.bf16.mxu0 0
        %360 = vmatmul.mubr.bf16.gmra.mrb[0].mxu0 %v263
        %v361 = vpop.f32.mrb[0].mxu0
        %v362 = vadd.f32 %v245, %v361
        %v363 = vpop.f32.mrb[0].mxu0
        %v364 = vpop.f32.mrb[0].mxu0
        %v365 = vadd.f32 %v245, %v364
        %v366 = vpop.f32.mrb[0].mxu0
        %367 = vmatprep.mubr.bf16.mxu0 0
        %368 = vmatmul.mubr.bf16.gmra.mrb[0].mxu0 %v266
        %v369 = vpop.f32.mrb[0].mxu0
        %v370 = vadd.f32 %v245, %v369
        %v371 = vpop.f32.mrb[0].mxu0
        %v372 = vpop.f32.mrb[0].mxu0
        %v373 = vadd.f32 %v245, %v372
        %v374 = vpop.f32.mrb[0].mxu0
        %375 = vmatprep.mubr.bf16.mxu0 0
        %376 = vmatmul.mubr.bf16.gmra.mrb[0].mxu0 %v269
        %v377 = vpop.f32.mrb[0].mxu0
        %v378 = vadd.f32 %v245, %v377
        %v379 = vpop.f32.mrb[0].mxu0
        %v380 = vpop.f32.mrb[0].mxu0
        %v381 = vadd.f32 %v245, %v380
        %v382 = vpop.f32.mrb[0].mxu0
        %383 = vmatprep.mubr.bf16.mxu0 0
        %384 = vmatmul.mubr.bf16.gmra.mrb[0].mxu0 %v272
        %v385 = vpop.f32.mrb[0].mxu0
        %v386 = vadd.f32 %v245, %v385
        %v387 = vpop.f32.mrb[0].mxu0
        %v388 = vpop.f32.mrb[0].mxu0
        %v389 = vadd.f32 %v245, %v388
        %v390 = vpop.f32.mrb[0].mxu0
        %391 = vmatprep.mubr.bf16.mxu0 0
        %392 = vmatmul.mubr.bf16.gmra.mrb[0].mxu0 %v275
        %v393 = vpop.f32.mrb[0].mxu0
        %v394 = vadd.f32 %v245, %v393
        %v395 = vpop.f32.mrb[0].mxu0
        %v396 = vpop.f32.mrb[0].mxu0
        %v397 = vadd.f32 %v245, %v396
        %v398 = vpop.f32.mrb[0].mxu0
        %399 = vmatprep.mubr.bf16.mxu0 0
        %400 = vmatmul.mubr.bf16.gmra.mrb[0].mxu0 %v278
        %v401 = vpop.f32.mrb[0].mxu0
        %v402 = vadd.f32 %v245, %v401
        %v403 = vpop.f32.mrb[0].mxu0
        %v404 = vpop.f32.mrb[0].mxu0
        %v405 = vadd.f32 %v245, %v404
        %v406 = vpop.f32.mrb[0].mxu0
        %407 = vmatprep.mubr.bf16.mxu0 0
        %408 = vmatmul.mubr.bf16.gmra.mrb[0].mxu0 %v281
        %v409 = vpop.f32.mrb[0].mxu0
        %v410 = vadd.f32 %v245, %v409
        %v411 = vpop.f32.mrb[0].mxu0
        %v412 = vpop.f32.mrb[0].mxu0
        %v413 = vadd.f32 %v245, %v412
        %v414 = vpop.f32.mrb[0].mxu0
        %415 = vdwg.mxu0
        %v416 = vld [vmem:[%s1 + $0x8] sm:$0xf]
        %v417 = vld [vmem:[%s1 + $0xc] sm:$0xf]
        %v418 = vld [vmem:[%s1 + $0x10] sm:$0xf]
        %v419 = vld [vmem:[%s1 + $0x14] sm:$0xf]
        %v420 = vld [vmem:[%s1 + $0x18] sm:$0xf]
        %v421 = vmax.f32 %v322, 0.0
        %v422 = vmax.f32 %v325, 0.0
        %v423 = vmax.f32 %v330, 0.0
        %v424 = vmax.f32 %v333, 0.0
        %v425 = vmax.f32 %v338, 0.0
        %v426 = vmax.f32 %v341, 0.0
        %v427 = vmax.f32 %v346, 0.0
        %v428 = vmax.f32 %v349, 0.0
        %v429 = vmax.f32 %v354, 0.0
        %v430 = vmax.f32 %v357, 0.0
        %v431 = vmax.f32 %v362, 0.0
        %v432 = vmax.f32 %v365, 0.0
        %v433 = vmax.f32 %v370, 0.0
        %v434 = vmax.f32 %v373, 0.0
        %v435 = vmax.f32 %v378, 0.0
        %v436 = vmax.f32 %v381, 0.0
        %v437 = vmax.f32 %v386, 0.0
        %v438 = vmax.f32 %v389, 0.0
        %v439 = vmax.f32 %v394, 0.0
        %v440 = vmax.f32 %v397, 0.0
        %v441 = vmax.f32 %v402, 0.0
        %v442 = vmax.f32 %v405, 0.0
        %v443 = vmax.f32 %v410, 0.0
        %v444 = vmax.f32 %v413, 0.0
        %v445 = vpack.c.bf16 %v422, %v421
        %v446 = vpack.c.bf16 %v424, %v423
        %v447 = vpack.c.bf16 %v426, %v425
        %v448 = vpack.c.bf16 %v428, %v427
        %v449 = vpack.c.bf16 %v430, %v429
        %v450 = vpack.c.bf16 %v432, %v431
        %v451 = vpack.c.bf16 %v434, %v433
        %v452 = vpack.c.bf16 %v436, %v435
        %v453 = vpack.c.bf16 %v438, %v437
        %v454 = vpack.c.bf16 %v440, %v439
        %v455 = vpack.c.bf16 %v442, %v441
        %v456 = vpack.c.bf16 %v444, %v443
        %v457 = vlaneseq
        %v458 = vshrl.u32 %v457, 7
        %v459 = vsub.s32 0, %v458
        %v460 = vrot.slane %v202, %v459
        %v466 = vunpack.c.l.b16 %v416
        %v467 = vunpack.c.l.b16 %v417
        %v468 = vunpack.c.l.b16 %v418
        %v469 = vunpack.c.l.b16 %v419
        %v470 = vunpack.c.l.b16 %v420
        %v471 = vpack.c.b16 %v467, %v466
        %v472 = vpack.c.b16 %v469, %v468
        %v473 = vpack.c.b16 %v470, %v470
        %vm476 = vcmask 326656
        %v478 = vsel %vm476, %v445, 0
        %v481 = vsel %vm476, %v446, 0
        %v484 = vsel %vm476, %v447, 0
        %v487 = vsel %vm476, %v448, 0
        %v490 = vsel %vm476, %v449, 0
        %v493 = vsel %vm476, %v450, 0
        %v496 = vsel %vm476, %v451, 0
        %v499 = vsel %vm476, %v452, 0
        %v502 = vsel %vm476, %v453, 0
        %v505 = vsel %vm476, %v454, 0
        %v508 = vsel %vm476, %v455, 0
        %v511 = vsel %vm476, %v456, 0
        %v514 = vsel %vm283, %v473, 0
        %516 = vmatprep.subr.bf16.mxu0 0
        %517 = vmatpush1.bf16.msra.mxu0 %v471
        %518 = vmatprep.subr.bf16.mxu0 0
        %519 = vmatpush1.bf16.msra.mxu0 %v472
        %520 = vmatprep.subr.bf16.mxu0 0
        %521 = vmatpush1.bf16.msra.mxu0 %v514
        %522 = vmatprep.subr.bf16.mxu0 0
        %523 = vmatpush1.bf16.msra.mxu0 0
        %524 = vmatprep.subr.bf16.mxu0 0
        %525 = vmatpush1.bf16.msra.mxu0 0
        %526 = vmatprep.subr.bf16.mxu0 0
        %527 = vmatpush1.bf16.msra.mxu0 0
        %528 = vmatprep.subr.bf16.mxu0 0
        %529 = vmatpush1.bf16.msra.mxu0 0
        %530 = vmatprep.subr.bf16.mxu0 0
        %531 = vmatpush1.bf16.msra.mxu0 0
        %532 = vmatprep.subr.bf16.mxu0 0
        %533 = vmatpush1.bf16.msra.mxu0 0
        %534 = vmatprep.subr.bf16.mxu0 0
        %535 = vmatpush1.bf16.msra.mxu0 0
        %536 = vmatprep.subr.bf16.mxu0 0
        %537 = vmatpush1.bf16.msra.mxu0 0
        %538 = vmatprep.subr.bf16.mxu0 0
        %539 = vmatpush1.bf16.msra.mxu0 0
        %540 = vmatprep.subr.bf16.mxu0 0
        %541 = vmatpush1.bf16.msra.mxu0 0
        %542 = vmatprep.subr.bf16.mxu0 0
        %543 = vmatpush1.bf16.msra.mxu0 0
        %544 = vmatprep.subr.bf16.mxu0 0
        %545 = vmatpush1.bf16.msra.mxu0 0
        %546 = vmatprep.subr.bf16.mxu0 0
        %547 = vmatpush1.bf16.msra.mxu0 0
        %548 = vmatprep.mubr.bf16.mxu0 0
        %549 = vmatmul.mubr.bf16.gmra.mrb[0].mxu0 %v478
        %v550 = vpop.f32.mrb[0].mxu0
        %v551 = vadd.f32 %v460, %v550
        %v552 = vpop.f32.mrb[0].mxu0
        %v553 = vpop.f32.mrb[0].mxu0
        %v554 = vadd.f32 %v460, %v553
        %v555 = vpop.f32.mrb[0].mxu0
        %556 = vmatprep.mubr.bf16.mxu0 0
        %557 = vmatmul.mubr.bf16.gmra.mrb[0].mxu0 %v481
        %v558 = vpop.f32.mrb[0].mxu0
        %v559 = vadd.f32 %v460, %v558
        %v560 = vpop.f32.mrb[0].mxu0
        %v561 = vpop.f32.mrb[0].mxu0
        %v562 = vadd.f32 %v460, %v561
        %v563 = vpop.f32.mrb[0].mxu0
        %564 = vmatprep.mubr.bf16.mxu0 0
        %565 = vmatmul.mubr.bf16.gmra.mrb[0].mxu0 %v484
        %v566 = vpop.f32.mrb[0].mxu0
        %v567 = vadd.f32 %v460, %v566
        %v568 = vpop.f32.mrb[0].mxu0
        %v569 = vpop.f32.mrb[0].mxu0
        %v570 = vadd.f32 %v460, %v569
        %v571 = vpop.f32.mrb[0].mxu0
        %572 = vmatprep.mubr.bf16.mxu0 0
        %573 = vmatmul.mubr.bf16.gmra.mrb[0].mxu0 %v487
        %v574 = vpop.f32.mrb[0].mxu0
        %v575 = vadd.f32 %v460, %v574
        %v576 = vpop.f32.mrb[0].mxu0
        %v577 = vpop.f32.mrb[0].mxu0
        %v578 = vadd.f32 %v460, %v577
        %v579 = vpop.f32.mrb[0].mxu0
        %580 = vmatprep.mubr.bf16.mxu0 0
        %581 = vmatmul.mubr.bf16.gmra.mrb[0].mxu0 %v490
        %v582 = vpop.f32.mrb[0].mxu0
        %v583 = vadd.f32 %v460, %v582
        %v584 = vpop.f32.mrb[0].mxu0
        %v585 = vpop.f32.mrb[0].mxu0
        %v586 = vadd.f32 %v460, %v585
        %v587 = vpop.f32.mrb[0].mxu0
        %588 = vmatprep.mubr.bf16.mxu0 0
        %589 = vmatmul.mubr.bf16.gmra.mrb[0].mxu0 %v493
        %v590 = vpop.f32.mrb[0].mxu0
        %v591 = vadd.f32 %v460, %v590
        %v592 = vpop.f32.mrb[0].mxu0
        %v593 = vpop.f32.mrb[0].mxu0
        %v594 = vadd.f32 %v460, %v593
        %v595 = vpop.f32.mrb[0].mxu0
        %596 = vmatprep.mubr.bf16.mxu0 0
        %597 = vmatmul.mubr.bf16.gmra.mrb[0].mxu0 %v496
        %v598 = vpop.f32.mrb[0].mxu0
        %v599 = vadd.f32 %v460, %v598
        %v600 = vpop.f32.mrb[0].mxu0
        %v601 = vpop.f32.mrb[0].mxu0
        %v602 = vadd.f32 %v460, %v601
        %v603 = vpop.f32.mrb[0].mxu0
        %604 = vmatprep.mubr.bf16.mxu0 0
        %605 = vmatmul.mubr.bf16.gmra.mrb[0].mxu0 %v499
        %v606 = vpop.f32.mrb[0].mxu0
        %v607 = vadd.f32 %v460, %v606
        %v608 = vpop.f32.mrb[0].mxu0
        %v609 = vpop.f32.mrb[0].mxu0
        %v610 = vadd.f32 %v460, %v609
        %v611 = vpop.f32.mrb[0].mxu0
        %612 = vmatprep.mubr.bf16.mxu0 0
        %613 = vmatmul.mubr.bf16.gmra.mrb[0].mxu0 %v502
        %v614 = vpop.f32.mrb[0].mxu0
        %v615 = vadd.f32 %v460, %v614
        %v616 = vpop.f32.mrb[0].mxu0
        %v617 = vpop.f32.mrb[0].mxu0
        %v618 = vadd.f32 %v460, %v617
        %v619 = vpop.f32.mrb[0].mxu0
        %620 = vmatprep.mubr.bf16.mxu0 0
        %621 = vmatmul.mubr.bf16.gmra.mrb[0].mxu0 %v505
        %v622 = vpop.f32.mrb[0].mxu0
        %v623 = vadd.f32 %v460, %v622
        %v624 = vpop.f32.mrb[0].mxu0
        %v625 = vpop.f32.mrb[0].mxu0
        %v626 = vadd.f32 %v460, %v625
        %v627 = vpop.f32.mrb[0].mxu0
        %628 = vmatprep.mubr.bf16.mxu0 0
        %629 = vmatmul.mubr.bf16.gmra.mrb[0].mxu0 %v508
        %v630 = vpop.f32.mrb[0].mxu0
        %v631 = vadd.f32 %v460, %v630
        %v632 = vpop.f32.mrb[0].mxu0
        %v633 = vpop.f32.mrb[0].mxu0
        %v634 = vadd.f32 %v460, %v633
        %v635 = vpop.f32.mrb[0].mxu0
        %636 = vmatprep.mubr.bf16.mxu0 0
        %637 = vmatmul.mubr.bf16.gmra.mrb[0].mxu0 %v511
        %v638 = vpop.f32.mrb[0].mxu0
        %v639 = vadd.f32 %v460, %v638
        %v640 = vpop.f32.mrb[0].mxu0
        %v641 = vpop.f32.mrb[0].mxu0
        %v642 = vadd.f32 %v460, %v641
        %v643 = vpop.f32.mrb[0].mxu0
        %644 = vdwg.mxu0
        %v645 = vmul.f32 %v322, %v551
        %v646 = vmul.f32 %v325, %v554
        %v647 = vmul.f32 %v330, %v559
        %v648 = vmul.f32 %v333, %v562
        %v649 = vmul.f32 %v338, %v567
        %v650 = vmul.f32 %v341, %v570
        %v651 = vmul.f32 %v346, %v575
        %v652 = vmul.f32 %v349, %v578
        %v653 = vmul.f32 %v354, %v583
        %v654 = vmul.f32 %v357, %v586
        %v655 = vmul.f32 %v362, %v591
        %v656 = vmul.f32 %v365, %v594
        %v657 = vmul.f32 %v370, %v599
        %v658 = vmul.f32 %v373, %v602
        %v659 = vmul.f32 %v378, %v607
        %v660 = vmul.f32 %v381, %v610
        %v661 = vmul.f32 %v386, %v615
        %v662 = vmul.f32 %v389, %v618
        %v663 = vmul.f32 %v394, %v623
        %v664 = vmul.f32 %v397, %v626
        %v665 = vmul.f32 %v402, %v631
        %v666 = vmul.f32 %v405, %v634
        %v667 = vmul.f32 %v410, %v639
        %v668 = vmul.f32 %v413, %v642
        %vm669 = vcmask 261120
        %670 = vst.msk [vmem:[#allocation2] sm:$0xff] %vm669, 0
        %671 = vst.msk [vmem:[#allocation2 + $0x8] sm:$0xff] %vm669, 0
        %672 = vst.msk [vmem:[#allocation2 + $0x70] sm:$0xff] %vm669, 0
        %673 = vst.msk [vmem:[#allocation2 + $0x78] sm:$0xff] %vm669, 0
        %v674 = vpack.c.bf16 %v646, %v645
        %v675 = vpack.c.bf16 %v648, %v647
        %v676 = vpack.c.bf16 %v650, %v649
        %v677 = vpack.c.bf16 %v652, %v651
        %v678 = vpack.c.bf16 %v654, %v653
        %v679 = vpack.c.bf16 %v656, %v655
        %v680 = vpack.c.bf16 %v658, %v657
        %v681 = vpack.c.bf16 %v660, %v659
        %v682 = vpack.c.bf16 %v662, %v661
        %v683 = vpack.c.bf16 %v664, %v663
        %v684 = vpack.c.bf16 %v666, %v665
        %v685 = vpack.c.bf16 %v668, %v667
        %686 = vst.msk [vmem:[#allocation2 + $0x10] sm:$0xff] %vm669, %v674
        %687 = vst.msk [vmem:[#allocation2 + $0x18] sm:$0xff] %vm669, %v675
        %688 = vst.msk [vmem:[#allocation2 + $0x20] sm:$0xff] %vm669, %v676
        %689 = vst.msk [vmem:[#allocation2 + $0x28] sm:$0xff] %vm669, %v677
        %690 = vst.msk [vmem:[#allocation2 + $0x30] sm:$0xff] %vm669, %v678
        %691 = vst.msk [vmem:[#allocation2 + $0x38] sm:$0xff] %vm669, %v679
        %692 = vst.msk [vmem:[#allocation2 + $0x40] sm:$0xff] %vm669, %v680
        %693 = vst.msk [vmem:[#allocation2 + $0x48] sm:$0xff] %vm669, %v681
        %694 = vst.msk [vmem:[#allocation2 + $0x50] sm:$0xff] %vm669, %v682
        %695 = vst.msk [vmem:[#allocation2 + $0x58] sm:$0xff] %vm669, %v683
        %696 = vst.msk [vmem:[#allocation2 + $0x60] sm:$0xff] %vm669, %v684
        %697 = vst.msk [vmem:[#allocation2 + $0x68] sm:$0xff] %vm669, %v685
        %v698 = vld [vmem:[#allocation2] sm:$0xff]
        %v699 = vld [vmem:[#allocation2 + $0x8] sm:$0xff]
        %v700 = vld [vmem:[#allocation2 + $0x10] sm:$0xff]
        %v701 = vld [vmem:[#allocation2 + $0x18] sm:$0xff]
        %v702 = vld [vmem:[#allocation2 + $0x20] sm:$0xff]
        %v703 = vld [vmem:[#allocation2 + $0x28] sm:$0xff]
        %v704 = vld [vmem:[#allocation2 + $0x30] sm:$0xff]
        %v705 = vld [vmem:[#allocation2 + $0x38] sm:$0xff]
        %v706 = vld [vmem:[#allocation2 + $0x40] sm:$0xff]
        %v707 = vld [vmem:[#allocation2 + $0x48] sm:$0xff]
        %v708 = vld [vmem:[#allocation2 + $0x50] sm:$0xff]
        %v709 = vld [vmem:[#allocation2 + $0x58] sm:$0xff]
        %v710 = vld [vmem:[%s1 + $0x20] sm:$0xf]
        %v711 = vld [vmem:[%s1 + $0x24] sm:$0xf]
        %v712 = vld [vmem:[%s1 + $0x28] sm:$0xf]
        %v713 = vld [vmem:[%s1 + $0x2c] sm:$0xf]
        %v714 = vld [vmem:[#allocation2 + $0x60] sm:$0xff]
        %v715 = vld [vmem:[%s1 + $0x30] sm:$0xf]
        %v716 = vld [vmem:[%s1 + $0x34] sm:$0xf]
        %v717 = vld [vmem:[%s1 + $0x38] sm:$0xf]
        %v718 = vld [vmem:[%s1 + $0x3c] sm:$0xf]
        %v723 = vunpack.c.l.b16 %v715
        %v724 = vunpack.c.l.b16 %v716
        %v725 = vunpack.c.l.b16 %v717
        %v726 = vunpack.c.l.b16 %v718
        %v727 = vpack.c.b16 %v724, %v723
        %v728 = vpack.c.b16 %v726, %v725
        %v732 = vsel %vm669, %v699, 0
        %v735 = vsel %vm669, %v700, 0
        %v738 = vsel %vm669, %v701, 0
        %v741 = vsel %vm669, %v702, 0
        %v744 = vsel %vm669, %v703, 0
        %v747 = vsel %vm669, %v704, 0
        %v750 = vsel %vm669, %v705, 0
        %v753 = vsel %vm669, %v706, 0
        %v756 = vsel %vm669, %v707, 0
        %v759 = vsel %vm669, %v708, 0
        %v762 = vsel %vm669, %v709, 0
        %v765 = vsel %vm669, %v714, 0
        %767 = vmatprep.subr.bf16.mxu0 0
        %768 = vmatpush1.bf16.msra.mxu0 %v727
        %769 = vmatprep.subr.bf16.mxu0 0
        %770 = vmatpush1.bf16.msra.mxu0 %v728
        %771 = vmatprep.subr.bf16.mxu0 0
        %772 = vmatpush1.bf16.msra.mxu0 0
        %773 = vmatprep.subr.bf16.mxu0 0
        %774 = vmatpush1.bf16.msra.mxu0 0
        %775 = vmatprep.subr.bf16.mxu0 0
        %776 = vmatpush1.bf16.msra.mxu0 0
        %777 = vmatprep.subr.bf16.mxu0 0
        %778 = vmatpush1.bf16.msra.mxu0 0
        %779 = vmatprep.subr.bf16.mxu0 0
        %780 = vmatpush1.bf16.msra.mxu0 0
        %781 = vmatprep.subr.bf16.mxu0 0
        %782 = vmatpush1.bf16.msra.mxu0 0
        %783 = vmatprep.subr.bf16.mxu0 0
        %784 = vmatpush1.bf16.msra.mxu0 0
        %785 = vmatprep.subr.bf16.mxu0 0
        %786 = vmatpush1.bf16.msra.mxu0 0
        %787 = vmatprep.subr.bf16.mxu0 0
        %788 = vmatpush1.bf16.msra.mxu0 0
        %789 = vmatprep.subr.bf16.mxu0 0
        %790 = vmatpush1.bf16.msra.mxu0 0
        %791 = vmatprep.subr.bf16.mxu0 0
        %792 = vmatpush1.bf16.msra.mxu0 0
        %793 = vmatprep.subr.bf16.mxu0 0
        %794 = vmatpush1.bf16.msra.mxu0 0
        %795 = vmatprep.subr.bf16.mxu0 0
        %796 = vmatpush1.bf16.msra.mxu0 0
        %797 = vmatprep.subr.bf16.mxu0 0
        %798 = vmatpush1.bf16.msra.mxu0 0
        %799 = vmatprep.mubr.bf16.mxu0 0
        %800 = vmatmul.mubr.bf16.gmra.mrb[0].mxu0 %v732
        %v801 = vpop.f32.mrb[0].mxu0
        %v802 = vadd.f32 0.0, %v801
        %v803 = vpop.f32.mrb[0].mxu0
        %v804 = vpop.f32.mrb[0].mxu0
        %v805 = vadd.f32 0.0, %v804
        %v806 = vpop.f32.mrb[0].mxu0
        %807 = vmatprep.mubr.bf16.mxu0 0
        %808 = vmatmul.mubr.bf16.gmra.mrb[0].mxu0 %v735
        %v809 = vpop.f32.mrb[0].mxu0
        %v810 = vadd.f32 0.0, %v809
        %v811 = vpop.f32.mrb[0].mxu0
        %v812 = vpop.f32.mrb[0].mxu0
        %v813 = vadd.f32 0.0, %v812
        %v814 = vpop.f32.mrb[0].mxu0
        %815 = vmatprep.mubr.bf16.mxu0 0
        %816 = vmatmul.mubr.bf16.gmra.mrb[0].mxu0 %v738
        %v817 = vpop.f32.mrb[0].mxu0
        %v818 = vadd.f32 0.0, %v817
        %v819 = vpop.f32.mrb[0].mxu0
        %v820 = vpop.f32.mrb[0].mxu0
        %v821 = vadd.f32 0.0, %v820
        %v822 = vpop.f32.mrb[0].mxu0
        %823 = vmatprep.mubr.bf16.mxu0 0
        %824 = vmatmul.mubr.bf16.gmra.mrb[0].mxu0 %v741
        %v825 = vpop.f32.mrb[0].mxu0
        %v826 = vadd.f32 0.0, %v825
        %v827 = vpop.f32.mrb[0].mxu0
        %v828 = vpop.f32.mrb[0].mxu0
        %v829 = vadd.f32 0.0, %v828
        %v830 = vpop.f32.mrb[0].mxu0
        %831 = vmatprep.mubr.bf16.mxu0 0
        %832 = vmatmul.mubr.bf16.gmra.mrb[0].mxu0 %v744
        %v833 = vpop.f32.mrb[0].mxu0
        %v834 = vadd.f32 0.0, %v833
        %v835 = vpop.f32.mrb[0].mxu0
        %v836 = vpop.f32.mrb[0].mxu0
        %v837 = vadd.f32 0.0, %v836
        %v838 = vpop.f32.mrb[0].mxu0
        %839 = vmatprep.mubr.bf16.mxu0 0
        %840 = vmatmul.mubr.bf16.gmra.mrb[0].mxu0 %v747
        %v841 = vpop.f32.mrb[0].mxu0
        %v842 = vadd.f32 0.0, %v841
        %v843 = vpop.f32.mrb[0].mxu0
        %v844 = vpop.f32.mrb[0].mxu0
        %v845 = vadd.f32 0.0, %v844
        %v846 = vpop.f32.mrb[0].mxu0
        %847 = vmatprep.mubr.bf16.mxu0 0
        %848 = vmatmul.mubr.bf16.gmra.mrb[0].mxu0 %v750
        %v849 = vpop.f32.mrb[0].mxu0
        %v850 = vadd.f32 0.0, %v849
        %v851 = vpop.f32.mrb[0].mxu0
        %v852 = vpop.f32.mrb[0].mxu0
        %v853 = vadd.f32 0.0, %v852
        %v854 = vpop.f32.mrb[0].mxu0
        %855 = vmatprep.mubr.bf16.mxu0 0
        %856 = vmatmul.mubr.bf16.gmra.mrb[0].mxu0 %v753
        %v857 = vpop.f32.mrb[0].mxu0
        %v858 = vadd.f32 0.0, %v857
        %v859 = vpop.f32.mrb[0].mxu0
        %v860 = vpop.f32.mrb[0].mxu0
        %v861 = vadd.f32 0.0, %v860
        %v862 = vpop.f32.mrb[0].mxu0
        %863 = vmatprep.mubr.bf16.mxu0 0
        %864 = vmatmul.mubr.bf16.gmra.mrb[0].mxu0 %v756
        %v865 = vpop.f32.mrb[0].mxu0
        %v866 = vadd.f32 0.0, %v865
        %v867 = vpop.f32.mrb[0].mxu0
        %v868 = vpop.f32.mrb[0].mxu0
        %v869 = vadd.f32 0.0, %v868
        %v870 = vpop.f32.mrb[0].mxu0
        %871 = vmatprep.mubr.bf16.mxu0 0
        %872 = vmatmul.mubr.bf16.gmra.mrb[0].mxu0 %v759
        %v873 = vpop.f32.mrb[0].mxu0
        %v874 = vadd.f32 0.0, %v873
        %v875 = vpop.f32.mrb[0].mxu0
        %v876 = vpop.f32.mrb[0].mxu0
        %v877 = vadd.f32 0.0, %v876
        %v878 = vpop.f32.mrb[0].mxu0
        %879 = vmatprep.mubr.bf16.mxu0 0
        %880 = vmatmul.mubr.bf16.gmra.mrb[0].mxu0 %v762
        %v881 = vpop.f32.mrb[0].mxu0
        %v882 = vadd.f32 0.0, %v881
        %v883 = vpop.f32.mrb[0].mxu0
        %v884 = vpop.f32.mrb[0].mxu0
        %v885 = vadd.f32 0.0, %v884
        %v886 = vpop.f32.mrb[0].mxu0
        %887 = vmatprep.mubr.bf16.mxu0 0
        %888 = vmatmul.mubr.bf16.gmra.mrb[0].mxu0 %v765
        %v889 = vpop.f32.mrb[0].mxu0
        %v890 = vadd.f32 0.0, %v889
        %v891 = vpop.f32.mrb[0].mxu0
        %v892 = vpop.f32.mrb[0].mxu0
        %v893 = vadd.f32 0.0, %v892
        %v894 = vpop.f32.mrb[0].mxu0
        %895 = vdwg.mxu0
        %v900 = vunpack.c.l.b16 %v710
        %v901 = vunpack.c.l.b16 %v711
        %v902 = vunpack.c.l.b16 %v712
        %v903 = vunpack.c.l.b16 %v713
        %v904 = vpack.c.b16 %v901, %v900
        %v905 = vpack.c.b16 %v903, %v902
        %v909 = vsel %vm669, %v698, 0
        %911 = vmatprep.subr.bf16.mxu0 0
        %912 = vmatpush1.bf16.msra.mxu0 %v904
        %913 = vmatprep.subr.bf16.mxu0 0
        %914 = vmatpush1.bf16.msra.mxu0 %v905
        %915 = vmatprep.subr.bf16.mxu0 0
        %916 = vmatpush1.bf16.msra.mxu0 0
        %917 = vmatprep.subr.bf16.mxu0 0
        %918 = vmatpush1.bf16.msra.mxu0 0
        %919 = vmatprep.subr.bf16.mxu0 0
        %920 = vmatpush1.bf16.msra.mxu0 0
        %921 = vmatprep.subr.bf16.mxu0 0
        %922 = vmatpush1.bf16.msra.mxu0 0
        %923 = vmatprep.subr.bf16.mxu0 0
        %924 = vmatpush1.bf16.msra.mxu0 0
        %925 = vmatprep.subr.bf16.mxu0 0
        %926 = vmatpush1.bf16.msra.mxu0 0
        %927 = vmatprep.subr.bf16.mxu0 0
        %928 = vmatpush1.bf16.msra.mxu0 0
        %929 = vmatprep.subr.bf16.mxu0 0
        %930 = vmatpush1.bf16.msra.mxu0 0
        %931 = vmatprep.subr.bf16.mxu0 0
        %932 = vmatpush1.bf16.msra.mxu0 0
        %933 = vmatprep.subr.bf16.mxu0 0
        %934 = vmatpush1.bf16.msra.mxu0 0
        %935 = vmatprep.subr.bf16.mxu0 0
        %936 = vmatpush1.bf16.msra.mxu0 0
        %937 = vmatprep.subr.bf16.mxu0 0
        %938 = vmatpush1.bf16.msra.mxu0 0
        %939 = vmatprep.subr.bf16.mxu0 0
        %940 = vmatpush1.bf16.msra.mxu0 0
        %941 = vmatprep.subr.bf16.mxu0 0
        %942 = vmatpush1.bf16.msra.mxu0 0
        %943 = vmatprep.mubr.bf16.mxu0 0
        %944 = vmatmul.mubr.bf16.gmra.mrb[0].mxu0 %v909
        %v945 = vpop.f32.mrb[0].mxu0
        %v946 = vadd.f32 %v802, %v945
        %v947 = vpop.f32.mrb[0].mxu0
        %v948 = vpop.f32.mrb[0].mxu0
        %v949 = vadd.f32 %v805, %v948
        %v950 = vpop.f32.mrb[0].mxu0
        %951 = vmatprep.mubr.bf16.mxu0 0
        %952 = vmatmul.mubr.bf16.gmra.mrb[0].mxu0 %v732
        %v953 = vpop.f32.mrb[0].mxu0
        %v954 = vadd.f32 %v810, %v953
        %v955 = vpop.f32.mrb[0].mxu0
        %v956 = vpop.f32.mrb[0].mxu0
        %v957 = vadd.f32 %v813, %v956
        %v958 = vpop.f32.mrb[0].mxu0
        %959 = vmatprep.mubr.bf16.mxu0 0
        %960 = vmatmul.mubr.bf16.gmra.mrb[0].mxu0 %v735
        %v961 = vpop.f32.mrb[0].mxu0
        %v962 = vadd.f32 %v818, %v961
        %v963 = vpop.f32.mrb[0].mxu0
        %v964 = vpop.f32.mrb[0].mxu0
        %v965 = vadd.f32 %v821, %v964
        %v966 = vpop.f32.mrb[0].mxu0
        %967 = vmatprep.mubr.bf16.mxu0 0
        %968 = vmatmul.mubr.bf16.gmra.mrb[0].mxu0 %v738
        %v969 = vpop.f32.mrb[0].mxu0
        %v970 = vadd.f32 %v826, %v969
        %v971 = vpop.f32.mrb[0].mxu0
        %v972 = vpop.f32.mrb[0].mxu0
        %v973 = vadd.f32 %v829, %v972
        %v974 = vpop.f32.mrb[0].mxu0
        %975 = vmatprep.mubr.bf16.mxu0 0
        %976 = vmatmul.mubr.bf16.gmra.mrb[0].mxu0 %v741
        %v977 = vpop.f32.mrb[0].mxu0
        %v978 = vadd.f32 %v834, %v977
        %v979 = vpop.f32.mrb[0].mxu0
        %v980 = vpop.f32.mrb[0].mxu0
        %v981 = vadd.f32 %v837, %v980
        %v982 = vpop.f32.mrb[0].mxu0
        %983 = vmatprep.mubr.bf16.mxu0 0
        %984 = vmatmul.mubr.bf16.gmra.mrb[0].mxu0 %v744
        %v985 = vpop.f32.mrb[0].mxu0
        %v986 = vadd.f32 %v842, %v985
        %v987 = vpop.f32.mrb[0].mxu0
        %v988 = vpop.f32.mrb[0].mxu0
        %v989 = vadd.f32 %v845, %v988
        %v990 = vpop.f32.mrb[0].mxu0
        %991 = vmatprep.mubr.bf16.mxu0 0
        %992 = vmatmul.mubr.bf16.gmra.mrb[0].mxu0 %v747
        %v993 = vpop.f32.mrb[0].mxu0
        %v994 = vadd.f32 %v850, %v993
        %v995 = vpop.f32.mrb[0].mxu0
        %v996 = vpop.f32.mrb[0].mxu0
        %v997 = vadd.f32 %v853, %v996
        %v998 = vpop.f32.mrb[0].mxu0
        %999 = vmatprep.mubr.bf16.mxu0 0
        %1000 = vmatmul.mubr.bf16.gmra.mrb[0].mxu0 %v750
        %v1001 = vpop.f32.mrb[0].mxu0
        %v1002 = vadd.f32 %v858, %v1001
        %v1003 = vpop.f32.mrb[0].mxu0
        %v1004 = vpop.f32.mrb[0].mxu0
        %v1005 = vadd.f32 %v861, %v1004
        %v1006 = vpop.f32.mrb[0].mxu0
        %1007 = vmatprep.mubr.bf16.mxu0 0
        %1008 = vmatmul.mubr.bf16.gmra.mrb[0].mxu0 %v753
        %v1009 = vpop.f32.mrb[0].mxu0
        %v1010 = vadd.f32 %v866, %v1009
        %v1011 = vpop.f32.mrb[0].mxu0
        %v1012 = vpop.f32.mrb[0].mxu0
        %v1013 = vadd.f32 %v869, %v1012
        %v1014 = vpop.f32.mrb[0].mxu0
        %1015 = vmatprep.mubr.bf16.mxu0 0
        %1016 = vmatmul.mubr.bf16.gmra.mrb[0].mxu0 %v756
        %v1017 = vpop.f32.mrb[0].mxu0
        %v1018 = vadd.f32 %v874, %v1017
        %v1019 = vpop.f32.mrb[0].mxu0
        %v1020 = vpop.f32.mrb[0].mxu0
        %v1021 = vadd.f32 %v877, %v1020
        %v1022 = vpop.f32.mrb[0].mxu0
        %1023 = vmatprep.mubr.bf16.mxu0 0
        %1024 = vmatmul.mubr.bf16.gmra.mrb[0].mxu0 %v759
        %v1025 = vpop.f32.mrb[0].mxu0
        %v1026 = vadd.f32 %v882, %v1025
        %v1027 = vpop.f32.mrb[0].mxu0
        %v1028 = vpop.f32.mrb[0].mxu0
        %v1029 = vadd.f32 %v885, %v1028
        %v1030 = vpop.f32.mrb[0].mxu0
        %1031 = vmatprep.mubr.bf16.mxu0 0
        %1032 = vmatmul.mubr.bf16.gmra.mrb[0].mxu0 %v762
        %v1033 = vpop.f32.mrb[0].mxu0
        %v1034 = vadd.f32 %v890, %v1033
        %v1035 = vpop.f32.mrb[0].mxu0
        %v1036 = vpop.f32.mrb[0].mxu0
        %v1037 = vadd.f32 %v893, %v1036
        %v1038 = vpop.f32.mrb[0].mxu0
        %1039 = vdwg.mxu0
        %v1040 = vld [vmem:[#allocation2 + $0x10] sm:$0xff]
        %v1041 = vld [vmem:[#allocation2 + $0x18] sm:$0xff]
        %v1042 = vld [vmem:[#allocation2 + $0x20] sm:$0xff]
        %v1043 = vld [vmem:[#allocation2 + $0x28] sm:$0xff]
        %v1044 = vld [vmem:[#allocation2 + $0x30] sm:$0xff]
        %v1045 = vld [vmem:[#allocation2 + $0x38] sm:$0xff]
        %v1046 = vld [vmem:[#allocation2 + $0x40] sm:$0xff]
        %v1047 = vld [vmem:[#allocation2 + $0x48] sm:$0xff]
        %v1048 = vld [vmem:[#allocation2 + $0x50] sm:$0xff]
        %v1049 = vld [vmem:[#allocation2 + $0x58] sm:$0xff]
        %v1050 = vld [vmem:[#allocation2 + $0x60] sm:$0xff]
        %v1051 = vld [vmem:[#allocation2 + $0x68] sm:$0xff]
        %v1052 = vld [vmem:[%s1 + $0x40] sm:$0xf]
        %v1053 = vld [vmem:[%s1 + $0x44] sm:$0xf]
        %v1054 = vld [vmem:[%s1 + $0x48] sm:$0xf]
        %v1055 = vld [vmem:[%s1 + $0x4c] sm:$0xf]
        %v1060 = vunpack.c.l.b16 %v1052
        %v1061 = vunpack.c.l.b16 %v1053
        %v1062 = vunpack.c.l.b16 %v1054
        %v1063 = vunpack.c.l.b16 %v1055
        %v1064 = vpack.c.b16 %v1061, %v1060
        %v1065 = vpack.c.b16 %v1063, %v1062
        %v1069 = vsel %vm669, %v1040, 0
        %v1072 = vsel %vm669, %v1041, 0
        %v1075 = vsel %vm669, %v1042, 0
        %v1078 = vsel %vm669, %v1043, 0
        %v1081 = vsel %vm669, %v1044, 0
        %v1084 = vsel %vm669, %v1045, 0
        %v1087 = vsel %vm669, %v1046, 0
        %v1090 = vsel %vm669, %v1047, 0
        %v1093 = vsel %vm669, %v1048, 0
        %v1096 = vsel %vm669, %v1049, 0
        %v1099 = vsel %vm669, %v1050, 0
        %v1102 = vsel %vm669, %v1051, 0
        %1104 = vmatprep.subr.bf16.mxu0 0
        %1105 = vmatpush1.bf16.msra.mxu0 %v1064
        %1106 = vmatprep.subr.bf16.mxu0 0
        %1107 = vmatpush1.bf16.msra.mxu0 %v1065
        %1108 = vmatprep.subr.bf16.mxu0 0
        %1109 = vmatpush1.bf16.msra.mxu0 0
        %1110 = vmatprep.subr.bf16.mxu0 0
        %1111 = vmatpush1.bf16.msra.mxu0 0
        %1112 = vmatprep.subr.bf16.mxu0 0
        %1113 = vmatpush1.bf16.msra.mxu0 0
        %1114 = vmatprep.subr.bf16.mxu0 0
        %1115 = vmatpush1.bf16.msra.mxu0 0
        %1116 = vmatprep.subr.bf16.mxu0 0
        %1117 = vmatpush1.bf16.msra.mxu0 0
        %1118 = vmatprep.subr.bf16.mxu0 0
        %1119 = vmatpush1.bf16.msra.mxu0 0
        %1120 = vmatprep.subr.bf16.mxu0 0
        %1121 = vmatpush1.bf16.msra.mxu0 0
        %1122 = vmatprep.subr.bf16.mxu0 0
        %1123 = vmatpush1.bf16.msra.mxu0 0
        %1124 = vmatprep.subr.bf16.mxu0 0
        %1125 = vmatpush1.bf16.msra.mxu0 0
        %1126 = vmatprep.subr.bf16.mxu0 0
        %1127 = vmatpush1.bf16.msra.mxu0 0
        %1128 = vmatprep.subr.bf16.mxu0 0
        %1129 = vmatpush1.bf16.msra.mxu0 0
        %1130 = vmatprep.subr.bf16.mxu0 0
        %1131 = vmatpush1.bf16.msra.mxu0 0
        %1132 = vmatprep.subr.bf16.mxu0 0
        %1133 = vmatpush1.bf16.msra.mxu0 0
        %1134 = vmatprep.subr.bf16.mxu0 0
        %1135 = vmatpush1.bf16.msra.mxu0 0
        %1136 = vmatprep.mubr.bf16.mxu0 0
        %1137 = vmatmul.mubr.bf16.gmra.mrb[0].mxu0 %v1069
        %v1138 = vpop.f32.mrb[0].mxu0
        %v1139 = vadd.f32 0.0, %v1138
        %v1140 = vpop.f32.mrb[0].mxu0
        %v1141 = vpop.f32.mrb[0].mxu0
        %v1142 = vadd.f32 0.0, %v1141
        %v1143 = vpop.f32.mrb[0].mxu0
        %1144 = vmatprep.mubr.bf16.mxu0 0
        %1145 = vmatmul.mubr.bf16.gmra.mrb[0].mxu0 %v1072
        %v1146 = vpop.f32.mrb[0].mxu0
        %v1147 = vadd.f32 0.0, %v1146
        %v1148 = vpop.f32.mrb[0].mxu0
        %v1149 = vpop.f32.mrb[0].mxu0
        %v1150 = vadd.f32 0.0, %v1149
        %v1151 = vpop.f32.mrb[0].mxu0
        %1152 = vmatprep.mubr.bf16.mxu0 0
        %1153 = vmatmul.mubr.bf16.gmra.mrb[0].mxu0 %v1075
        %v1154 = vpop.f32.mrb[0].mxu0
        %v1155 = vadd.f32 0.0, %v1154
        %v1156 = vpop.f32.mrb[0].mxu0
        %v1157 = vpop.f32.mrb[0].mxu0
        %v1158 = vadd.f32 0.0, %v1157
        %v1159 = vpop.f32.mrb[0].mxu0
        %1160 = vmatprep.mubr.bf16.mxu0 0
        %1161 = vmatmul.mubr.bf16.gmra.mrb[0].mxu0 %v1078
        %v1162 = vpop.f32.mrb[0].mxu0
        %v1163 = vadd.f32 0.0, %v1162
        %v1164 = vpop.f32.mrb[0].mxu0
        %v1165 = vpop.f32.mrb[0].mxu0
        %v1166 = vadd.f32 0.0, %v1165
        %v1167 = vpop.f32.mrb[0].mxu0
        %1168 = vmatprep.mubr.bf16.mxu0 0
        %1169 = vmatmul.mubr.bf16.gmra.mrb[0].mxu0 %v1081
        %v1170 = vpop.f32.mrb[0].mxu0
        %v1171 = vadd.f32 0.0, %v1170
        %v1172 = vpop.f32.mrb[0].mxu0
        %v1173 = vpop.f32.mrb[0].mxu0
        %v1174 = vadd.f32 0.0, %v1173
        %v1175 = vpop.f32.mrb[0].mxu0
        %1176 = vmatprep.mubr.bf16.mxu0 0
        %1177 = vmatmul.mubr.bf16.gmra.mrb[0].mxu0 %v1084
        %v1178 = vpop.f32.mrb[0].mxu0
        %v1179 = vadd.f32 0.0, %v1178
        %v1180 = vpop.f32.mrb[0].mxu0
        %v1181 = vpop.f32.mrb[0].mxu0
        %v1182 = vadd.f32 0.0, %v1181
        %v1183 = vpop.f32.mrb[0].mxu0
        %1184 = vmatprep.mubr.bf16.mxu0 0
        %1185 = vmatmul.mubr.bf16.gmra.mrb[0].mxu0 %v1087
        %v1186 = vpop.f32.mrb[0].mxu0
        %v1187 = vadd.f32 0.0, %v1186
        %v1188 = vpop.f32.mrb[0].mxu0
        %v1189 = vpop.f32.mrb[0].mxu0
        %v1190 = vadd.f32 0.0, %v1189
        %v1191 = vpop.f32.mrb[0].mxu0
        %1192 = vmatprep.mubr.bf16.mxu0 0
        %1193 = vmatmul.mubr.bf16.gmra.mrb[0].mxu0 %v1090
        %v1194 = vpop.f32.mrb[0].mxu0
        %v1195 = vadd.f32 0.0, %v1194
        %v1196 = vpop.f32.mrb[0].mxu0
        %v1197 = vpop.f32.mrb[0].mxu0
        %v1198 = vadd.f32 0.0, %v1197
        %v1199 = vpop.f32.mrb[0].mxu0
        %1200 = vmatprep.mubr.bf16.mxu0 0
        %1201 = vmatmul.mubr.bf16.gmra.mrb[0].mxu0 %v1093
        %v1202 = vpop.f32.mrb[0].mxu0
        %v1203 = vadd.f32 0.0, %v1202
        %v1204 = vpop.f32.mrb[0].mxu0
        %v1205 = vpop.f32.mrb[0].mxu0
        %v1206 = vadd.f32 0.0, %v1205
        %v1207 = vpop.f32.mrb[0].mxu0
        %1208 = vmatprep.mubr.bf16.mxu0 0
        %1209 = vmatmul.mubr.bf16.gmra.mrb[0].mxu0 %v1096
        %v1210 = vpop.f32.mrb[0].mxu0
        %v1211 = vadd.f32 0.0, %v1210
        %v1212 = vpop.f32.mrb[0].mxu0
        %v1213 = vpop.f32.mrb[0].mxu0
        %v1214 = vadd.f32 0.0, %v1213
        %v1215 = vpop.f32.mrb[0].mxu0
        %1216 = vmatprep.mubr.bf16.mxu0 0
        %1217 = vmatmul.mubr.bf16.gmra.mrb[0].mxu0 %v1099
        %v1218 = vpop.f32.mrb[0].mxu0
        %v1219 = vadd.f32 0.0, %v1218
        %v1220 = vpop.f32.mrb[0].mxu0
        %v1221 = vpop.f32.mrb[0].mxu0
        %v1222 = vadd.f32 0.0, %v1221
        %v1223 = vpop.f32.mrb[0].mxu0
        %1224 = vmatprep.mubr.bf16.mxu0 0
        %1225 = vmatmul.mubr.bf16.gmra.mrb[0].mxu0 %v1102
        %v1226 = vpop.f32.mrb[0].mxu0
        %v1227 = vadd.f32 0.0, %v1226
        %v1228 = vpop.f32.mrb[0].mxu0
        %v1229 = vpop.f32.mrb[0].mxu0
        %v1230 = vadd.f32 0.0, %v1229
        %v1231 = vpop.f32.mrb[0].mxu0
        %1232 = vdwg.mxu0
        %v1233 = vadd.f32 %v946, %v1139
        %v1234 = vadd.f32 %v949, %v1142
        %v1235 = vadd.f32 %v954, %v1147
        %v1236 = vadd.f32 %v957, %v1150
        %v1237 = vadd.f32 %v962, %v1155
        %v1238 = vadd.f32 %v965, %v1158
        %v1239 = vadd.f32 %v970, %v1163
        %v1240 = vadd.f32 %v973, %v1166
        %v1241 = vadd.f32 %v978, %v1171
        %v1242 = vadd.f32 %v981, %v1174
        %v1243 = vadd.f32 %v986, %v1179
        %v1244 = vadd.f32 %v989, %v1182
        %v1245 = vadd.f32 %v994, %v1187
        %v1246 = vadd.f32 %v997, %v1190
        %v1247 = vadd.f32 %v1002, %v1195
        %v1248 = vadd.f32 %v1005, %v1198
        %v1249 = vadd.f32 %v1010, %v1203
        %v1250 = vadd.f32 %v1013, %v1206
        %v1251 = vadd.f32 %v1018, %v1211
        %v1252 = vadd.f32 %v1021, %v1214
        %v1253 = vadd.f32 %v1026, %v1219
        %v1254 = vadd.f32 %v1029, %v1222
        %v1255 = vadd.f32 %v1034, %v1227
        %v1256 = vadd.f32 %v1037, %v1230
        %v1257 = vld [vmem:[#allocation2 + $0x18] sm:$0xff]
        %v1258 = vld [vmem:[#allocation2 + $0x20] sm:$0xff]
        %v1259 = vld [vmem:[#allocation2 + $0x28] sm:$0xff]
        %v1260 = vld [vmem:[#allocation2 + $0x30] sm:$0xff]
        %v1261 = vld [vmem:[#allocation2 + $0x38] sm:$0xff]
        %v1262 = vld [vmem:[#allocation2 + $0x40] sm:$0xff]
        %v1263 = vld [vmem:[#allocation2 + $0x48] sm:$0xff]
        %v1264 = vld [vmem:[#allocation2 + $0x50] sm:$0xff]
        %v1265 = vld [vmem:[#allocation2 + $0x58] sm:$0xff]
        %v1266 = vld [vmem:[#allocation2 + $0x60] sm:$0xff]
        %v1267 = vld [vmem:[#allocation2 + $0x68] sm:$0xff]
        %v1268 = vld [vmem:[#allocation2 + $0x70] sm:$0xff]
        %v1269 = vld [vmem:[%s1 + $0x50] sm:$0xf]
        %v1270 = vld [vmem:[%s1 + $0x54] sm:$0xf]
        %v1271 = vld [vmem:[%s1 + $0x58] sm:$0xf]
        %v1272 = vld [vmem:[%s1 + $0x5c] sm:$0xf]
        %v1277 = vunpack.c.l.b16 %v1269
        %v1278 = vunpack.c.l.b16 %v1270
        %v1279 = vunpack.c.l.b16 %v1271
        %v1280 = vunpack.c.l.b16 %v1272
        %v1281 = vpack.c.b16 %v1278, %v1277
        %v1282 = vpack.c.b16 %v1280, %v1279
        %v1286 = vsel %vm669, %v1257, 0
        %v1289 = vsel %vm669, %v1258, 0
        %v1292 = vsel %vm669, %v1259, 0
        %v1295 = vsel %vm669, %v1260, 0
        %v1298 = vsel %vm669, %v1261, 0
        %v1301 = vsel %vm669, %v1262, 0
        %v1304 = vsel %vm669, %v1263, 0
        %v1307 = vsel %vm669, %v1264, 0
        %v1310 = vsel %vm669, %v1265, 0
        %v1313 = vsel %vm669, %v1266, 0
        %v1316 = vsel %vm669, %v1267, 0
        %v1319 = vsel %vm669, %v1268, 0
        %1321 = vmatprep.subr.bf16.mxu0 0
        %1322 = vmatpush1.bf16.msra.mxu0 %v1281
        %1323 = vmatprep.subr.bf16.mxu0 0
        %1324 = vmatpush1.bf16.msra.mxu0 %v1282
        %1325 = vmatprep.subr.bf16.mxu0 0
        %1326 = vmatpush1.bf16.msra.mxu0 0
        %1327 = vmatprep.subr.bf16.mxu0 0
        %1328 = vmatpush1.bf16.msra.mxu0 0
        %1329 = vmatprep.subr.bf16.mxu0 0
        %1330 = vmatpush1.bf16.msra.mxu0 0
        %1331 = vmatprep.subr.bf16.mxu0 0
        %1332 = vmatpush1.bf16.msra.mxu0 0
        %1333 = vmatprep.subr.bf16.mxu0 0
        %1334 = vmatpush1.bf16.msra.mxu0 0
        %1335 = vmatprep.subr.bf16.mxu0 0
        %1336 = vmatpush1.bf16.msra.mxu0 0
        %1337 = vmatprep.subr.bf16.mxu0 0
        %1338 = vmatpush1.bf16.msra.mxu0 0
        %1339 = vmatprep.subr.bf16.mxu0 0
        %1340 = vmatpush1.bf16.msra.mxu0 0
        %1341 = vmatprep.subr.bf16.mxu0 0
        %1342 = vmatpush1.bf16.msra.mxu0 0
        %1343 = vmatprep.subr.bf16.mxu0 0
        %1344 = vmatpush1.bf16.msra.mxu0 0
        %1345 = vmatprep.subr.bf16.mxu0 0
        %1346 = vmatpush1.bf16.msra.mxu0 0
        %1347 = vmatprep.subr.bf16.mxu0 0
        %1348 = vmatpush1.bf16.msra.mxu0 0
        %1349 = vmatprep.subr.bf16.mxu0 0
        %1350 = vmatpush1.bf16.msra.mxu0 0
        %1351 = vmatprep.subr.bf16.mxu0 0
        %1352 = vmatpush1.bf16.msra.mxu0 0
        %1353 = vmatprep.mubr.bf16.mxu0 0
        %1354 = vmatmul.mubr.bf16.gmra.mrb[0].mxu0 %v1286
        %v1355 = vpop.f32.mrb[0].mxu0
        %v1356 = vadd.f32 0.0, %v1355
        %v1357 = vpop.f32.mrb[0].mxu0
        %v1358 = vpop.f32.mrb[0].mxu0
        %v1359 = vadd.f32 0.0, %v1358
        %v1360 = vpop.f32.mrb[0].mxu0
        %1361 = vmatprep.mubr.bf16.mxu0 0
        %1362 = vmatmul.mubr.bf16.gmra.mrb[0].mxu0 %v1289
        %v1363 = vpop.f32.mrb[0].mxu0
        %v1364 = vadd.f32 0.0, %v1363
        %v1365 = vpop.f32.mrb[0].mxu0
        %v1366 = vpop.f32.mrb[0].mxu0
        %v1367 = vadd.f32 0.0, %v1366
        %v1368 = vpop.f32.mrb[0].mxu0
        %1369 = vmatprep.mubr.bf16.mxu0 0
        %1370 = vmatmul.mubr.bf16.gmra.mrb[0].mxu0 %v1292
        %v1371 = vpop.f32.mrb[0].mxu0
        %v1372 = vadd.f32 0.0, %v1371
        %v1373 = vpop.f32.mrb[0].mxu0
        %v1374 = vpop.f32.mrb[0].mxu0
        %v1375 = vadd.f32 0.0, %v1374
        %v1376 = vpop.f32.mrb[0].mxu0
        %1377 = vmatprep.mubr.bf16.mxu0 0
        %1378 = vmatmul.mubr.bf16.gmra.mrb[0].mxu0 %v1295
        %v1379 = vpop.f32.mrb[0].mxu0
        %v1380 = vadd.f32 0.0, %v1379
        %v1381 = vpop.f32.mrb[0].mxu0
        %v1382 = vpop.f32.mrb[0].mxu0
        %v1383 = vadd.f32 0.0, %v1382
        %v1384 = vpop.f32.mrb[0].mxu0
        %1385 = vmatprep.mubr.bf16.mxu0 0
        %1386 = vmatmul.mubr.bf16.gmra.mrb[0].mxu0 %v1298
        %v1387 = vpop.f32.mrb[0].mxu0
        %v1388 = vadd.f32 0.0, %v1387
        %v1389 = vpop.f32.mrb[0].mxu0
        %v1390 = vpop.f32.mrb[0].mxu0
        %v1391 = vadd.f32 0.0, %v1390
        %v1392 = vpop.f32.mrb[0].mxu0
        %1393 = vmatprep.mubr.bf16.mxu0 0
        %1394 = vmatmul.mubr.bf16.gmra.mrb[0].mxu0 %v1301
        %v1395 = vpop.f32.mrb[0].mxu0
        %v1396 = vadd.f32 0.0, %v1395
        %v1397 = vpop.f32.mrb[0].mxu0
        %v1398 = vpop.f32.mrb[0].mxu0
        %v1399 = vadd.f32 0.0, %v1398
        %v1400 = vpop.f32.mrb[0].mxu0
        %1401 = vmatprep.mubr.bf16.mxu0 0
        %1402 = vmatmul.mubr.bf16.gmra.mrb[0].mxu0 %v1304
        %v1403 = vpop.f32.mrb[0].mxu0
        %v1404 = vadd.f32 0.0, %v1403
        %v1405 = vpop.f32.mrb[0].mxu0
        %v1406 = vpop.f32.mrb[0].mxu0
        %v1407 = vadd.f32 0.0, %v1406
        %v1408 = vpop.f32.mrb[0].mxu0
        %1409 = vmatprep.mubr.bf16.mxu0 0
        %1410 = vmatmul.mubr.bf16.gmra.mrb[0].mxu0 %v1307
        %v1411 = vpop.f32.mrb[0].mxu0
        %v1412 = vadd.f32 0.0, %v1411
        %v1413 = vpop.f32.mrb[0].mxu0
        %v1414 = vpop.f32.mrb[0].mxu0
        %v1415 = vadd.f32 0.0, %v1414
        %v1416 = vpop.f32.mrb[0].mxu0
        %1417 = vmatprep.mubr.bf16.mxu0 0
        %1418 = vmatmul.mubr.bf16.gmra.mrb[0].mxu0 %v1310
        %v1419 = vpop.f32.mrb[0].mxu0
        %v1420 = vadd.f32 0.0, %v1419
        %v1421 = vpop.f32.mrb[0].mxu0
        %v1422 = vpop.f32.mrb[0].mxu0
        %v1423 = vadd.f32 0.0, %v1422
        %v1424 = vpop.f32.mrb[0].mxu0
        %1425 = vmatprep.mubr.bf16.mxu0 0
        %1426 = vmatmul.mubr.bf16.gmra.mrb[0].mxu0 %v1313
        %v1427 = vpop.f32.mrb[0].mxu0
        %v1428 = vadd.f32 0.0, %v1427
        %v1429 = vpop.f32.mrb[0].mxu0
        %v1430 = vpop.f32.mrb[0].mxu0
        %v1431 = vadd.f32 0.0, %v1430
        %v1432 = vpop.f32.mrb[0].mxu0
        %1433 = vmatprep.mubr.bf16.mxu0 0
        %1434 = vmatmul.mubr.bf16.gmra.mrb[0].mxu0 %v1316
        %v1435 = vpop.f32.mrb[0].mxu0
        %v1436 = vadd.f32 0.0, %v1435
        %v1437 = vpop.f32.mrb[0].mxu0
        %v1438 = vpop.f32.mrb[0].mxu0
        %v1439 = vadd.f32 0.0, %v1438
        %v1440 = vpop.f32.mrb[0].mxu0
        %1441 = vmatprep.mubr.bf16.mxu0 0
        %1442 = vmatmul.mubr.bf16.gmra.mrb[0].mxu0 %v1319
        %v1443 = vpop.f32.mrb[0].mxu0
        %v1444 = vadd.f32 0.0, %v1443
        %v1445 = vpop.f32.mrb[0].mxu0
        %v1446 = vpop.f32.mrb[0].mxu0
        %v1447 = vadd.f32 0.0, %v1446
        %v1448 = vpop.f32.mrb[0].mxu0
        %1449 = vdwg.mxu0
        %v1450 = vadd.f32 %v1233, %v1356
        %v1451 = vadd.f32 %v1234, %v1359
        %v1452 = vadd.f32 %v1235, %v1364
        %v1453 = vadd.f32 %v1236, %v1367
        %v1454 = vadd.f32 %v1237, %v1372
        %v1455 = vadd.f32 %v1238, %v1375
        %v1456 = vadd.f32 %v1239, %v1380
        %v1457 = vadd.f32 %v1240, %v1383
        %v1458 = vadd.f32 %v1241, %v1388
        %v1459 = vadd.f32 %v1242, %v1391
        %v1460 = vadd.f32 %v1243, %v1396
        %v1461 = vadd.f32 %v1244, %v1399
        %v1462 = vadd.f32 %v1245, %v1404
        %v1463 = vadd.f32 %v1246, %v1407
        %v1464 = vadd.f32 %v1247, %v1412
        %v1465 = vadd.f32 %v1248, %v1415
        %v1466 = vadd.f32 %v1249, %v1420
        %v1467 = vadd.f32 %v1250, %v1423
        %v1468 = vadd.f32 %v1251, %v1428
        %v1469 = vadd.f32 %v1252, %v1431
        %v1470 = vadd.f32 %v1253, %v1436
        %v1471 = vadd.f32 %v1254, %v1439
        %v1472 = vadd.f32 %v1255, %v1444
        %v1473 = vadd.f32 %v1256, %v1447
        %v1474 = vld [vmem:[#allocation2 + $0x20] sm:$0xff]
        %v1475 = vld [vmem:[#allocation2 + $0x28] sm:$0xff]
        %v1476 = vld [vmem:[#allocation2 + $0x30] sm:$0xff]
        %v1477 = vld [vmem:[#allocation2 + $0x38] sm:$0xff]
        %v1478 = vld [vmem:[#allocation2 + $0x40] sm:$0xff]
        %v1479 = vld [vmem:[#allocation2 + $0x48] sm:$0xff]
        %v1480 = vld [vmem:[#allocation2 + $0x50] sm:$0xff]
        %v1481 = vld [vmem:[#allocation2 + $0x58] sm:$0xff]
        %v1482 = vld [vmem:[#allocation2 + $0x60] sm:$0xff]
        %v1483 = vld [vmem:[#allocation2 + $0x68] sm:$0xff]
        %v1484 = vld [vmem:[#allocation2 + $0x70] sm:$0xff]
        %v1485 = vld [vmem:[#allocation2 + $0x78] sm:$0xff]
        %v1486 = vld [vmem:[%s1 + $0x60] sm:$0xf]
        %v1487 = vld [vmem:[%s1 + $0x64] sm:$0xf]
        %v1488 = vld [vmem:[%s1 + $0x68] sm:$0xf]
        %v1489 = vld [vmem:[%s1 + $0x6c] sm:$0xf]
        %v1494 = vunpack.c.l.b16 %v1486
        %v1495 = vunpack.c.l.b16 %v1487
        %v1496 = vunpack.c.l.b16 %v1488
        %v1497 = vunpack.c.l.b16 %v1489
        %v1498 = vpack.c.b16 %v1495, %v1494
        %v1499 = vpack.c.b16 %v1497, %v1496
        %v1503 = vsel %vm669, %v1474, 0
        %v1506 = vsel %vm669, %v1475, 0
        %v1509 = vsel %vm669, %v1476, 0
        %v1512 = vsel %vm669, %v1477, 0
        %v1515 = vsel %vm669, %v1478, 0
        %v1518 = vsel %vm669, %v1479, 0
        %v1521 = vsel %vm669, %v1480, 0
        %v1524 = vsel %vm669, %v1481, 0
        %v1527 = vsel %vm669, %v1482, 0
        %v1530 = vsel %vm669, %v1483, 0
        %v1533 = vsel %vm669, %v1484, 0
        %v1536 = vsel %vm669, %v1485, 0
        %1538 = vmatprep.subr.bf16.mxu0 0
        %1539 = vmatpush1.bf16.msra.mxu0 %v1498
        %1540 = vmatprep.subr.bf16.mxu0 0
        %1541 = vmatpush1.bf16.msra.mxu0 %v1499
        %1542 = vmatprep.subr.bf16.mxu0 0
        %1543 = vmatpush1.bf16.msra.mxu0 0
        %1544 = vmatprep.subr.bf16.mxu0 0
        %1545 = vmatpush1.bf16.msra.mxu0 0
        %1546 = vmatprep.subr.bf16.mxu0 0
        %1547 = vmatpush1.bf16.msra.mxu0 0
        %1548 = vmatprep.subr.bf16.mxu0 0
        %1549 = vmatpush1.bf16.msra.mxu0 0
        %1550 = vmatprep.subr.bf16.mxu0 0
        %1551 = vmatpush1.bf16.msra.mxu0 0
        %1552 = vmatprep.subr.bf16.mxu0 0
        %1553 = vmatpush1.bf16.msra.mxu0 0
        %1554 = vmatprep.subr.bf16.mxu0 0
        %1555 = vmatpush1.bf16.msra.mxu0 0
        %1556 = vmatprep.subr.bf16.mxu0 0
        %1557 = vmatpush1.bf16.msra.mxu0 0
        %1558 = vmatprep.subr.bf16.mxu0 0
        %1559 = vmatpush1.bf16.msra.mxu0 0
        %1560 = vmatprep.subr.bf16.mxu0 0
        %1561 = vmatpush1.bf16.msra.mxu0 0
        %1562 = vmatprep.subr.bf16.mxu0 0
        %1563 = vmatpush1.bf16.msra.mxu0 0
        %1564 = vmatprep.subr.bf16.mxu0 0
        %1565 = vmatpush1.bf16.msra.mxu0 0
        %1566 = vmatprep.subr.bf16.mxu0 0
        %1567 = vmatpush1.bf16.msra.mxu0 0
        %1568 = vmatprep.subr.bf16.mxu0 0
        %1569 = vmatpush1.bf16.msra.mxu0 0
        %1570 = vmatprep.mubr.bf16.mxu0 0
        %1571 = vmatmul.mubr.bf16.gmra.mrb[0].mxu0 %v1503
        %v1572 = vpop.f32.mrb[0].mxu0
        %v1573 = vadd.f32 0.0, %v1572
        %v1574 = vpop.f32.mrb[0].mxu0
        %v1575 = vpop.f32.mrb[0].mxu0
        %v1576 = vadd.f32 0.0, %v1575
        %v1577 = vpop.f32.mrb[0].mxu0
        %1578 = vmatprep.mubr.bf16.mxu0 0
        %1579 = vmatmul.mubr.bf16.gmra.mrb[0].mxu0 %v1506
        %v1580 = vpop.f32.mrb[0].mxu0
        %v1581 = vadd.f32 0.0, %v1580
        %v1582 = vpop.f32.mrb[0].mxu0
        %v1583 = vpop.f32.mrb[0].mxu0
        %v1584 = vadd.f32 0.0, %v1583
        %v1585 = vpop.f32.mrb[0].mxu0
        %1586 = vmatprep.mubr.bf16.mxu0 0
        %1587 = vmatmul.mubr.bf16.gmra.mrb[0].mxu0 %v1509
        %v1588 = vpop.f32.mrb[0].mxu0
        %v1589 = vadd.f32 0.0, %v1588
        %v1590 = vpop.f32.mrb[0].mxu0
        %v1591 = vpop.f32.mrb[0].mxu0
        %v1592 = vadd.f32 0.0, %v1591
        %v1593 = vpop.f32.mrb[0].mxu0
        %1594 = vmatprep.mubr.bf16.mxu0 0
        %1595 = vmatmul.mubr.bf16.gmra.mrb[0].mxu0 %v1512
        %v1596 = vpop.f32.mrb[0].mxu0
        %v1597 = vadd.f32 0.0, %v1596
        %v1598 = vpop.f32.mrb[0].mxu0
        %v1599 = vpop.f32.mrb[0].mxu0
        %v1600 = vadd.f32 0.0, %v1599
        %v1601 = vpop.f32.mrb[0].mxu0
        %1602 = vmatprep.mubr.bf16.mxu0 0
        %1603 = vmatmul.mubr.bf16.gmra.mrb[0].mxu0 %v1515
        %v1604 = vpop.f32.mrb[0].mxu0
        %v1605 = vadd.f32 0.0, %v1604
        %v1606 = vpop.f32.mrb[0].mxu0
        %v1607 = vpop.f32.mrb[0].mxu0
        %v1608 = vadd.f32 0.0, %v1607
        %v1609 = vpop.f32.mrb[0].mxu0
        %1610 = vmatprep.mubr.bf16.mxu0 0
        %1611 = vmatmul.mubr.bf16.gmra.mrb[0].mxu0 %v1518
        %v1612 = vpop.f32.mrb[0].mxu0
        %v1613 = vadd.f32 0.0, %v1612
        %v1614 = vpop.f32.mrb[0].mxu0
        %v1615 = vpop.f32.mrb[0].mxu0
        %v1616 = vadd.f32 0.0, %v1615
        %v1617 = vpop.f32.mrb[0].mxu0
        %1618 = vmatprep.mubr.bf16.mxu0 0
        %1619 = vmatmul.mubr.bf16.gmra.mrb[0].mxu0 %v1521
        %v1620 = vpop.f32.mrb[0].mxu0
        %v1621 = vadd.f32 0.0, %v1620
        %v1622 = vpop.f32.mrb[0].mxu0
        %v1623 = vpop.f32.mrb[0].mxu0
        %v1624 = vadd.f32 0.0, %v1623
        %v1625 = vpop.f32.mrb[0].mxu0
        %1626 = vmatprep.mubr.bf16.mxu0 0
        %1627 = vmatmul.mubr.bf16.gmra.mrb[0].mxu0 %v1524
        %v1628 = vpop.f32.mrb[0].mxu0
        %v1629 = vadd.f32 0.0, %v1628
        %v1630 = vpop.f32.mrb[0].mxu0
        %v1631 = vpop.f32.mrb[0].mxu0
        %v1632 = vadd.f32 0.0, %v1631
        %v1633 = vpop.f32.mrb[0].mxu0
        %1634 = vmatprep.mubr.bf16.mxu0 0
        %1635 = vmatmul.mubr.bf16.gmra.mrb[0].mxu0 %v1527
        %v1636 = vpop.f32.mrb[0].mxu0
        %v1637 = vadd.f32 0.0, %v1636
        %v1638 = vpop.f32.mrb[0].mxu0
        %v1639 = vpop.f32.mrb[0].mxu0
        %v1640 = vadd.f32 0.0, %v1639
        %v1641 = vpop.f32.mrb[0].mxu0
        %1642 = vmatprep.mubr.bf16.mxu0 0
        %1643 = vmatmul.mubr.bf16.gmra.mrb[0].mxu0 %v1530
        %v1644 = vpop.f32.mrb[0].mxu0
        %v1645 = vadd.f32 0.0, %v1644
        %v1646 = vpop.f32.mrb[0].mxu0
        %v1647 = vpop.f32.mrb[0].mxu0
        %v1648 = vadd.f32 0.0, %v1647
        %v1649 = vpop.f32.mrb[0].mxu0
        %1650 = vmatprep.mubr.bf16.mxu0 0
        %1651 = vmatmul.mubr.bf16.gmra.mrb[0].mxu0 %v1533
        %v1652 = vpop.f32.mrb[0].mxu0
        %v1653 = vadd.f32 0.0, %v1652
        %v1654 = vpop.f32.mrb[0].mxu0
        %v1655 = vpop.f32.mrb[0].mxu0
        %v1656 = vadd.f32 0.0, %v1655
        %v1657 = vpop.f32.mrb[0].mxu0
        %1658 = vmatprep.mubr.bf16.mxu0 0
        %1659 = vmatmul.mubr.bf16.gmra.mrb[0].mxu0 %v1536
        %v1660 = vpop.f32.mrb[0].mxu0
        %v1661 = vadd.f32 0.0, %v1660
        %v1662 = vpop.f32.mrb[0].mxu0
        %v1663 = vpop.f32.mrb[0].mxu0
        %v1664 = vadd.f32 0.0, %v1663
        %v1665 = vpop.f32.mrb[0].mxu0
        %1666 = vdwg.mxu0
        %v1667 = vadd.f32 %v1450, %v1573
        %v1668 = vadd.f32 %v1451, %v1576
        %v1669 = vadd.f32 %v1452, %v1581
        %v1670 = vadd.f32 %v1453, %v1584
        %v1671 = vadd.f32 %v1454, %v1589
        %v1672 = vadd.f32 %v1455, %v1592
        %v1673 = vadd.f32 %v1456, %v1597
        %v1674 = vadd.f32 %v1457, %v1600
        %v1675 = vadd.f32 %v1458, %v1605
        %v1676 = vadd.f32 %v1459, %v1608
        %v1677 = vadd.f32 %v1460, %v1613
        %v1678 = vadd.f32 %v1461, %v1616
        %v1679 = vadd.f32 %v1462, %v1621
        %v1680 = vadd.f32 %v1463, %v1624
        %v1681 = vadd.f32 %v1464, %v1629
        %v1682 = vadd.f32 %v1465, %v1632
        %v1683 = vadd.f32 %v1466, %v1637
        %v1684 = vadd.f32 %v1467, %v1640
        %v1685 = vadd.f32 %v1468, %v1645
        %v1686 = vadd.f32 %v1469, %v1648
        %v1687 = vadd.f32 %v1470, %v1653
        %v1688 = vadd.f32 %v1471, %v1656
        %v1689 = vadd.f32 %v1472, %v1661
        %v1690 = vadd.f32 %v1473, %v1664
        %v1691 = vlaneseq
        %v1692 = vshrl.u32 %v1691, 7
        %v1693 = vsub.s32 0, %v1692
        %v1694 = vrot.slane %v203, %v1693
        %v1695 = vadd.f32 %v1667, %v1694
        %v1696 = vadd.f32 %v1668, %v1694
        %v1697 = vadd.f32 %v1669, %v1694
        %v1698 = vadd.f32 %v1670, %v1694
        %v1699 = vadd.f32 %v1671, %v1694
        %v1700 = vadd.f32 %v1672, %v1694
        %v1701 = vadd.f32 %v1673, %v1694
        %v1702 = vadd.f32 %v1674, %v1694
        %v1703 = vadd.f32 %v1675, %v1694
        %v1704 = vadd.f32 %v1676, %v1694
        %v1705 = vadd.f32 %v1677, %v1694
        %v1706 = vadd.f32 %v1678, %v1694
        %v1707 = vadd.f32 %v1679, %v1694
        %v1708 = vadd.f32 %v1680, %v1694
        %v1709 = vadd.f32 %v1681, %v1694
        %v1710 = vadd.f32 %v1682, %v1694
        %v1711 = vadd.f32 %v1683, %v1694
        %v1712 = vadd.f32 %v1684, %v1694
        %v1713 = vadd.f32 %v1685, %v1694
        %v1714 = vadd.f32 %v1686, %v1694
        %v1715 = vadd.f32 %v1687, %v1694
        %v1716 = vadd.f32 %v1688, %v1694
        %v1717 = vadd.f32 %v1689, %v1694
        %v1718 = vadd.f32 %v1690, %v1694
        %v1719 = vmax.f32 %v1695, 0.0
        %v1720 = vmax.f32 %v1696, 0.0
        %v1721 = vmax.f32 %v1697, 0.0
        %v1722 = vmax.f32 %v1698, 0.0
        %v1723 = vmax.f32 %v1699, 0.0
        %v1724 = vmax.f32 %v1700, 0.0
        %v1725 = vmax.f32 %v1701, 0.0
        %v1726 = vmax.f32 %v1702, 0.0
        %v1727 = vmax.f32 %v1703, 0.0
        %v1728 = vmax.f32 %v1704, 0.0
        %v1729 = vmax.f32 %v1705, 0.0
        %v1730 = vmax.f32 %v1706, 0.0
        %v1731 = vmax.f32 %v1707, 0.0
        %v1732 = vmax.f32 %v1708, 0.0
        %v1733 = vmax.f32 %v1709, 0.0
        %v1734 = vmax.f32 %v1710, 0.0
        %v1735 = vmax.f32 %v1711, 0.0
        %v1736 = vmax.f32 %v1712, 0.0
        %v1737 = vmax.f32 %v1713, 0.0
        %v1738 = vmax.f32 %v1714, 0.0
        %v1739 = vmax.f32 %v1715, 0.0
        %v1740 = vmax.f32 %v1716, 0.0
        %v1741 = vmax.f32 %v1717, 0.0
        %v1742 = vmax.f32 %v1718, 0.0
        %1743 = vst.msk [vmem:[#allocation3] sm:$0xff] %vm246, 0
        %1744 = vst.msk [vmem:[#allocation3 + $0x8] sm:$0xff] %vm246, 0
        %1745 = vst.msk [vmem:[#allocation3 + $0x70] sm:$0xff] %vm246, 0
        %1746 = vst.msk [vmem:[#allocation3 + $0x78] sm:$0xff] %vm246, 0
        %v1747 = vpack.c.bf16 %v1720, %v1719
        %v1748 = vpack.c.bf16 %v1722, %v1721
        %v1749 = vpack.c.bf16 %v1724, %v1723
        %v1750 = vpack.c.bf16 %v1726, %v1725
        %v1751 = vpack.c.bf16 %v1728, %v1727
        %v1752 = vpack.c.bf16 %v1730, %v1729
        %v1753 = vpack.c.bf16 %v1732, %v1731
        %v1754 = vpack.c.bf16 %v1734, %v1733
        %v1755 = vpack.c.bf16 %v1736, %v1735
        %v1756 = vpack.c.bf16 %v1738, %v1737
        %v1757 = vpack.c.bf16 %v1740, %v1739
        %v1758 = vpack.c.bf16 %v1742, %v1741
        %1759 = vst.msk [vmem:[#allocation3 + $0x10] sm:$0xff] %vm246, %v1747
        %1760 = vst.msk [vmem:[#allocation3 + $0x18] sm:$0xff] %vm246, %v1748
        %1761 = vst.msk [vmem:[#allocation3 + $0x20] sm:$0xff] %vm246, %v1749
        %1762 = vst.msk [vmem:[#allocation3 + $0x28] sm:$0xff] %vm246, %v1750
        %1763 = vst.msk [vmem:[#allocation3 + $0x30] sm:$0xff] %vm246, %v1751
        %1764 = vst.msk [vmem:[#allocation3 + $0x38] sm:$0xff] %vm246, %v1752
        %1765 = vst.msk [vmem:[#allocation3 + $0x40] sm:$0xff] %vm246, %v1753
        %1766 = vst.msk [vmem:[#allocation3 + $0x48] sm:$0xff] %vm246, %v1754
        %1767 = vst.msk [vmem:[#allocation3 + $0x50] sm:$0xff] %vm246, %v1755
        %1768 = vst.msk [vmem:[#allocation3 + $0x58] sm:$0xff] %vm246, %v1756
        %1769 = vst.msk [vmem:[#allocation3 + $0x60] sm:$0xff] %vm246, %v1757
        %1770 = vst.msk [vmem:[#allocation3 + $0x68] sm:$0xff] %vm246, %v1758
        %v1771 = vld [vmem:[#allocation3] sm:$0xff]
        %v1772 = vld [vmem:[#allocation3 + $0x8] sm:$0xff]
        %v1773 = vld [vmem:[#allocation3 + $0x10] sm:$0xff]
        %v1774 = vld [vmem:[#allocation3 + $0x18] sm:$0xff]
        %v1775 = vld [vmem:[#allocation3 + $0x20] sm:$0xff]
        %v1776 = vld [vmem:[#allocation3 + $0x28] sm:$0xff]
        %v1777 = vld [vmem:[#allocation3 + $0x30] sm:$0xff]
        %v1778 = vld [vmem:[#allocation3 + $0x38] sm:$0xff]
        %v1779 = vld [vmem:[#allocation3 + $0x40] sm:$0xff]
        %v1780 = vld [vmem:[#allocation3 + $0x48] sm:$0xff]
        %v1781 = vld [vmem:[#allocation3 + $0x50] sm:$0xff]
        %v1782 = vld [vmem:[#allocation3 + $0x58] sm:$0xff]
        %v1783 = vld [vmem:[%s1 + $0x70] sm:$0xf]
        %v1784 = vld [vmem:[#allocation3 + $0x60] sm:$0xff]
        %v1785 = vld [vmem:[%s1 + $0x78] sm:$0xf]
        %v1787 = vsel %vm246, %v1772, 0
        %v1790 = vsel %vm246, %v1773, 0
        %v1793 = vsel %vm246, %v1774, 0
        %v1796 = vsel %vm246, %v1775, 0
        %v1799 = vsel %vm246, %v1776, 0
        %v1802 = vsel %vm246, %v1777, 0
        %v1805 = vsel %vm246, %v1778, 0
        %v1808 = vsel %vm246, %v1779, 0
        %v1811 = vsel %vm246, %v1780, 0
        %v1814 = vsel %vm246, %v1781, 0
        %v1817 = vsel %vm246, %v1782, 0
        %v1820 = vsel %vm246, %v1784, 0
        %v1823 = vsel %vm283, %v1785, 0
        %1825 = vmatprep.subr.bf16.mxu0 0
        %1826 = vmatpush1.bf16.msra.mxu0 %v1823
        %1827 = vmatprep.subr.bf16.mxu0 0
        %1828 = vmatpush1.bf16.msra.mxu0 0
        %1829 = vmatprep.subr.bf16.mxu0 0
        %1830 = vmatpush1.bf16.msra.mxu0 0
        %1831 = vmatprep.subr.bf16.mxu0 0
        %1832 = vmatpush1.bf16.msra.mxu0 0
        %1833 = vmatprep.subr.bf16.mxu0 0
        %1834 = vmatpush1.bf16.msra.mxu0 0
        %1835 = vmatprep.subr.bf16.mxu0 0
        %1836 = vmatpush1.bf16.msra.mxu0 0
        %1837 = vmatprep.subr.bf16.mxu0 0
        %1838 = vmatpush1.bf16.msra.mxu0 0
        %1839 = vmatprep.subr.bf16.mxu0 0
        %1840 = vmatpush1.bf16.msra.mxu0 0
        %1841 = vmatprep.subr.bf16.mxu0 0
        %1842 = vmatpush1.bf16.msra.mxu0 0
        %1843 = vmatprep.subr.bf16.mxu0 0
        %1844 = vmatpush1.bf16.msra.mxu0 0
        %1845 = vmatprep.subr.bf16.mxu0 0
        %1846 = vmatpush1.bf16.msra.mxu0 0
        %1847 = vmatprep.subr.bf16.mxu0 0
        %1848 = vmatpush1.bf16.msra.mxu0 0
        %1849 = vmatprep.subr.bf16.mxu0 0
        %1850 = vmatpush1.bf16.msra.mxu0 0
        %1851 = vmatprep.subr.bf16.mxu0 0
        %1852 = vmatpush1.bf16.msra.mxu0 0
        %1853 = vmatprep.subr.bf16.mxu0 0
        %1854 = vmatpush1.bf16.msra.mxu0 0
        %1855 = vmatprep.subr.bf16.mxu0 0
        %1856 = vmatpush1.bf16.msra.mxu0 0
        %1857 = vmatprep.mubr.bf16.mxu0 0
        %1858 = vmatmul.mubr.bf16.gmra.mrb[0].mxu0 %v1787
        %v1859 = vpop.f32.mrb[0].mxu0
        %v1860 = vadd.f32 0.0, %v1859
        %v1861 = vpop.f32.mrb[0].mxu0
        %v1862 = vpop.f32.mrb[0].mxu0
        %v1863 = vadd.f32 0.0, %v1862
        %v1864 = vpop.f32.mrb[0].mxu0
        %1865 = vmatprep.mubr.bf16.mxu0 0
        %1866 = vmatmul.mubr.bf16.gmra.mrb[0].mxu0 %v1790
        %v1867 = vpop.f32.mrb[0].mxu0
        %v1868 = vadd.f32 0.0, %v1867
        %v1869 = vpop.f32.mrb[0].mxu0
        %v1870 = vpop.f32.mrb[0].mxu0
        %v1871 = vadd.f32 0.0, %v1870
        %v1872 = vpop.f32.mrb[0].mxu0
        %1873 = vmatprep.mubr.bf16.mxu0 0
        %1874 = vmatmul.mubr.bf16.gmra.mrb[0].mxu0 %v1793
        %v1875 = vpop.f32.mrb[0].mxu0
        %v1876 = vadd.f32 0.0, %v1875
        %v1877 = vpop.f32.mrb[0].mxu0
        %v1878 = vpop.f32.mrb[0].mxu0
        %v1879 = vadd.f32 0.0, %v1878
        %v1880 = vpop.f32.mrb[0].mxu0
        %1881 = vmatprep.mubr.bf16.mxu0 0
        %1882 = vmatmul.mubr.bf16.gmra.mrb[0].mxu0 %v1796
        %v1883 = vpop.f32.mrb[0].mxu0
        %v1884 = vadd.f32 0.0, %v1883
        %v1885 = vpop.f32.mrb[0].mxu0
        %v1886 = vpop.f32.mrb[0].mxu0
        %v1887 = vadd.f32 0.0, %v1886
        %v1888 = vpop.f32.mrb[0].mxu0
        %1889 = vmatprep.mubr.bf16.mxu0 0
        %1890 = vmatmul.mubr.bf16.gmra.mrb[0].mxu0 %v1799
        %v1891 = vpop.f32.mrb[0].mxu0
        %v1892 = vadd.f32 0.0, %v1891
        %v1893 = vpop.f32.mrb[0].mxu0
        %v1894 = vpop.f32.mrb[0].mxu0
        %v1895 = vadd.f32 0.0, %v1894
        %v1896 = vpop.f32.mrb[0].mxu0
        %1897 = vmatprep.mubr.bf16.mxu0 0
        %1898 = vmatmul.mubr.bf16.gmra.mrb[0].mxu0 %v1802
        %v1899 = vpop.f32.mrb[0].mxu0
        %v1900 = vadd.f32 0.0, %v1899
        %v1901 = vpop.f32.mrb[0].mxu0
        %v1902 = vpop.f32.mrb[0].mxu0
        %v1903 = vadd.f32 0.0, %v1902
        %v1904 = vpop.f32.mrb[0].mxu0
        %1905 = vmatprep.mubr.bf16.mxu0 0
        %1906 = vmatmul.mubr.bf16.gmra.mrb[0].mxu0 %v1805
        %v1907 = vpop.f32.mrb[0].mxu0
        %v1908 = vadd.f32 0.0, %v1907
        %v1909 = vpop.f32.mrb[0].mxu0
        %v1910 = vpop.f32.mrb[0].mxu0
        %v1911 = vadd.f32 0.0, %v1910
        %v1912 = vpop.f32.mrb[0].mxu0
        %1913 = vmatprep.mubr.bf16.mxu0 0
        %1914 = vmatmul.mubr.bf16.gmra.mrb[0].mxu0 %v1808
        %v1915 = vpop.f32.mrb[0].mxu0
        %v1916 = vadd.f32 0.0, %v1915
        %v1917 = vpop.f32.mrb[0].mxu0
        %v1918 = vpop.f32.mrb[0].mxu0
        %v1919 = vadd.f32 0.0, %v1918
        %v1920 = vpop.f32.mrb[0].mxu0
        %1921 = vmatprep.mubr.bf16.mxu0 0
        %1922 = vmatmul.mubr.bf16.gmra.mrb[0].mxu0 %v1811
        %v1923 = vpop.f32.mrb[0].mxu0
        %v1924 = vadd.f32 0.0, %v1923
        %v1925 = vpop.f32.mrb[0].mxu0
        %v1926 = vpop.f32.mrb[0].mxu0
        %v1927 = vadd.f32 0.0, %v1926
        %v1928 = vpop.f32.mrb[0].mxu0
        %1929 = vmatprep.mubr.bf16.mxu0 0
        %1930 = vmatmul.mubr.bf16.gmra.mrb[0].mxu0 %v1814
        %v1931 = vpop.f32.mrb[0].mxu0
        %v1932 = vadd.f32 0.0, %v1931
        %v1933 = vpop.f32.mrb[0].mxu0
        %v1934 = vpop.f32.mrb[0].mxu0
        %v1935 = vadd.f32 0.0, %v1934
        %v1936 = vpop.f32.mrb[0].mxu0
        %1937 = vmatprep.mubr.bf16.mxu0 0
        %1938 = vmatmul.mubr.bf16.gmra.mrb[0].mxu0 %v1817
        %v1939 = vpop.f32.mrb[0].mxu0
        %v1940 = vadd.f32 0.0, %v1939
        %v1941 = vpop.f32.mrb[0].mxu0
        %v1942 = vpop.f32.mrb[0].mxu0
        %v1943 = vadd.f32 0.0, %v1942
        %v1944 = vpop.f32.mrb[0].mxu0
        %1945 = vmatprep.mubr.bf16.mxu0 0
        %1946 = vmatmul.mubr.bf16.gmra.mrb[0].mxu0 %v1820
        %v1947 = vpop.f32.mrb[0].mxu0
        %v1948 = vadd.f32 0.0, %v1947
        %v1949 = vpop.f32.mrb[0].mxu0
        %v1950 = vpop.f32.mrb[0].mxu0
        %v1951 = vadd.f32 0.0, %v1950
        %v1952 = vpop.f32.mrb[0].mxu0
        %1953 = vdwg.mxu0
        %v1955 = vsel %vm246, %v1771, 0
        %v1958 = vsel %vm283, %v1783, 0
        %1960 = vmatprep.subr.bf16.mxu0 0
        %1961 = vmatpush1.bf16.msra.mxu0 %v1958
        %1962 = vmatprep.subr.bf16.mxu0 0
        %1963 = vmatpush1.bf16.msra.mxu0 0
        %1964 = vmatprep.subr.bf16.mxu0 0
        %1965 = vmatpush1.bf16.msra.mxu0 0
        %1966 = vmatprep.subr.bf16.mxu0 0
        %1967 = vmatpush1.bf16.msra.mxu0 0
        %1968 = vmatprep.subr.bf16.mxu0 0
        %1969 = vmatpush1.bf16.msra.mxu0 0
        %1970 = vmatprep.subr.bf16.mxu0 0
        %1971 = vmatpush1.bf16.msra.mxu0 0
        %1972 = vmatprep.subr.bf16.mxu0 0
        %1973 = vmatpush1.bf16.msra.mxu0 0
        %1974 = vmatprep.subr.bf16.mxu0 0
        %1975 = vmatpush1.bf16.msra.mxu0 0
        %1976 = vmatprep.subr.bf16.mxu0 0
        %1977 = vmatpush1.bf16.msra.mxu0 0
        %1978 = vmatprep.subr.bf16.mxu0 0
        %1979 = vmatpush1.bf16.msra.mxu0 0
        %1980 = vmatprep.subr.bf16.mxu0 0
        %1981 = vmatpush1.bf16.msra.mxu0 0
        %1982 = vmatprep.subr.bf16.mxu0 0
        %1983 = vmatpush1.bf16.msra.mxu0 0
        %1984 = vmatprep.subr.bf16.mxu0 0
        %1985 = vmatpush1.bf16.msra.mxu0 0
        %1986 = vmatprep.subr.bf16.mxu0 0
        %1987 = vmatpush1.bf16.msra.mxu0 0
        %1988 = vmatprep.subr.bf16.mxu0 0
        %1989 = vmatpush1.bf16.msra.mxu0 0
        %1990 = vmatprep.subr.bf16.mxu0 0
        %1991 = vmatpush1.bf16.msra.mxu0 0
        %1992 = vmatprep.mubr.bf16.mxu0 0
        %1993 = vmatmul.mubr.bf16.gmra.mrb[0].mxu0 %v1955
        %v1994 = vpop.f32.mrb[0].mxu0
        %v1995 = vadd.f32 %v1860, %v1994
        %v1996 = vpop.f32.mrb[0].mxu0
        %v1997 = vpop.f32.mrb[0].mxu0
        %v1998 = vadd.f32 %v1863, %v1997
        %v1999 = vpop.f32.mrb[0].mxu0
        %2000 = vmatprep.mubr.bf16.mxu0 0
        %2001 = vmatmul.mubr.bf16.gmra.mrb[0].mxu0 %v1787
        %v2002 = vpop.f32.mrb[0].mxu0
        %v2003 = vadd.f32 %v1868, %v2002
        %v2004 = vpop.f32.mrb[0].mxu0
        %v2005 = vpop.f32.mrb[0].mxu0
        %v2006 = vadd.f32 %v1871, %v2005
        %v2007 = vpop.f32.mrb[0].mxu0
        %2008 = vmatprep.mubr.bf16.mxu0 0
        %2009 = vmatmul.mubr.bf16.gmra.mrb[0].mxu0 %v1790
        %v2010 = vpop.f32.mrb[0].mxu0
        %v2011 = vadd.f32 %v1876, %v2010
        %v2012 = vpop.f32.mrb[0].mxu0
        %v2013 = vpop.f32.mrb[0].mxu0
        %v2014 = vadd.f32 %v1879, %v2013
        %v2015 = vpop.f32.mrb[0].mxu0
        %2016 = vmatprep.mubr.bf16.mxu0 0
        %2017 = vmatmul.mubr.bf16.gmra.mrb[0].mxu0 %v1793
        %v2018 = vpop.f32.mrb[0].mxu0
        %v2019 = vadd.f32 %v1884, %v2018
        %v2020 = vpop.f32.mrb[0].mxu0
        %v2021 = vpop.f32.mrb[0].mxu0
        %v2022 = vadd.f32 %v1887, %v2021
        %v2023 = vpop.f32.mrb[0].mxu0
        %2024 = vmatprep.mubr.bf16.mxu0 0
        %2025 = vmatmul.mubr.bf16.gmra.mrb[0].mxu0 %v1796
        %v2026 = vpop.f32.mrb[0].mxu0
        %v2027 = vadd.f32 %v1892, %v2026
        %v2028 = vpop.f32.mrb[0].mxu0
        %v2029 = vpop.f32.mrb[0].mxu0
        %v2030 = vadd.f32 %v1895, %v2029
        %v2031 = vpop.f32.mrb[0].mxu0
        %2032 = vmatprep.mubr.bf16.mxu0 0
        %2033 = vmatmul.mubr.bf16.gmra.mrb[0].mxu0 %v1799
        %v2034 = vpop.f32.mrb[0].mxu0
        %v2035 = vadd.f32 %v1900, %v2034
        %v2036 = vpop.f32.mrb[0].mxu0
        %v2037 = vpop.f32.mrb[0].mxu0
        %v2038 = vadd.f32 %v1903, %v2037
        %v2039 = vpop.f32.mrb[0].mxu0
        %2040 = vmatprep.mubr.bf16.mxu0 0
        %2041 = vmatmul.mubr.bf16.gmra.mrb[0].mxu0 %v1802
        %v2042 = vpop.f32.mrb[0].mxu0
        %v2043 = vadd.f32 %v1908, %v2042
        %v2044 = vpop.f32.mrb[0].mxu0
        %v2045 = vpop.f32.mrb[0].mxu0
        %v2046 = vadd.f32 %v1911, %v2045
        %v2047 = vpop.f32.mrb[0].mxu0
        %2048 = vmatprep.mubr.bf16.mxu0 0
        %2049 = vmatmul.mubr.bf16.gmra.mrb[0].mxu0 %v1805
        %v2050 = vpop.f32.mrb[0].mxu0
        %v2051 = vadd.f32 %v1916, %v2050
        %v2052 = vpop.f32.mrb[0].mxu0
        %v2053 = vpop.f32.mrb[0].mxu0
        %v2054 = vadd.f32 %v1919, %v2053
        %v2055 = vpop.f32.mrb[0].mxu0
        %2056 = vmatprep.mubr.bf16.mxu0 0
        %2057 = vmatmul.mubr.bf16.gmra.mrb[0].mxu0 %v1808
        %v2058 = vpop.f32.mrb[0].mxu0
        %v2059 = vadd.f32 %v1924, %v2058
        %v2060 = vpop.f32.mrb[0].mxu0
        %v2061 = vpop.f32.mrb[0].mxu0
        %v2062 = vadd.f32 %v1927, %v2061
        %v2063 = vpop.f32.mrb[0].mxu0
        %2064 = vmatprep.mubr.bf16.mxu0 0
        %2065 = vmatmul.mubr.bf16.gmra.mrb[0].mxu0 %v1811
        %v2066 = vpop.f32.mrb[0].mxu0
        %v2067 = vadd.f32 %v1932, %v2066
        %v2068 = vpop.f32.mrb[0].mxu0
        %v2069 = vpop.f32.mrb[0].mxu0
        %v2070 = vadd.f32 %v1935, %v2069
        %v2071 = vpop.f32.mrb[0].mxu0
        %2072 = vmatprep.mubr.bf16.mxu0 0
        %2073 = vmatmul.mubr.bf16.gmra.mrb[0].mxu0 %v1814
        %v2074 = vpop.f32.mrb[0].mxu0
        %v2075 = vadd.f32 %v1940, %v2074
        %v2076 = vpop.f32.mrb[0].mxu0
        %v2077 = vpop.f32.mrb[0].mxu0
        %v2078 = vadd.f32 %v1943, %v2077
        %v2079 = vpop.f32.mrb[0].mxu0
        %2080 = vmatprep.mubr.bf16.mxu0 0
        %2081 = vmatmul.mubr.bf16.gmra.mrb[0].mxu0 %v1817
        %v2082 = vpop.f32.mrb[0].mxu0
        %v2083 = vadd.f32 %v1948, %v2082
        %v2084 = vpop.f32.mrb[0].mxu0
        %v2085 = vpop.f32.mrb[0].mxu0
        %v2086 = vadd.f32 %v1951, %v2085
        %v2087 = vpop.f32.mrb[0].mxu0
        %2088 = vdwg.mxu0
        %v2089 = vld [vmem:[#allocation3 + $0x10] sm:$0xff]
        %v2090 = vld [vmem:[#allocation3 + $0x18] sm:$0xff]
        %v2091 = vld [vmem:[#allocation3 + $0x20] sm:$0xff]
        %v2092 = vld [vmem:[#allocation3 + $0x28] sm:$0xff]
        %v2093 = vld [vmem:[#allocation3 + $0x30] sm:$0xff]
        %v2094 = vld [vmem:[#allocation3 + $0x38] sm:$0xff]
        %v2095 = vld [vmem:[#allocation3 + $0x40] sm:$0xff]
        %v2096 = vld [vmem:[#allocation3 + $0x48] sm:$0xff]
        %v2097 = vld [vmem:[#allocation3 + $0x50] sm:$0xff]
        %v2098 = vld [vmem:[#allocation3 + $0x58] sm:$0xff]
        %v2099 = vld [vmem:[#allocation3 + $0x60] sm:$0xff]
        %v2100 = vld [vmem:[#allocation3 + $0x68] sm:$0xff]
        %v2101 = vld [vmem:[%s1 + $0x80] sm:$0xf]
        %v2103 = vsel %vm246, %v2089, 0
        %v2106 = vsel %vm246, %v2090, 0
        %v2109 = vsel %vm246, %v2091, 0
        %v2112 = vsel %vm246, %v2092, 0
        %v2115 = vsel %vm246, %v2093, 0
        %v2118 = vsel %vm246, %v2094, 0
        %v2121 = vsel %vm246, %v2095, 0
        %v2124 = vsel %vm246, %v2096, 0
        %v2127 = vsel %vm246, %v2097, 0
        %v2130 = vsel %vm246, %v2098, 0
        %v2133 = vsel %vm246, %v2099, 0
        %v2136 = vsel %vm246, %v2100, 0
        %v2139 = vsel %vm283, %v2101, 0
        %2141 = vmatprep.subr.bf16.mxu0 0
        %2142 = vmatpush1.bf16.msra.mxu0 %v2139
        %2143 = vmatprep.subr.bf16.mxu0 0
        %2144 = vmatpush1.bf16.msra.mxu0 0
        %2145 = vmatprep.subr.bf16.mxu0 0
        %2146 = vmatpush1.bf16.msra.mxu0 0
        %2147 = vmatprep.subr.bf16.mxu0 0
        %2148 = vmatpush1.bf16.msra.mxu0 0
        %2149 = vmatprep.subr.bf16.mxu0 0
        %2150 = vmatpush1.bf16.msra.mxu0 0
        %2151 = vmatprep.subr.bf16.mxu0 0
        %2152 = vmatpush1.bf16.msra.mxu0 0
        %2153 = vmatprep.subr.bf16.mxu0 0
        %2154 = vmatpush1.bf16.msra.mxu0 0
        %2155 = vmatprep.subr.bf16.mxu0 0
        %2156 = vmatpush1.bf16.msra.mxu0 0
        %2157 = vmatprep.subr.bf16.mxu0 0
        %2158 = vmatpush1.bf16.msra.mxu0 0
        %2159 = vmatprep.subr.bf16.mxu0 0
        %2160 = vmatpush1.bf16.msra.mxu0 0
        %2161 = vmatprep.subr.bf16.mxu0 0
        %2162 = vmatpush1.bf16.msra.mxu0 0
        %2163 = vmatprep.subr.bf16.mxu0 0
        %2164 = vmatpush1.bf16.msra.mxu0 0
        %2165 = vmatprep.subr.bf16.mxu0 0
        %2166 = vmatpush1.bf16.msra.mxu0 0
        %2167 = vmatprep.subr.bf16.mxu0 0
        %2168 = vmatpush1.bf16.msra.mxu0 0
        %2169 = vmatprep.subr.bf16.mxu0 0
        %2170 = vmatpush1.bf16.msra.mxu0 0
        %2171 = vmatprep.subr.bf16.mxu0 0
        %2172 = vmatpush1.bf16.msra.mxu0 0
        %2173 = vmatprep.mubr.bf16.mxu0 0
        %2174 = vmatmul.mubr.bf16.gmra.mrb[0].mxu0 %v2103
        %v2175 = vpop.f32.mrb[0].mxu0
        %v2176 = vadd.f32 0.0, %v2175
        %v2177 = vpop.f32.mrb[0].mxu0
        %v2178 = vpop.f32.mrb[0].mxu0
        %v2179 = vadd.f32 0.0, %v2178
        %v2180 = vpop.f32.mrb[0].mxu0
        %2181 = vmatprep.mubr.bf16.mxu0 0
        %2182 = vmatmul.mubr.bf16.gmra.mrb[0].mxu0 %v2106
        %v2183 = vpop.f32.mrb[0].mxu0
        %v2184 = vadd.f32 0.0, %v2183
        %v2185 = vpop.f32.mrb[0].mxu0
        %v2186 = vpop.f32.mrb[0].mxu0
        %v2187 = vadd.f32 0.0, %v2186
        %v2188 = vpop.f32.mrb[0].mxu0
        %2189 = vmatprep.mubr.bf16.mxu0 0
        %2190 = vmatmul.mubr.bf16.gmra.mrb[0].mxu0 %v2109
        %v2191 = vpop.f32.mrb[0].mxu0
        %v2192 = vadd.f32 0.0, %v2191
        %v2193 = vpop.f32.mrb[0].mxu0
        %v2194 = vpop.f32.mrb[0].mxu0
        %v2195 = vadd.f32 0.0, %v2194
        %v2196 = vpop.f32.mrb[0].mxu0
        %2197 = vmatprep.mubr.bf16.mxu0 0
        %2198 = vmatmul.mubr.bf16.gmra.mrb[0].mxu0 %v2112
        %v2199 = vpop.f32.mrb[0].mxu0
        %v2200 = vadd.f32 0.0, %v2199
        %v2201 = vpop.f32.mrb[0].mxu0
        %v2202 = vpop.f32.mrb[0].mxu0
        %v2203 = vadd.f32 0.0, %v2202
        %v2204 = vpop.f32.mrb[0].mxu0
        %2205 = vmatprep.mubr.bf16.mxu0 0
        %2206 = vmatmul.mubr.bf16.gmra.mrb[0].mxu0 %v2115
        %v2207 = vpop.f32.mrb[0].mxu0
        %v2208 = vadd.f32 0.0, %v2207
        %v2209 = vpop.f32.mrb[0].mxu0
        %v2210 = vpop.f32.mrb[0].mxu0
        %v2211 = vadd.f32 0.0, %v2210
        %v2212 = vpop.f32.mrb[0].mxu0
        %2213 = vmatprep.mubr.bf16.mxu0 0
        %2214 = vmatmul.mubr.bf16.gmra.mrb[0].mxu0 %v2118
        %v2215 = vpop.f32.mrb[0].mxu0
        %v2216 = vadd.f32 0.0, %v2215
        %v2217 = vpop.f32.mrb[0].mxu0
        %v2218 = vpop.f32.mrb[0].mxu0
        %v2219 = vadd.f32 0.0, %v2218
        %v2220 = vpop.f32.mrb[0].mxu0
        %2221 = vmatprep.mubr.bf16.mxu0 0
        %2222 = vmatmul.mubr.bf16.gmra.mrb[0].mxu0 %v2121
        %v2223 = vpop.f32.mrb[0].mxu0
        %v2224 = vadd.f32 0.0, %v2223
        %v2225 = vpop.f32.mrb[0].mxu0
        %v2226 = vpop.f32.mrb[0].mxu0
        %v2227 = vadd.f32 0.0, %v2226
        %v2228 = vpop.f32.mrb[0].mxu0
        %2229 = vmatprep.mubr.bf16.mxu0 0
        %2230 = vmatmul.mubr.bf16.gmra.mrb[0].mxu0 %v2124
        %v2231 = vpop.f32.mrb[0].mxu0
        %v2232 = vadd.f32 0.0, %v2231
        %v2233 = vpop.f32.mrb[0].mxu0
        %v2234 = vpop.f32.mrb[0].mxu0
        %v2235 = vadd.f32 0.0, %v2234
        %v2236 = vpop.f32.mrb[0].mxu0
        %2237 = vmatprep.mubr.bf16.mxu0 0
        %2238 = vmatmul.mubr.bf16.gmra.mrb[0].mxu0 %v2127
        %v2239 = vpop.f32.mrb[0].mxu0
        %v2240 = vadd.f32 0.0, %v2239
        %v2241 = vpop.f32.mrb[0].mxu0
        %v2242 = vpop.f32.mrb[0].mxu0
        %v2243 = vadd.f32 0.0, %v2242
        %v2244 = vpop.f32.mrb[0].mxu0
        %2245 = vmatprep.mubr.bf16.mxu0 0
        %2246 = vmatmul.mubr.bf16.gmra.mrb[0].mxu0 %v2130
        %v2247 = vpop.f32.mrb[0].mxu0
        %v2248 = vadd.f32 0.0, %v2247
        %v2249 = vpop.f32.mrb[0].mxu0
        %v2250 = vpop.f32.mrb[0].mxu0
        %v2251 = vadd.f32 0.0, %v2250
        %v2252 = vpop.f32.mrb[0].mxu0
        %2253 = vmatprep.mubr.bf16.mxu0 0
        %2254 = vmatmul.mubr.bf16.gmra.mrb[0].mxu0 %v2133
        %v2255 = vpop.f32.mrb[0].mxu0
        %v2256 = vadd.f32 0.0, %v2255
        %v2257 = vpop.f32.mrb[0].mxu0
        %v2258 = vpop.f32.mrb[0].mxu0
        %v2259 = vadd.f32 0.0, %v2258
        %v2260 = vpop.f32.mrb[0].mxu0
        %2261 = vmatprep.mubr.bf16.mxu0 0
        %2262 = vmatmul.mubr.bf16.gmra.mrb[0].mxu0 %v2136
        %v2263 = vpop.f32.mrb[0].mxu0
        %v2264 = vadd.f32 0.0, %v2263
        %v2265 = vpop.f32.mrb[0].mxu0
        %v2266 = vpop.f32.mrb[0].mxu0
        %v2267 = vadd.f32 0.0, %v2266
        %v2268 = vpop.f32.mrb[0].mxu0
        %2269 = vdwg.mxu0
        %v2270 = vadd.f32 %v1995, %v2176
        %v2271 = vadd.f32 %v1998, %v2179
        %v2272 = vadd.f32 %v2003, %v2184
        %v2273 = vadd.f32 %v2006, %v2187
        %v2274 = vadd.f32 %v2011, %v2192
        %v2275 = vadd.f32 %v2014, %v2195
        %v2276 = vadd.f32 %v2019, %v2200
        %v2277 = vadd.f32 %v2022, %v2203
        %v2278 = vadd.f32 %v2027, %v2208
        %v2279 = vadd.f32 %v2030, %v2211
        %v2280 = vadd.f32 %v2035, %v2216
        %v2281 = vadd.f32 %v2038, %v2219
        %v2282 = vadd.f32 %v2043, %v2224
        %v2283 = vadd.f32 %v2046, %v2227
        %v2284 = vadd.f32 %v2051, %v2232
        %v2285 = vadd.f32 %v2054, %v2235
        %v2286 = vadd.f32 %v2059, %v2240
        %v2287 = vadd.f32 %v2062, %v2243
        %v2288 = vadd.f32 %v2067, %v2248
        %v2289 = vadd.f32 %v2070, %v2251
        %v2290 = vadd.f32 %v2075, %v2256
        %v2291 = vadd.f32 %v2078, %v2259
        %v2292 = vadd.f32 %v2083, %v2264
        %v2293 = vadd.f32 %v2086, %v2267
        %v2294 = vld [vmem:[#allocation3 + $0x18] sm:$0xff]
        %v2295 = vld [vmem:[#allocation3 + $0x20] sm:$0xff]
        %v2296 = vld [vmem:[#allocation3 + $0x28] sm:$0xff]
        %v2297 = vld [vmem:[#allocation3 + $0x30] sm:$0xff]
        %v2298 = vld [vmem:[#allocation3 + $0x38] sm:$0xff]
        %v2299 = vld [vmem:[#allocation3 + $0x40] sm:$0xff]
        %v2300 = vld [vmem:[#allocation3 + $0x48] sm:$0xff]
        %v2301 = vld [vmem:[#allocation3 + $0x50] sm:$0xff]
        %v2302 = vld [vmem:[#allocation3 + $0x58] sm:$0xff]
        %v2303 = vld [vmem:[#allocation3 + $0x60] sm:$0xff]
        %v2304 = vld [vmem:[#allocation3 + $0x68] sm:$0xff]
        %v2305 = vld [vmem:[#allocation3 + $0x70] sm:$0xff]
        %v2306 = vld [vmem:[%s1 + $0x88] sm:$0xf]
        %v2308 = vsel %vm246, %v2294, 0
        %v2311 = vsel %vm246, %v2295, 0
        %v2314 = vsel %vm246, %v2296, 0
        %v2317 = vsel %vm246, %v2297, 0
        %v2320 = vsel %vm246, %v2298, 0
        %v2323 = vsel %vm246, %v2299, 0
        %v2326 = vsel %vm246, %v2300, 0
        %v2329 = vsel %vm246, %v2301, 0
        %v2332 = vsel %vm246, %v2302, 0
        %v2335 = vsel %vm246, %v2303, 0
        %v2338 = vsel %vm246, %v2304, 0
        %v2341 = vsel %vm246, %v2305, 0
        %v2344 = vsel %vm283, %v2306, 0
        %2346 = vmatprep.subr.bf16.mxu0 0
        %2347 = vmatpush1.bf16.msra.mxu0 %v2344
        %2348 = vmatprep.subr.bf16.mxu0 0
        %2349 = vmatpush1.bf16.msra.mxu0 0
        %2350 = vmatprep.subr.bf16.mxu0 0
        %2351 = vmatpush1.bf16.msra.mxu0 0
        %2352 = vmatprep.subr.bf16.mxu0 0
        %2353 = vmatpush1.bf16.msra.mxu0 0
        %2354 = vmatprep.subr.bf16.mxu0 0
        %2355 = vmatpush1.bf16.msra.mxu0 0
        %2356 = vmatprep.subr.bf16.mxu0 0
        %2357 = vmatpush1.bf16.msra.mxu0 0
        %2358 = vmatprep.subr.bf16.mxu0 0
        %2359 = vmatpush1.bf16.msra.mxu0 0
        %2360 = vmatprep.subr.bf16.mxu0 0
        %2361 = vmatpush1.bf16.msra.mxu0 0
        %2362 = vmatprep.subr.bf16.mxu0 0
        %2363 = vmatpush1.bf16.msra.mxu0 0
        %2364 = vmatprep.subr.bf16.mxu0 0
        %2365 = vmatpush1.bf16.msra.mxu0 0
        %2366 = vmatprep.subr.bf16.mxu0 0
        %2367 = vmatpush1.bf16.msra.mxu0 0
        %2368 = vmatprep.subr.bf16.mxu0 0
        %2369 = vmatpush1.bf16.msra.mxu0 0
        %2370 = vmatprep.subr.bf16.mxu0 0
        %2371 = vmatpush1.bf16.msra.mxu0 0
        %2372 = vmatprep.subr.bf16.mxu0 0
        %2373 = vmatpush1.bf16.msra.mxu0 0
        %2374 = vmatprep.subr.bf16.mxu0 0
        %2375 = vmatpush1.bf16.msra.mxu0 0
        %2376 = vmatprep.subr.bf16.mxu0 0
        %2377 = vmatpush1.bf16.msra.mxu0 0
        %2378 = vmatprep.mubr.bf16.mxu0 0
        %2379 = vmatmul.mubr.bf16.gmra.mrb[0].mxu0 %v2308
        %v2380 = vpop.f32.mrb[0].mxu0
        %v2381 = vadd.f32 0.0, %v2380
        %v2382 = vpop.f32.mrb[0].mxu0
        %v2383 = vpop.f32.mrb[0].mxu0
        %v2384 = vadd.f32 0.0, %v2383
        %v2385 = vpop.f32.mrb[0].mxu0
        %2386 = vmatprep.mubr.bf16.mxu0 0
        %2387 = vmatmul.mubr.bf16.gmra.mrb[0].mxu0 %v2311
        %v2388 = vpop.f32.mrb[0].mxu0
        %v2389 = vadd.f32 0.0, %v2388
        %v2390 = vpop.f32.mrb[0].mxu0
        %v2391 = vpop.f32.mrb[0].mxu0
        %v2392 = vadd.f32 0.0, %v2391
        %v2393 = vpop.f32.mrb[0].mxu0
        %2394 = vmatprep.mubr.bf16.mxu0 0
        %2395 = vmatmul.mubr.bf16.gmra.mrb[0].mxu0 %v2314
        %v2396 = vpop.f32.mrb[0].mxu0
        %v2397 = vadd.f32 0.0, %v2396
        %v2398 = vpop.f32.mrb[0].mxu0
        %v2399 = vpop.f32.mrb[0].mxu0
        %v2400 = vadd.f32 0.0, %v2399
        %v2401 = vpop.f32.mrb[0].mxu0
        %2402 = vmatprep.mubr.bf16.mxu0 0
        %2403 = vmatmul.mubr.bf16.gmra.mrb[0].mxu0 %v2317
        %v2404 = vpop.f32.mrb[0].mxu0
        %v2405 = vadd.f32 0.0, %v2404
        %v2406 = vpop.f32.mrb[0].mxu0
        %v2407 = vpop.f32.mrb[0].mxu0
        %v2408 = vadd.f32 0.0, %v2407
        %v2409 = vpop.f32.mrb[0].mxu0
        %2410 = vmatprep.mubr.bf16.mxu0 0
        %2411 = vmatmul.mubr.bf16.gmra.mrb[0].mxu0 %v2320
        %v2412 = vpop.f32.mrb[0].mxu0
        %v2413 = vadd.f32 0.0, %v2412
        %v2414 = vpop.f32.mrb[0].mxu0
        %v2415 = vpop.f32.mrb[0].mxu0
        %v2416 = vadd.f32 0.0, %v2415
        %v2417 = vpop.f32.mrb[0].mxu0
        %2418 = vmatprep.mubr.bf16.mxu0 0
        %2419 = vmatmul.mubr.bf16.gmra.mrb[0].mxu0 %v2323
        %v2420 = vpop.f32.mrb[0].mxu0
        %v2421 = vadd.f32 0.0, %v2420
        %v2422 = vpop.f32.mrb[0].mxu0
        %v2423 = vpop.f32.mrb[0].mxu0
        %v2424 = vadd.f32 0.0, %v2423
        %v2425 = vpop.f32.mrb[0].mxu0
        %2426 = vmatprep.mubr.bf16.mxu0 0
        %2427 = vmatmul.mubr.bf16.gmra.mrb[0].mxu0 %v2326
        %v2428 = vpop.f32.mrb[0].mxu0
        %v2429 = vadd.f32 0.0, %v2428
        %v2430 = vpop.f32.mrb[0].mxu0
        %v2431 = vpop.f32.mrb[0].mxu0
        %v2432 = vadd.f32 0.0, %v2431
        %v2433 = vpop.f32.mrb[0].mxu0
        %2434 = vmatprep.mubr.bf16.mxu0 0
        %2435 = vmatmul.mubr.bf16.gmra.mrb[0].mxu0 %v2329
        %v2436 = vpop.f32.mrb[0].mxu0
        %v2437 = vadd.f32 0.0, %v2436
        %v2438 = vpop.f32.mrb[0].mxu0
        %v2439 = vpop.f32.mrb[0].mxu0
        %v2440 = vadd.f32 0.0, %v2439
        %v2441 = vpop.f32.mrb[0].mxu0
        %2442 = vmatprep.mubr.bf16.mxu0 0
        %2443 = vmatmul.mubr.bf16.gmra.mrb[0].mxu0 %v2332
        %v2444 = vpop.f32.mrb[0].mxu0
        %v2445 = vadd.f32 0.0, %v2444
        %v2446 = vpop.f32.mrb[0].mxu0
        %v2447 = vpop.f32.mrb[0].mxu0
        %v2448 = vadd.f32 0.0, %v2447
        %v2449 = vpop.f32.mrb[0].mxu0
        %2450 = vmatprep.mubr.bf16.mxu0 0
        %2451 = vmatmul.mubr.bf16.gmra.mrb[0].mxu0 %v2335
        %v2452 = vpop.f32.mrb[0].mxu0
        %v2453 = vadd.f32 0.0, %v2452
        %v2454 = vpop.f32.mrb[0].mxu0
        %v2455 = vpop.f32.mrb[0].mxu0
        %v2456 = vadd.f32 0.0, %v2455
        %v2457 = vpop.f32.mrb[0].mxu0
        %2458 = vmatprep.mubr.bf16.mxu0 0
        %2459 = vmatmul.mubr.bf16.gmra.mrb[0].mxu0 %v2338
        %v2460 = vpop.f32.mrb[0].mxu0
        %v2461 = vadd.f32 0.0, %v2460
        %v2462 = vpop.f32.mrb[0].mxu0
        %v2463 = vpop.f32.mrb[0].mxu0
        %v2464 = vadd.f32 0.0, %v2463
        %v2465 = vpop.f32.mrb[0].mxu0
        %2466 = vmatprep.mubr.bf16.mxu0 0
        %2467 = vmatmul.mubr.bf16.gmra.mrb[0].mxu0 %v2341
        %v2468 = vpop.f32.mrb[0].mxu0
        %v2469 = vadd.f32 0.0, %v2468
        %v2470 = vpop.f32.mrb[0].mxu0
        %v2471 = vpop.f32.mrb[0].mxu0
        %v2472 = vadd.f32 0.0, %v2471
        %v2473 = vpop.f32.mrb[0].mxu0
        %2474 = vdwg.mxu0
        %v2475 = vadd.f32 %v2270, %v2381
        %v2476 = vadd.f32 %v2271, %v2384
        %v2477 = vadd.f32 %v2272, %v2389
        %v2478 = vadd.f32 %v2273, %v2392
        %v2479 = vadd.f32 %v2274, %v2397
        %v2480 = vadd.f32 %v2275, %v2400
        %v2481 = vadd.f32 %v2276, %v2405
        %v2482 = vadd.f32 %v2277, %v2408
        %v2483 = vadd.f32 %v2278, %v2413
        %v2484 = vadd.f32 %v2279, %v2416
        %v2485 = vadd.f32 %v2280, %v2421
        %v2486 = vadd.f32 %v2281, %v2424
        %v2487 = vadd.f32 %v2282, %v2429
        %v2488 = vadd.f32 %v2283, %v2432
        %v2489 = vadd.f32 %v2284, %v2437
        %v2490 = vadd.f32 %v2285, %v2440
        %v2491 = vadd.f32 %v2286, %v2445
        %v2492 = vadd.f32 %v2287, %v2448
        %v2493 = vadd.f32 %v2288, %v2453
        %v2494 = vadd.f32 %v2289, %v2456
        %v2495 = vadd.f32 %v2290, %v2461
        %v2496 = vadd.f32 %v2291, %v2464
        %v2497 = vadd.f32 %v2292, %v2469
        %v2498 = vadd.f32 %v2293, %v2472
        %v2499 = vld [vmem:[#allocation3 + $0x20] sm:$0xff]
        %v2500 = vld [vmem:[#allocation3 + $0x28] sm:$0xff]
        %v2501 = vld [vmem:[#allocation3 + $0x30] sm:$0xff]
        %v2502 = vld [vmem:[#allocation3 + $0x38] sm:$0xff]
        %v2503 = vld [vmem:[#allocation3 + $0x40] sm:$0xff]
        %v2504 = vld [vmem:[#allocation3 + $0x48] sm:$0xff]
        %v2505 = vld [vmem:[#allocation3 + $0x50] sm:$0xff]
        %v2506 = vld [vmem:[#allocation3 + $0x58] sm:$0xff]
        %v2507 = vld [vmem:[#allocation3 + $0x60] sm:$0xff]
        %v2508 = vld [vmem:[#allocation3 + $0x68] sm:$0xff]
        %v2509 = vld [vmem:[#allocation3 + $0x70] sm:$0xff]
        %v2510 = vld [vmem:[#allocation3 + $0x78] sm:$0xff]
        %v2511 = vld [vmem:[%s1 + $0x90] sm:$0xf]
        %v2513 = vsel %vm246, %v2499, 0
        %v2516 = vsel %vm246, %v2500, 0
        %v2519 = vsel %vm246, %v2501, 0
        %v2522 = vsel %vm246, %v2502, 0
        %v2525 = vsel %vm246, %v2503, 0
        %v2528 = vsel %vm246, %v2504, 0
        %v2531 = vsel %vm246, %v2505, 0
        %v2534 = vsel %vm246, %v2506, 0
        %v2537 = vsel %vm246, %v2507, 0
        %v2540 = vsel %vm246, %v2508, 0
        %v2543 = vsel %vm246, %v2509, 0
        %v2546 = vsel %vm246, %v2510, 0
        %v2549 = vsel %vm283, %v2511, 0
        %2551 = vmatprep.subr.bf16.mxu0 0
        %2552 = vmatpush1.bf16.msra.mxu0 %v2549
        %2553 = vmatprep.subr.bf16.mxu0 0
        %2554 = vmatpush1.bf16.msra.mxu0 0
        %2555 = vmatprep.subr.bf16.mxu0 0
        %2556 = vmatpush1.bf16.msra.mxu0 0
        %2557 = vmatprep.subr.bf16.mxu0 0
        %2558 = vmatpush1.bf16.msra.mxu0 0
        %2559 = vmatprep.subr.bf16.mxu0 0
        %2560 = vmatpush1.bf16.msra.mxu0 0
        %2561 = vmatprep.subr.bf16.mxu0 0
        %2562 = vmatpush1.bf16.msra.mxu0 0
        %2563 = vmatprep.subr.bf16.mxu0 0
        %2564 = vmatpush1.bf16.msra.mxu0 0
        %2565 = vmatprep.subr.bf16.mxu0 0
        %2566 = vmatpush1.bf16.msra.mxu0 0
        %2567 = vmatprep.subr.bf16.mxu0 0
        %2568 = vmatpush1.bf16.msra.mxu0 0
        %2569 = vmatprep.subr.bf16.mxu0 0
        %2570 = vmatpush1.bf16.msra.mxu0 0
        %2571 = vmatprep.subr.bf16.mxu0 0
        %2572 = vmatpush1.bf16.msra.mxu0 0
        %2573 = vmatprep.subr.bf16.mxu0 0
        %2574 = vmatpush1.bf16.msra.mxu0 0
        %2575 = vmatprep.subr.bf16.mxu0 0
        %2576 = vmatpush1.bf16.msra.mxu0 0
        %2577 = vmatprep.subr.bf16.mxu0 0
        %2578 = vmatpush1.bf16.msra.mxu0 0
        %2579 = vmatprep.subr.bf16.mxu0 0
        %2580 = vmatpush1.bf16.msra.mxu0 0
        %2581 = vmatprep.subr.bf16.mxu0 0
        %2582 = vmatpush1.bf16.msra.mxu0 0
        %2583 = vmatprep.mubr.bf16.mxu0 0
        %2584 = vmatmul.mubr.bf16.gmra.mrb[0].mxu0 %v2513
        %v2585 = vpop.f32.mrb[0].mxu0
        %v2586 = vadd.f32 0.0, %v2585
        %v2587 = vpop.f32.mrb[0].mxu0
        %v2588 = vpop.f32.mrb[0].mxu0
        %v2589 = vadd.f32 0.0, %v2588
        %v2590 = vpop.f32.mrb[0].mxu0
        %2591 = vmatprep.mubr.bf16.mxu0 0
        %2592 = vmatmul.mubr.bf16.gmra.mrb[0].mxu0 %v2516
        %v2593 = vpop.f32.mrb[0].mxu0
        %v2594 = vadd.f32 0.0, %v2593
        %v2595 = vpop.f32.mrb[0].mxu0
        %v2596 = vpop.f32.mrb[0].mxu0
        %v2597 = vadd.f32 0.0, %v2596
        %v2598 = vpop.f32.mrb[0].mxu0
        %2599 = vmatprep.mubr.bf16.mxu0 0
        %2600 = vmatmul.mubr.bf16.gmra.mrb[0].mxu0 %v2519
        %v2601 = vpop.f32.mrb[0].mxu0
        %v2602 = vadd.f32 0.0, %v2601
        %v2603 = vpop.f32.mrb[0].mxu0
        %v2604 = vpop.f32.mrb[0].mxu0
        %v2605 = vadd.f32 0.0, %v2604
        %v2606 = vpop.f32.mrb[0].mxu0
        %2607 = vmatprep.mubr.bf16.mxu0 0
        %2608 = vmatmul.mubr.bf16.gmra.mrb[0].mxu0 %v2522
        %v2609 = vpop.f32.mrb[0].mxu0
        %v2610 = vadd.f32 0.0, %v2609
        %v2611 = vpop.f32.mrb[0].mxu0
        %v2612 = vpop.f32.mrb[0].mxu0
        %v2613 = vadd.f32 0.0, %v2612
        %v2614 = vpop.f32.mrb[0].mxu0
        %2615 = vmatprep.mubr.bf16.mxu0 0
        %2616 = vmatmul.mubr.bf16.gmra.mrb[0].mxu0 %v2525
        %v2617 = vpop.f32.mrb[0].mxu0
        %v2618 = vadd.f32 0.0, %v2617
        %v2619 = vpop.f32.mrb[0].mxu0
        %v2620 = vpop.f32.mrb[0].mxu0
        %v2621 = vadd.f32 0.0, %v2620
        %v2622 = vpop.f32.mrb[0].mxu0
        %2623 = vmatprep.mubr.bf16.mxu0 0
        %2624 = vmatmul.mubr.bf16.gmra.mrb[0].mxu0 %v2528
        %v2625 = vpop.f32.mrb[0].mxu0
        %v2626 = vadd.f32 0.0, %v2625
        %v2627 = vpop.f32.mrb[0].mxu0
        %v2628 = vpop.f32.mrb[0].mxu0
        %v2629 = vadd.f32 0.0, %v2628
        %v2630 = vpop.f32.mrb[0].mxu0
        %2631 = vmatprep.mubr.bf16.mxu0 0
        %2632 = vmatmul.mubr.bf16.gmra.mrb[0].mxu0 %v2531
        %v2633 = vpop.f32.mrb[0].mxu0
        %v2634 = vadd.f32 0.0, %v2633
        %v2635 = vpop.f32.mrb[0].mxu0
        %v2636 = vpop.f32.mrb[0].mxu0
        %v2637 = vadd.f32 0.0, %v2636
        %v2638 = vpop.f32.mrb[0].mxu0
        %2639 = vmatprep.mubr.bf16.mxu0 0
        %2640 = vmatmul.mubr.bf16.gmra.mrb[0].mxu0 %v2534
        %v2641 = vpop.f32.mrb[0].mxu0
        %v2642 = vadd.f32 0.0, %v2641
        %v2643 = vpop.f32.mrb[0].mxu0
        %v2644 = vpop.f32.mrb[0].mxu0
        %v2645 = vadd.f32 0.0, %v2644
        %v2646 = vpop.f32.mrb[0].mxu0
        %2647 = vmatprep.mubr.bf16.mxu0 0
        %2648 = vmatmul.mubr.bf16.gmra.mrb[0].mxu0 %v2537
        %v2649 = vpop.f32.mrb[0].mxu0
        %v2650 = vadd.f32 0.0, %v2649
        %v2651 = vpop.f32.mrb[0].mxu0
        %v2652 = vpop.f32.mrb[0].mxu0
        %v2653 = vadd.f32 0.0, %v2652
        %v2654 = vpop.f32.mrb[0].mxu0
        %2655 = vmatprep.mubr.bf16.mxu0 0
        %2656 = vmatmul.mubr.bf16.gmra.mrb[0].mxu0 %v2540
        %v2657 = vpop.f32.mrb[0].mxu0
        %v2658 = vadd.f32 0.0, %v2657
        %v2659 = vpop.f32.mrb[0].mxu0
        %v2660 = vpop.f32.mrb[0].mxu0
        %v2661 = vadd.f32 0.0, %v2660
        %v2662 = vpop.f32.mrb[0].mxu0
        %2663 = vmatprep.mubr.bf16.mxu0 0
        %2664 = vmatmul.mubr.bf16.gmra.mrb[0].mxu0 %v2543
        %v2665 = vpop.f32.mrb[0].mxu0
        %v2666 = vadd.f32 0.0, %v2665
        %v2667 = vpop.f32.mrb[0].mxu0
        %v2668 = vpop.f32.mrb[0].mxu0
        %v2669 = vadd.f32 0.0, %v2668
        %v2670 = vpop.f32.mrb[0].mxu0
        %2671 = vmatprep.mubr.bf16.mxu0 0
        %2672 = vmatmul.mubr.bf16.gmra.mrb[0].mxu0 %v2546
        %v2673 = vpop.f32.mrb[0].mxu0
        %v2674 = vadd.f32 0.0, %v2673
        %v2675 = vpop.f32.mrb[0].mxu0
        %v2676 = vpop.f32.mrb[0].mxu0
        %v2677 = vadd.f32 0.0, %v2676
        %v2678 = vpop.f32.mrb[0].mxu0
        %2679 = vdwg.mxu0
        %v2680 = vadd.f32 %v2475, %v2586
        %v2681 = vadd.f32 %v2476, %v2589
        %v2682 = vadd.f32 %v2477, %v2594
        %v2683 = vadd.f32 %v2478, %v2597
        %v2684 = vadd.f32 %v2479, %v2602
        %v2685 = vadd.f32 %v2480, %v2605
        %v2686 = vadd.f32 %v2481, %v2610
        %v2687 = vadd.f32 %v2482, %v2613
        %v2688 = vadd.f32 %v2483, %v2618
        %v2689 = vadd.f32 %v2484, %v2621
        %v2690 = vadd.f32 %v2485, %v2626
        %v2691 = vadd.f32 %v2486, %v2629
        %v2692 = vadd.f32 %v2487, %v2634
        %v2693 = vadd.f32 %v2488, %v2637
        %v2694 = vadd.f32 %v2489, %v2642
        %v2695 = vadd.f32 %v2490, %v2645
        %v2696 = vadd.f32 %v2491, %v2650
        %v2697 = vadd.f32 %v2492, %v2653
        %v2698 = vadd.f32 %v2493, %v2658
        %v2699 = vadd.f32 %v2494, %v2661
        %v2700 = vadd.f32 %v2495, %v2666
        %v2701 = vadd.f32 %v2496, %v2669
        %v2702 = vadd.f32 %v2497, %v2674
        %v2703 = vadd.f32 %v2498, %v2677
        %v2704 = vlaneseq
        %v2705 = vshrl.u32 %v2704, 7
        %v2706 = vsub.s32 0, %v2705
        %v2707 = vrot.slane %v204, %v2706
        %v2708 = vadd.f32 %v2680, %v2707
        %v2709 = vadd.f32 %v2681, %v2707
        %v2710 = vadd.f32 %v2682, %v2707
        %v2711 = vadd.f32 %v2683, %v2707
        %v2712 = vadd.f32 %v2684, %v2707
        %v2713 = vadd.f32 %v2685, %v2707
        %v2714 = vadd.f32 %v2686, %v2707
        %v2715 = vadd.f32 %v2687, %v2707
        %v2716 = vadd.f32 %v2688, %v2707
        %v2717 = vadd.f32 %v2689, %v2707
        %v2718 = vadd.f32 %v2690, %v2707
        %v2719 = vadd.f32 %v2691, %v2707
        %v2720 = vadd.f32 %v2692, %v2707
        %v2721 = vadd.f32 %v2693, %v2707
        %v2722 = vadd.f32 %v2694, %v2707
        %v2723 = vadd.f32 %v2695, %v2707
        %v2724 = vadd.f32 %v2696, %v2707
        %v2725 = vadd.f32 %v2697, %v2707
        %v2726 = vadd.f32 %v2698, %v2707
        %v2727 = vadd.f32 %v2699, %v2707
        %v2728 = vadd.f32 %v2700, %v2707
        %v2729 = vadd.f32 %v2701, %v2707
        %v2730 = vadd.f32 %v2702, %v2707
        %v2731 = vadd.f32 %v2703, %v2707
        %v2732 = vxor.u32 %v2708, 2147483648
        %v2733 = vxor.u32 %v2709, 2147483648
        %v2734 = vxor.u32 %v2710, 2147483648
        %v2735 = vxor.u32 %v2711, 2147483648
        %v2736 = vxor.u32 %v2712, 2147483648
        %v2737 = vxor.u32 %v2713, 2147483648
        %v2738 = vxor.u32 %v2714, 2147483648
        %v2739 = vxor.u32 %v2715, 2147483648
        %v2740 = vxor.u32 %v2716, 2147483648
        %v2741 = vxor.u32 %v2717, 2147483648
        %v2742 = vxor.u32 %v2718, 2147483648
        %v2743 = vxor.u32 %v2719, 2147483648
        %v2744 = vxor.u32 %v2720, 2147483648
        %v2745 = vxor.u32 %v2721, 2147483648
        %v2746 = vxor.u32 %v2722, 2147483648
        %v2747 = vxor.u32 %v2723, 2147483648
        %v2748 = vxor.u32 %v2724, 2147483648
        %v2749 = vxor.u32 %v2725, 2147483648
        %v2750 = vxor.u32 %v2726, 2147483648
        %v2751 = vxor.u32 %v2727, 2147483648
        %v2752 = vxor.u32 %v2728, 2147483648
        %v2753 = vxor.u32 %v2729, 2147483648
        %v2754 = vxor.u32 %v2730, 2147483648
        %v2755 = vxor.u32 %v2731, 2147483648
        %v2756 = vmul.f32 %v2732, 1.442695
        %v2757 = vpow.pop %v2756
        %v2758 = vmul.f32 %v2733, 1.442695
        %v2759 = vpow.pop %v2758
        %v2760 = vmul.f32 %v2734, 1.442695
        %v2761 = vpow.pop %v2760
        %v2762 = vmul.f32 %v2735, 1.442695
        %v2763 = vpow.pop %v2762
        %v2764 = vmul.f32 %v2736, 1.442695
        %v2765 = vpow.pop %v2764
        %v2766 = vmul.f32 %v2737, 1.442695
        %v2767 = vpow.pop %v2766
        %v2768 = vmul.f32 %v2738, 1.442695
        %v2769 = vpow.pop %v2768
        %v2770 = vmul.f32 %v2739, 1.442695
        %v2771 = vpow.pop %v2770
        %v2772 = vmul.f32 %v2740, 1.442695
        %v2773 = vpow.pop %v2772
        %v2774 = vmul.f32 %v2741, 1.442695
        %v2775 = vpow.pop %v2774
        %v2776 = vmul.f32 %v2742, 1.442695
        %v2777 = vpow.pop %v2776
        %v2778 = vmul.f32 %v2743, 1.442695
        %v2779 = vpow.pop %v2778
        %v2780 = vmul.f32 %v2744, 1.442695
        %v2781 = vpow.pop %v2780
        %v2782 = vmul.f32 %v2745, 1.442695
        %v2783 = vpow.pop %v2782
        %v2784 = vmul.f32 %v2746, 1.442695
        %v2785 = vpow.pop %v2784
        %v2786 = vmul.f32 %v2747, 1.442695
        %v2787 = vpow.pop %v2786
        %v2788 = vmul.f32 %v2748, 1.442695
        %v2789 = vpow.pop %v2788
        %v2790 = vmul.f32 %v2749, 1.442695
        %v2791 = vpow.pop %v2790
        %v2792 = vmul.f32 %v2750, 1.442695
        %v2793 = vpow.pop %v2792
        %v2794 = vmul.f32 %v2751, 1.442695
        %v2795 = vpow.pop %v2794
        %v2796 = vmul.f32 %v2752, 1.442695
        %v2797 = vpow.pop %v2796
        %v2798 = vmul.f32 %v2753, 1.442695
        %v2799 = vpow.pop %v2798
        %v2800 = vmul.f32 %v2754, 1.442695
        %v2801 = vpow.pop %v2800
        %v2802 = vmul.f32 %v2755, 1.442695
        %v2803 = vpow.pop %v2802
        %v2804 = vadd.f32 %v2757, 1.0
        %v2805 = vadd.f32 %v2759, 1.0
        %v2806 = vadd.f32 %v2761, 1.0
        %v2807 = vadd.f32 %v2763, 1.0
        %v2808 = vadd.f32 %v2765, 1.0
        %v2809 = vadd.f32 %v2767, 1.0
        %v2810 = vadd.f32 %v2769, 1.0
        %v2811 = vadd.f32 %v2771, 1.0
        %v2812 = vadd.f32 %v2773, 1.0
        %v2813 = vadd.f32 %v2775, 1.0
        %v2814 = vadd.f32 %v2777, 1.0
        %v2815 = vadd.f32 %v2779, 1.0
        %v2816 = vadd.f32 %v2781, 1.0
        %v2817 = vadd.f32 %v2783, 1.0
        %v2818 = vadd.f32 %v2785, 1.0
        %v2819 = vadd.f32 %v2787, 1.0
        %v2820 = vadd.f32 %v2789, 1.0
        %v2821 = vadd.f32 %v2791, 1.0
        %v2822 = vadd.f32 %v2793, 1.0
        %v2823 = vadd.f32 %v2795, 1.0
        %v2824 = vadd.f32 %v2797, 1.0
        %v2825 = vadd.f32 %v2799, 1.0
        %v2826 = vadd.f32 %v2801, 1.0
        %v2827 = vadd.f32 %v2803, 1.0
        %v2828 = vrcp.pop %v2804
        %v2829 = vmul.f32 1.0, %v2828
        %v2830 = vrcp.pop %v2805
        %v2831 = vmul.f32 1.0, %v2830
        %v2832 = vrcp.pop %v2806
        %v2833 = vmul.f32 1.0, %v2832
        %v2834 = vrcp.pop %v2807
        %v2835 = vmul.f32 1.0, %v2834
        %v2836 = vrcp.pop %v2808
        %v2837 = vmul.f32 1.0, %v2836
        %v2838 = vrcp.pop %v2809
        %v2839 = vmul.f32 1.0, %v2838
        %v2840 = vrcp.pop %v2810
        %v2841 = vmul.f32 1.0, %v2840
        %v2842 = vrcp.pop %v2811
        %v2843 = vmul.f32 1.0, %v2842
        %v2844 = vrcp.pop %v2812
        %v2845 = vmul.f32 1.0, %v2844
        %v2846 = vrcp.pop %v2813
        %v2847 = vmul.f32 1.0, %v2846
        %v2848 = vrcp.pop %v2814
        %v2849 = vmul.f32 1.0, %v2848
        %v2850 = vrcp.pop %v2815
        %v2851 = vmul.f32 1.0, %v2850
        %v2852 = vrcp.pop %v2816
        %v2853 = vmul.f32 1.0, %v2852
        %v2854 = vrcp.pop %v2817
        %v2855 = vmul.f32 1.0, %v2854
        %v2856 = vrcp.pop %v2818
        %v2857 = vmul.f32 1.0, %v2856
        %v2858 = vrcp.pop %v2819
        %v2859 = vmul.f32 1.0, %v2858
        %v2860 = vrcp.pop %v2820
        %v2861 = vmul.f32 1.0, %v2860
        %v2862 = vrcp.pop %v2821
        %v2863 = vmul.f32 1.0, %v2862
        %v2864 = vrcp.pop %v2822
        %v2865 = vmul.f32 1.0, %v2864
        %v2866 = vrcp.pop %v2823
        %v2867 = vmul.f32 1.0, %v2866
        %v2868 = vrcp.pop %v2824
        %v2869 = vmul.f32 1.0, %v2868
        %v2870 = vrcp.pop %v2825
        %v2871 = vmul.f32 1.0, %v2870
        %v2872 = vrcp.pop %v2826
        %v2873 = vmul.f32 1.0, %v2872
        %v2874 = vrcp.pop %v2827
        %v2875 = vmul.f32 1.0, %v2874
        %v2876 = vmul.f32 %v645, %v2829
        %v2877 = vmul.f32 %v646, %v2831
        %v2878 = vmul.f32 %v647, %v2833
        %v2879 = vmul.f32 %v648, %v2835
        %v2880 = vmul.f32 %v649, %v2837
        %v2881 = vmul.f32 %v650, %v2839
        %v2882 = vmul.f32 %v651, %v2841
        %v2883 = vmul.f32 %v652, %v2843
        %v2884 = vmul.f32 %v653, %v2845
        %v2885 = vmul.f32 %v654, %v2847
        %v2886 = vmul.f32 %v655, %v2849
        %v2887 = vmul.f32 %v656, %v2851
        %v2888 = vmul.f32 %v657, %v2853
        %v2889 = vmul.f32 %v658, %v2855
        %v2890 = vmul.f32 %v659, %v2857
        %v2891 = vmul.f32 %v660, %v2859
        %v2892 = vmul.f32 %v661, %v2861
        %v2893 = vmul.f32 %v662, %v2863
        %v2894 = vmul.f32 %v663, %v2865
        %v2895 = vmul.f32 %v664, %v2867
        %v2896 = vmul.f32 %v665, %v2869
        %v2897 = vmul.f32 %v666, %v2871
        %v2898 = vmul.f32 %v667, %v2873
        %v2899 = vmul.f32 %v668, %v2875
        %2900 = vst.msk [vmem:[%s188] sm:$0xff] %vm669, %v2876
        %2901 = vst.msk [vmem:[%s188 + $0x8] sm:$0xff] %vm669, %v2877
        %2902 = vst.msk [vmem:[%s188 + $0x10] sm:$0xff] %vm669, %v2878
        %2903 = vst.msk [vmem:[%s188 + $0x18] sm:$0xff] %vm669, %v2879
        %2904 = vst.msk [vmem:[%s188 + $0x20] sm:$0xff] %vm669, %v2880
        %2905 = vst.msk [vmem:[%s188 + $0x28] sm:$0xff] %vm669, %v2881
        %2906 = vst.msk [vmem:[%s188 + $0x30] sm:$0xff] %vm669, %v2882
        %2907 = vst.msk [vmem:[%s188 + $0x38] sm:$0xff] %vm669, %v2883
        %2908 = vst.msk [vmem:[%s188 + $0x40] sm:$0xff] %vm669, %v2884
        %2909 = vst.msk [vmem:[%s188 + $0x48] sm:$0xff] %vm669, %v2885
        %2910 = vst.msk [vmem:[%s188 + $0x50] sm:$0xff] %vm669, %v2886
        %2911 = vst.msk [vmem:[%s188 + $0x58] sm:$0xff] %vm669, %v2887
        %2912 = vst.msk [vmem:[%s188 + $0x60] sm:$0xff] %vm669, %v2888
        %2913 = vst.msk [vmem:[%s188 + $0x68] sm:$0xff] %vm669, %v2889
        %2914 = vst.msk [vmem:[%s188 + $0x70] sm:$0xff] %vm669, %v2890
        %2915 = vst.msk [vmem:[%s188 + $0x78] sm:$0xff] %vm669, %v2891
        %2916 = vst.msk [vmem:[%s188 + $0x80] sm:$0xff] %vm669, %v2892
        %2917 = vst.msk [vmem:[%s188 + $0x88] sm:$0xff] %vm669, %v2893
        %2918 = vst.msk [vmem:[%s188 + $0x90] sm:$0xff] %vm669, %v2894
        %2919 = vst.msk [vmem:[%s188 + $0x98] sm:$0xff] %vm669, %v2895
        %2920 = vst.msk [vmem:[%s188 + $0xa0] sm:$0xff] %vm669, %v2896
        %2921 = vst.msk [vmem:[%s188 + $0xa8] sm:$0xff] %vm669, %v2897
        %2922 = vst.msk [vmem:[%s188 + $0xb0] sm:$0xff] %vm669, %v2898
        %2923 = vst.msk [vmem:[%s188 + $0xb8] sm:$0xff] %vm669, %v2899
        %s2924 = sand.u32 %s109, 1
        %s2925 = scalar_lea.sflag [#allocation5], %s2924
        %s2926 = sand.u32 %s109, 1
        %s2927 = smul.addr %s2926, 192
        %s2928 = scalar_lea.vmem [#allocation4], %s2927
        // Predicated region
        $region33: #{tpu_custom_call.1} parent=31 // pred_check
          %p2929 = pneg %p119
        $region34: #{tpu_custom_call.1} parent=31 // pred_check_branch
          %2931 = sbr.rel (%p2929) target = $region36
        $region35: #{tpu_custom_call.1} parent=31 // pred_region
          %s2932 = smul.u32 2, %s22
          %s2934 = ssub.s32 3072, 3072
          %2935 = vsyncadd %s2925, %s2934
          %s2936 = smul.addr %s21, 24
          %s2937 = sadd.s32 %s2932, %s2936
          %s2938 = smul.addr %s2937, 128
          %s2939 = scalar_lea.hbm %s3, %s2938
          %s2940 = sshll.u32 %s2928, 4
          %s2941 = int_to_ptr.vmem [resolvable:$true] %s2940
          %2946 = dma.vmem_to_hbm [thread:$0]  %s2941, 3072, %s2939, %s2925, 128, 128, 8
        $region36: #{tpu_custom_call.1} parent=31 // pred_fallthru
          _
      $region32: #{tpu_custom_call.1} parent=5 // pred_fallthru
        _
      %p2947 = scmp.le.s32.totalorder 2, %s12
      // Predicated region
      $region37: #{tpu_custom_call.1} parent=5 // pred_check
        %p2948 = pneg %p2947
      $region38: #{tpu_custom_call.1} parent=5 // pred_check_branch
        %2950 = sbr.rel (%p2948) target = $region40
      $region39: #{tpu_custom_call.1} parent=5 // pred_region
        %s2951 = ssub.s32 %s12, 2
        // Predicated region
        $region41: #{tpu_custom_call.1} parent=39 // pred_check
          %p2952 = pneg %p125
        $region42: #{tpu_custom_call.1} parent=39 // pred_check_branch
          %2954 = sbr.rel (%p2952) target = $region44
        $region43: #{tpu_custom_call.1} parent=39 // pred_region
          %s2955 = sand.u32 %s110, 1
          %s2956 = scalar_lea.sflag [#allocation5], %s2955
          %s2957 = sand.u32 %s110, 1
          %s2958 = smul.addr %s2957, 192
          %s2959 = scalar_lea.vmem [#allocation4], %s2958
          %2960 = dma.done %s2956, 3072
        $region44: #{tpu_custom_call.1} parent=39 // pred_fallthru
          _
      $region40: #{tpu_custom_call.1} parent=5 // pred_fallthru
        _
    $region6: #{tpu_custom_call.1} parent=1 // loop_footer
      %s16 = sadd.s32 1, %s12
    $region7: #{tpu_custom_call.1} parent=1 // loop_footer_branch
      %11 = sbr.rel target = $region3
    $region8: #{tpu_custom_call.1} parent=1 // loop_exit
      _
    %2961 = vsyncpa [#allocation5], 1
    %s2962 = scalar_lea.sflag [#allocation5], 1
    %2963 = vsyncpa %s2962, 1

</llo_original>
